<compile_context>
chip_gen: v7x
topology: tpu7x:2x2x1
jax: 0.10.0
libtpu: 0.0.40
codegen_flags: <defaults>
</compile_context>

<pallas_src>
import numpy as np
import jax
import jax.numpy as jnp
from jax.experimental import pallas as pl
from jax.experimental.pallas import tpu as pltpu

# Static model dimensions implied by SimpleModelConvolutional (small test size).
H, W = 16, 16
CIN, C1, C2 = 3, 8, 16
HP, WP = H // 2, W // 2          # 8, 8  after first 2x2 maxpool
HO, WO = HP // 2, WP // 2        # 4, 4  after second 2x2 maxpool
KH = KW = 3
FLAT = C2 * HO * WO              # 256 output features per image

BT = 64                          # images per grid step

LANES_IN = W * CIN               # 48  input lanes  (w, cin)
HALF1 = WP * C1                  # 64  conv1 pooled lanes (wp, c1)
HALF2 = WO * C2                  # 64  conv2 pooled lanes (wo, c2)

# ---- constant selector matrices (pure constants -> plain numpy) ------------
# E_EVEN/E_ODD: pick even / odd w columns for the conv1 block-diagonal weight.
_E_EVEN = np.zeros((W, WP), np.float32)
_E_ODD = np.zeros((W, WP), np.float32)
_E_EVEN[2 * np.arange(WP), np.arange(WP)] = 1.0
_E_ODD[2 * np.arange(WP) + 1, np.arange(WP)] = 1.0
# S_SEL[parity, kw, wp_in, wo] = 1 iff input column wp_in feeds output column
# wp_out = 2*wo + parity for kernel tap kw (out-of-range -> 0 == zero padding).
_S_SEL = np.zeros((2, KW, WP, WO), np.float32)
for _par in range(2):
    for _kw in range(KW):
        for _wo in range(WO):
            _wp_in = 2 * _wo + _par + _kw - 1
            if 0 <= _wp_in < WP:
                _S_SEL[_par, _kw, _wp_in, _wo] = 1.0


def _model_kernel(x_ref, w1_ref, b1_ref, w2_ref, b2_ref, o_ref,
                  s1_ref, p1pad_ref, s2_ref):
    f32 = jnp.float32

    # ---- Conv2d(3->8, k=1): one MXU matmul over all (image, h) rows.
    # Output lanes = [even-w (wp,c1) | odd-w (wp,c1)].
    y1 = jnp.dot(x_ref[...], w1_ref[...], preferred_element_type=f32)   # (BT*H, 128)
    y1 = y1 + b1_ref[...]
    # ReLU + MaxPool over W: partners sit in the two 64-lane halves.
    h1 = jnp.maximum(jnp.maximum(y1[:, :HALF1], y1[:, HALF1:]), 0.0)    # (BT*H, 64)

    # ---- MaxPool over H: strided sublane reads from VMEM scratch.
    s1_ref[...] = h1.reshape(BT, H, HALF1)
    p1 = jnp.maximum(s1_ref[:, pl.ds(0, HP, 2), :],
                     s1_ref[:, pl.ds(1, HP, 2), :])                     # (BT, HP, 64)

    # ---- H-only zero padding for the 3x3 conv (W padding is baked into W2).
    zrow = jnp.zeros((BT, 1, HALF1), f32)
    p1pad_ref[:, 0:1, :] = zrow
    p1pad_ref[:, HP + 1:HP + 2, :] = zrow
    p1pad_ref[:, 1:HP + 1, :] = p1

    # ---- Conv2d(8->16, k=3, pad=1): 3 row-tap matmuls on the MXU.
    # Each weight folds all 3 dw taps, the W zero padding and the even/odd
    # output split for the second W-maxpool.
    acc = jnp.zeros((BT * HP, 2 * HALF2), f32)                          # (BT*HP, 128)
    for dh in range(KH):
        tap = p1pad_ref[:, dh:dh + HP, :]                               # (BT, HP, 64)
        acc = acc + jnp.dot(tap.reshape(BT * HP, HALF1), w2_ref[dh],
                            preferred_element_type=f32)
    y2 = acc + b2_ref[...]
    h2 = jnp.maximum(jnp.maximum(y2[:, :HALF2], y2[:, HALF2:]), 0.0)    # (BT*HP, 64)

    # ---- second MaxPool over H.
    s2_ref[...] = h2.reshape(BT, HP, HALF2)
    m2 = jnp.maximum(s2_ref[:, pl.ds(0, HO, 2), :],
                     s2_ref[:, pl.ds(1, HO, 2), :])                     # (BT, HO, 64)

    # ---- single lane-dense (BT, 256) store, feature order (ho, wo, c2).
    o_ref[...] = jnp.concatenate([m2[:, ho, :] for ho in range(HO)], axis=1)


@jax.jit
def simple_model_convolutional(x_nchw, w1_oihw, b1, w2_oihw, b2):
    n = x_nchw.shape[0]
    n_pad = ((n + BT - 1) // BT) * BT
    f32 = jnp.float32

    # Input: rows = (image, h), lanes = (w, cin).
    x_nhwc = jnp.transpose(x_nchw, (0, 2, 3, 1)).astype(f32)
    if n_pad != n:
        x_nhwc = jnp.concatenate(
            [x_nhwc, jnp.zeros((n_pad - n, H, W, CIN), f32)], axis=0)
    x2d = x_nhwc.reshape(n_pad * H, LANES_IN)

    # Conv1 weight: block-diagonal over w; output halves = [even w | odd w].
    w1t = jnp.transpose(w1_oihw[:, :, 0, 0], (1, 0)).astype(f32)        # (CIN, C1)
    w1k = jnp.concatenate([jnp.kron(_E_EVEN, w1t),
                           jnp.kron(_E_ODD, w1t)], axis=1)              # (48, 128)
    b1k = jnp.tile(b1.astype(f32), W)[None, :]                          # (1, 128)

    # Conv2 weights: one (64, 128) matrix per kernel row dh.
    w2t = jnp.transpose(w2_oihw, (2, 3, 1, 0)).astype(f32)              # (kh, kw, c1, c2)
    taps = []
    for dh in range(KH):
        halves = []
        for par in range(2):
            blk = jnp.zeros((WP * C1, WO * C2), f32)
            for kw in range(KW):
                blk = blk + jnp.kron(_S_SEL[par, kw], w2t[dh, kw])      # (64, 64)
            halves.append(blk)
        taps.append(jnp.concatenate(halves, axis=1))                    # (64, 128)
    w2k = jnp.stack(taps)                                               # (3, 64, 128)
    b2k = jnp.tile(b2.astype(f32), 2 * WO)[None, :]                     # (1, 128)

    out = pl.pallas_call(
        _model_kernel,
        out_shape=jax.ShapeDtypeStruct((n_pad, FLAT), jnp.float32),
        grid=(n_pad // BT,),
        in_specs=[
            pl.BlockSpec((BT * H, LANES_IN), lambda i: (i, 0)),
            pl.BlockSpec((LANES_IN, 2 * HALF1), lambda i: (0, 0)),
            pl.BlockSpec((1, 2 * HALF1), lambda i: (0, 0)),
            pl.BlockSpec((KH, HALF1, 2 * HALF2), lambda i: (0, 0, 0)),
            pl.BlockSpec((1, 2 * HALF2), lambda i: (0, 0)),
        ],
        out_specs=pl.BlockSpec((BT, FLAT), lambda i: (i, 0)),
        scratch_shapes=[
            pltpu.VMEM((BT, H, HALF1), jnp.float32),        # pre pool-H stage 1
            pltpu.VMEM((BT, HP + 2, HALF1), jnp.float32),   # H-padded pooled act
            pltpu.VMEM((BT, HP, HALF2), jnp.float32),       # pre pool-H stage 2
        ],
        compiler_params=pltpu.CompilerParams(
            dimension_semantics=("parallel",)),
    )(x2d, w1k, b1k, w2k, b2k)

    # Kernel wrote (ho, wo, c2); apply the NCHW-ordered nn.Flatten here.
    out = out[:n].reshape(n, HO, WO, C2)
    return jnp.transpose(out, (0, 3, 1, 2)).reshape(n, FLAT)


def _reference(x_nchw, w1_oihw, b1, w2_oihw, b2):
    dn = ("NCHW", "OIHW", "NCHW")
    y = jax.lax.conv_general_dilated(x_nchw, w1_oihw, (1, 1), "VALID",
                                     dimension_numbers=dn)
    y = jnp.maximum(y + b1[None, :, None, None], 0.0)
    y = jax.lax.reduce_window(y, -jnp.inf, jax.lax.max,
                              (1, 1, 2, 2), (1, 1, 2, 2), "VALID")
    y = jax.lax.conv_general_dilated(y, w2_oihw, (1, 1), ((1, 1), (1, 1)),
                                     dimension_numbers=dn)
    y = jnp.maximum(y + b2[None, :, None, None], 0.0)
    y = jax.lax.reduce_window(y, -jnp.inf, jax.lax.max,
                              (1, 1, 2, 2), (1, 1, 2, 2), "VALID")
    return y.reshape(y.shape[0], -1)


if __name__ == "__main__":
    key = jax.random.PRNGKey(0)
    k1, k2, k3, k4, k5 = jax.random.split(key, 5)
    # Deterministic synthetic parameters (PyTorch conv weight layout OIHW).
    w1_oihw = jax.random.normal(k1, (C1, CIN, 1, 1), jnp.float32) * 0.1
    b1 = jax.random.normal(k2, (C1,), jnp.float32) * 0.1
    w2_oihw = jax.random.normal(k3, (C2, C1, KH, KW), jnp.float32) * 0.1
    b2 = jax.random.normal(k4, (C2,), jnp.float32) * 0.1
    # Input in PyTorch NCHW convention.
    x = jax.random.normal(k5, (2, CIN, H, W), jnp.float32)

    out = simple_model_convolutional(x, w1_oihw, b1, w2_oihw, b2)
    out = jax.block_until_ready(out)

    ref = jax.block_until_ready(_reference(x, w1_oihw, b1, w2_oihw, b2))
    assert out.shape == (2, FLAT), out.shape
    assert np.allclose(np.asarray(out), np.asarray(ref), rtol=1e-4, atol=1e-4)
    print("KERNEL_OK")
</pallas_src>

<mosaic_0001>
module attributes {stable_mosaic.version = 11 : i64} {
  func.func @_model_kernel(%arg0: i32, %arg1: memref<1024x48xf32, #tpu.memory_space<vmem>>, %arg2: memref<48x128xf32, #tpu.memory_space<vmem>>, %arg3: memref<1x128xf32, #tpu.memory_space<vmem>>, %arg4: memref<3x64x128xf32, #tpu.memory_space<vmem>>, %arg5: memref<1x128xf32, #tpu.memory_space<vmem>>, %arg6: memref<64x256xf32, #tpu.memory_space<vmem>>, %arg7: memref<64x16x64xf32, #tpu.memory_space<vmem>>, %arg8: memref<64x10x64xf32, #tpu.memory_space<vmem>>, %arg9: memref<64x8x64xf32, #tpu.memory_space<vmem>>) attributes {dimension_semantics = [#tpu.dimension_semantics<parallel>], iteration_bounds = array<i64: 1>, scalar_prefetch = 0 : i64, scratch_operands = 3 : i64, tpu.core_type = #tpu.core_type<tc>, window_params = [{transform_indices = @transform_0, window_bounds = array<i64: 1024, 48>}, {pipeline_mode = #tpu.pipeline_mode<synchronous>, transform_indices = @transform_1, window_bounds = array<i64: 48, 128>}, {pipeline_mode = #tpu.pipeline_mode<synchronous>, transform_indices = @transform_2, window_bounds = array<i64: 1, 128>}, {pipeline_mode = #tpu.pipeline_mode<synchronous>, transform_indices = @transform_3, window_bounds = array<i64: 3, 64, 128>}, {pipeline_mode = #tpu.pipeline_mode<synchronous>, transform_indices = @transform_4, window_bounds = array<i64: 1, 128>}, {transform_indices = @transform_5, window_bounds = array<i64: 64, 256>}]} {
    %c0 = arith.constant 0 : index
    %c0_0 = arith.constant 0 : index
    %0 = vector.load %arg1[%c0, %c0_0] : memref<1024x48xf32, #tpu.memory_space<vmem>>, vector<1024x48xf32>
    %c0_1 = arith.constant 0 : index
    %c0_2 = arith.constant 0 : index
    %1 = vector.load %arg2[%c0_1, %c0_2] : memref<48x128xf32, #tpu.memory_space<vmem>>, vector<48x128xf32>
    %cst = arith.constant dense<0.000000e+00> : vector<1024x128xf32>
    %2 = tpu.matmul %0, %1, %cst {dimension_numbers = #tpu.dot_dimension_numbers<[1], [0], [0], [1], [0, 0, 1, 1], [], []>} : vector<1024x48xf32>, vector<48x128xf32>, vector<1024x128xf32> -> vector<1024x128xf32>
    %c0_3 = arith.constant 0 : index
    %c0_4 = arith.constant 0 : index
    %3 = vector.load %arg3[%c0_3, %c0_4] : memref<1x128xf32, #tpu.memory_space<vmem>>, vector<1x128xf32>
    %4 = vector.broadcast %3 : vector<1x128xf32> to vector<1024x128xf32>
    %5 = arith.addf %2, %4 : vector<1024x128xf32>
    %6 = vector.extract_strided_slice %5 {offsets = [0, 0], sizes = [1024, 64], strides = [1, 1]} : vector<1024x128xf32> to vector<1024x64xf32>
    %7 = vector.extract_strided_slice %5 {offsets = [0, 64], sizes = [1024, 64], strides = [1, 1]} : vector<1024x128xf32> to vector<1024x64xf32>
    %8 = arith.maximumf %6, %7 : vector<1024x64xf32>
    %cst_5 = arith.constant 0.000000e+00 : f32
    %9 = vector.broadcast %cst_5 : f32 to vector<1024x64xf32>
    %10 = arith.maximumf %8, %9 : vector<1024x64xf32>
    %11 = vector.shape_cast %10 : vector<1024x64xf32> to vector<64x16x64xf32>
    %c0_6 = arith.constant 0 : index
    %c0_7 = arith.constant 0 : index
    %c0_8 = arith.constant 0 : index
    %12 = vector.load %arg7[%c0_6, %c0_7, %c0_8] : memref<64x16x64xf32, #tpu.memory_space<vmem>>, vector<64x16x64xf32>
    tpu.vector_store %arg7[%c0_6, %c0_7, %c0_8], %11 {strides = array<i32>} : memref<64x16x64xf32, #tpu.memory_space<vmem>>, vector<64x16x64xf32>,
    %c0_9 = arith.constant 0 : index
    %c0_10 = arith.constant 0 : index
    %c0_11 = arith.constant 0 : index
    %13 = tpu.strided_load %arg7[%c0_9, %c0_10, %c0_11] {strides = array<i32: 1, 2, 1>} : memref<64x16x64xf32, #tpu.memory_space<vmem>>, vector<64x8x64xf32>
    %c0_12 = arith.constant 0 : index
    %c1 = arith.constant 1 : index
    %c0_13 = arith.constant 0 : index
    %14 = tpu.strided_load %arg7[%c0_12, %c1, %c0_13] {strides = array<i32: 1, 2, 1>} : memref<64x16x64xf32, #tpu.memory_space<vmem>>, vector<64x8x64xf32>
    %15 = arith.maximumf %13, %14 : vector<64x8x64xf32>
    %cst_14 = arith.constant 0.000000e+00 : f32
    %16 = vector.broadcast %cst_14 : f32 to vector<64x1x64xf32>
    %c0_15 = arith.constant 0 : index
    %c0_16 = arith.constant 0 : index
    %c0_17 = arith.constant 0 : index
    %17 = vector.load %arg8[%c0_15, %c0_16, %c0_17] : memref<64x10x64xf32, #tpu.memory_space<vmem>>, vector<64x1x64xf32>
    tpu.vector_store %arg8[%c0_15, %c0_16, %c0_17], %16 {strides = array<i32>} : memref<64x10x64xf32, #tpu.memory_space<vmem>>, vector<64x1x64xf32>,
    %c0_18 = arith.constant 0 : index
    %c9 = arith.constant 9 : index
    %c0_19 = arith.constant 0 : index
    %18 = vector.load %arg8[%c0_18, %c9, %c0_19] : memref<64x10x64xf32, #tpu.memory_space<vmem>>, vector<64x1x64xf32>
    tpu.vector_store %arg8[%c0_18, %c9, %c0_19], %16 {strides = array<i32>} : memref<64x10x64xf32, #tpu.memory_space<vmem>>, vector<64x1x64xf32>,
    %c0_20 = arith.constant 0 : index
    %c1_21 = arith.constant 1 : index
    %c0_22 = arith.constant 0 : index
    %19 = vector.load %arg8[%c0_20, %c1_21, %c0_22] : memref<64x10x64xf32, #tpu.memory_space<vmem>>, vector<64x8x64xf32>
    tpu.vector_store %arg8[%c0_20, %c1_21, %c0_22], %15 {strides = array<i32>} : memref<64x10x64xf32, #tpu.memory_space<vmem>>, vector<64x8x64xf32>,
    %cst_23 = arith.constant 0.000000e+00 : f32
    %20 = vector.broadcast %cst_23 : f32 to vector<512x128xf32>
    %c0_24 = arith.constant 0 : index
    %c0_25 = arith.constant 0 : index
    %c0_26 = arith.constant 0 : index
    %21 = vector.load %arg8[%c0_24, %c0_25, %c0_26] : memref<64x10x64xf32, #tpu.memory_space<vmem>>, vector<64x8x64xf32>
    %22 = vector.shape_cast %21 : vector<64x8x64xf32> to vector<512x64xf32>
    %c0_27 = arith.constant 0 : index
    %c0_28 = arith.constant 0 : index
    %c0_29 = arith.constant 0 : index
    %23 = vector.load %arg4[%c0_27, %c0_28, %c0_29] : memref<3x64x128xf32, #tpu.memory_space<vmem>>, vector<1x64x128xf32>
    %24 = vector.shape_cast %23 : vector<1x64x128xf32> to vector<64x128xf32>
    %cst_30 = arith.constant dense<0.000000e+00> : vector<512x128xf32>
    %25 = tpu.matmul %22, %24, %cst_30 {dimension_numbers = #tpu.dot_dimension_numbers<[1], [0], [0], [1], [0, 0, 1, 1], [], []>} : vector<512x64xf32>, vector<64x128xf32>, vector<512x128xf32> -> vector<512x128xf32>
    %26 = arith.addf %20, %25 : vector<512x128xf32>
    %c0_31 = arith.constant 0 : index
    %c1_32 = arith.constant 1 : index
    %c0_33 = arith.constant 0 : index
    %27 = vector.load %arg8[%c0_31, %c1_32, %c0_33] : memref<64x10x64xf32, #tpu.memory_space<vmem>>, vector<64x8x64xf32>
    %28 = vector.shape_cast %27 : vector<64x8x64xf32> to vector<512x64xf32>
    %c1_34 = arith.constant 1 : index
    %c0_35 = arith.constant 0 : index
    %c0_36 = arith.constant 0 : index
    %29 = vector.load %arg4[%c1_34, %c0_35, %c0_36] : memref<3x64x128xf32, #tpu.memory_space<vmem>>, vector<1x64x128xf32>
    %30 = vector.shape_cast %29 : vector<1x64x128xf32> to vector<64x128xf32>
    %cst_37 = arith.constant dense<0.000000e+00> : vector<512x128xf32>
    %31 = tpu.matmul %28, %30, %cst_37 {dimension_numbers = #tpu.dot_dimension_numbers<[1], [0], [0], [1], [0, 0, 1, 1], [], []>} : vector<512x64xf32>, vector<64x128xf32>, vector<512x128xf32> -> vector<512x128xf32>
    %32 = arith.addf %26, %31 : vector<512x128xf32>
    %c0_38 = arith.constant 0 : index
    %c2 = arith.constant 2 : index
    %c0_39 = arith.constant 0 : index
    %33 = vector.load %arg8[%c0_38, %c2, %c0_39] : memref<64x10x64xf32, #tpu.memory_space<vmem>>, vector<64x8x64xf32>
    %34 = vector.shape_cast %33 : vector<64x8x64xf32> to vector<512x64xf32>
    %c2_40 = arith.constant 2 : index
    %c0_41 = arith.constant 0 : index
    %c0_42 = arith.constant 0 : index
    %35 = vector.load %arg4[%c2_40, %c0_41, %c0_42] : memref<3x64x128xf32, #tpu.memory_space<vmem>>, vector<1x64x128xf32>
    %36 = vector.shape_cast %35 : vector<1x64x128xf32> to vector<64x128xf32>
    %cst_43 = arith.constant dense<0.000000e+00> : vector<512x128xf32>
    %37 = tpu.matmul %34, %36, %cst_43 {dimension_numbers = #tpu.dot_dimension_numbers<[1], [0], [0], [1], [0, 0, 1, 1], [], []>} : vector<512x64xf32>, vector<64x128xf32>, vector<512x128xf32> -> vector<512x128xf32>
    %38 = arith.addf %32, %37 : vector<512x128xf32>
    %c0_44 = arith.constant 0 : index
    %c0_45 = arith.constant 0 : index
    %39 = vector.load %arg5[%c0_44, %c0_45] : memref<1x128xf32, #tpu.memory_space<vmem>>, vector<1x128xf32>
    %40 = vector.broadcast %39 : vector<1x128xf32> to vector<512x128xf32>
    %41 = arith.addf %38, %40 : vector<512x128xf32>
    %42 = vector.extract_strided_slice %41 {offsets = [0, 0], sizes = [512, 64], strides = [1, 1]} : vector<512x128xf32> to vector<512x64xf32>
    %43 = vector.extract_strided_slice %41 {offsets = [0, 64], sizes = [512, 64], strides = [1, 1]} : vector<512x128xf32> to vector<512x64xf32>
    %44 = arith.maximumf %42, %43 : vector<512x64xf32>
    %cst_46 = arith.constant 0.000000e+00 : f32
    %45 = vector.broadcast %cst_46 : f32 to vector<512x64xf32>
    %46 = arith.maximumf %44, %45 : vector<512x64xf32>
    %47 = vector.shape_cast %46 : vector<512x64xf32> to vector<64x8x64xf32>
    %c0_47 = arith.constant 0 : index
    %c0_48 = arith.constant 0 : index
    %c0_49 = arith.constant 0 : index
    %48 = vector.load %arg9[%c0_47, %c0_48, %c0_49] : memref<64x8x64xf32, #tpu.memory_space<vmem>>, vector<64x8x64xf32>
    tpu.vector_store %arg9[%c0_47, %c0_48, %c0_49], %47 {strides = array<i32>} : memref<64x8x64xf32, #tpu.memory_space<vmem>>, vector<64x8x64xf32>,
    %c0_50 = arith.constant 0 : index
    %c0_51 = arith.constant 0 : index
    %c0_52 = arith.constant 0 : index
    %49 = tpu.strided_load %arg9[%c0_50, %c0_51, %c0_52] {strides = array<i32: 1, 2, 1>} : memref<64x8x64xf32, #tpu.memory_space<vmem>>, vector<64x4x64xf32>
    %c0_53 = arith.constant 0 : index
    %c1_54 = arith.constant 1 : index
    %c0_55 = arith.constant 0 : index
    %50 = tpu.strided_load %arg9[%c0_53, %c1_54, %c0_55] {strides = array<i32: 1, 2, 1>} : memref<64x8x64xf32, #tpu.memory_space<vmem>>, vector<64x4x64xf32>
    %51 = arith.maximumf %49, %50 : vector<64x4x64xf32>
    %52 = vector.extract_strided_slice %51 {offsets = [0, 0, 0], sizes = [64, 1, 64], strides = [1, 1, 1]} : vector<64x4x64xf32> to vector<64x1x64xf32>
    %53 = vector.shape_cast %52 : vector<64x1x64xf32> to vector<64x64xf32>
    %54 = vector.extract_strided_slice %51 {offsets = [0, 1, 0], sizes = [64, 1, 64], strides = [1, 1, 1]} : vector<64x4x64xf32> to vector<64x1x64xf32>
    %55 = vector.shape_cast %54 : vector<64x1x64xf32> to vector<64x64xf32>
    %56 = vector.extract_strided_slice %51 {offsets = [0, 2, 0], sizes = [64, 1, 64], strides = [1, 1, 1]} : vector<64x4x64xf32> to vector<64x1x64xf32>
    %57 = vector.shape_cast %56 : vector<64x1x64xf32> to vector<64x64xf32>
    %58 = vector.extract_strided_slice %51 {offsets = [0, 3, 0], sizes = [64, 1, 64], strides = [1, 1, 1]} : vector<64x4x64xf32> to vector<64x1x64xf32>
    %59 = vector.shape_cast %58 : vector<64x1x64xf32> to vector<64x64xf32>
    %60 = tpu.concatenate %53, %55, %57, %59 in 1 : vector<64x64xf32>, vector<64x64xf32>, vector<64x64xf32>, vector<64x64xf32> -> vector<64x256xf32>
    %c0_56 = arith.constant 0 : index
    %c0_57 = arith.constant 0 : index
    %61 = vector.load %arg6[%c0_56, %c0_57] : memref<64x256xf32, #tpu.memory_space<vmem>>, vector<64x256xf32>
    tpu.vector_store %arg6[%c0_56, %c0_57], %60 {strides = array<i32>} : memref<64x256xf32, #tpu.memory_space<vmem>>, vector<64x256xf32>,
    return
  }
  func.func @transform_0(%arg0: i32) -> (i32, i32) {
    %c0_i32 = arith.constant 0 : i32
    %c0_i32_0 = arith.constant 0 : i32
    return %arg0, %c0_i32 : i32, i32
  }
  func.func @transform_1(%arg0: i32) -> (i32, i32) {
    %c0_i32 = arith.constant 0 : i32
    %c0_i32_0 = arith.constant 0 : i32
    %c0_i32_1 = arith.constant 0 : i32
    return %c0_i32, %c0_i32_0 : i32, i32
  }
  func.func @transform_2(%arg0: i32) -> (i32, i32) {
    %c0_i32 = arith.constant 0 : i32
    %c0_i32_0 = arith.constant 0 : i32
    %c0_i32_1 = arith.constant 0 : i32
    return %c0_i32, %c0_i32_0 : i32, i32
  }
  func.func @transform_3(%arg0: i32) -> (i32, i32, i32) {
    %c0_i32 = arith.constant 0 : i32
    %c0_i32_0 = arith.constant 0 : i32
    %c0_i32_1 = arith.constant 0 : i32
    %c0_i32_2 = arith.constant 0 : i32
    return %c0_i32, %c0_i32_0, %c0_i32_1 : i32, i32, i32
  }
  func.func @transform_4(%arg0: i32) -> (i32, i32) {
    %c0_i32 = arith.constant 0 : i32
    %c0_i32_0 = arith.constant 0 : i32
    %c0_i32_1 = arith.constant 0 : i32
    return %c0_i32, %c0_i32_0 : i32, i32
  }
  func.func @transform_5(%arg0: i32) -> (i32, i32) {
    %c0_i32 = arith.constant 0 : i32
    %c0_i32_0 = arith.constant 0 : i32
    return %arg0, %c0_i32 : i32, i32
  }
}

</mosaic_0001>

<llo_original>
// kernel: tile.13
$region0: #{tile.13}
  #allocation0 [shape = 's32[1]{0}', space=sflag, size = 0x4, scoped, tag = 'scoped memory for tile.13']
  %s0 = inlined_call_operand.vmem [shape: f32[8], index: 0, kind: input, shape index: {}]
  %s1 = inlined_call_operand.vmem [shape: f32[16,8], index: 1, kind: output, shape index: {}]
  // Predicated region
  $region2: #{tile.13} parent=0 // pred_check
    _
  $region3: #{tile.13} parent=0 // pred_check_branch
    %3 = sbr.rel (0) target = $region5
  $region4: #{tile.13} parent=0 // pred_region
    _
  $region5: #{tile.13} parent=0 // pred_fallthru
    _
  %v4 = vld [vmem:[%s0] ss:$0 sm:$0xff]
  %5 = vst [vmem:[%s1] sm:$0xff] %v4
  %s6 = scalar_lea.vmem %s1, 8
  %7 = vst [vmem:[%s6] sm:$0xff] %v4

// kernel: tile.14
$region0: #{tile.14}
  %s0 = inlined_call_operand.vmem [shape: f32[16,8], index: 0, kind: input, shape index: {}]
  %s1 = inlined_call_operand.vmem [shape: f32[1,128], index: 1, kind: output, shape index: {}]
  $region1: #{tile.14} parent=0
    #allocation0 [shape = 'u8[4096]{0}', space=vmem, size = 0x1000, scoped, tag = 'scoped mem for output reshape']
    %v2 = vld [vmem:[%s0] sm:$0x1]
    %vm3 = vcmask 64512
    %4 = vst.msk [vmem:[#allocation0] sm:$0x1] %vm3, %v2
    %s5 = scalar_lea.vmem %s0, 15
    %v6 = vld [vmem:[%s5] sm:$0x1]
    %7 = vrot.lane.b32.xlu0 %v6, 120
    %v8 = vpop.permute.xlu0 %7
    %vm9 = vcmask 1048512
    %10 = vst.msk [vmem:[#allocation0] sm:$0x1] %vm9, %v8
    %s11 = scalar_lea.vmem %s0, 14
    %v12 = vld [vmem:[%s11] sm:$0x1]
    %13 = vrot.lane.b32.xlu0 %v12, 112
    %v14 = vpop.permute.xlu0 %13
    %vm15 = vcmask 982912
    %16 = vst.msk [vmem:[#allocation0] sm:$0x1] %vm15, %v14
    %s17 = scalar_lea.vmem %s0, 13
    %v18 = vld [vmem:[%s17] sm:$0x1]
    %19 = vrot.lane.b32.xlu0 %v18, 104
    %v20 = vpop.permute.xlu0 %19
    %vm21 = vcmask 917312
    %22 = vst.msk [vmem:[#allocation0] sm:$0x1] %vm21, %v20
    %s23 = scalar_lea.vmem %s0, 12
    %v24 = vld [vmem:[%s23] sm:$0x1]
    %25 = vrot.lane.b32.xlu0 %v24, 96
    %v26 = vpop.permute.xlu0 %25
    %vm27 = vcmask 851712
    %28 = vst.msk [vmem:[#allocation0] sm:$0x1] %vm27, %v26
    %s29 = scalar_lea.vmem %s0, 11
    %v30 = vld [vmem:[%s29] sm:$0x1]
    %31 = vrot.lane.b32.xlu0 %v30, 88
    %v32 = vpop.permute.xlu0 %31
    %vm33 = vcmask 786112
    %34 = vst.msk [vmem:[#allocation0] sm:$0x1] %vm33, %v32
    %s35 = scalar_lea.vmem %s0, 10
    %v36 = vld [vmem:[%s35] sm:$0x1]
    %37 = vrot.lane.b32.xlu0 %v36, 80
    %v38 = vpop.permute.xlu0 %37
    %vm39 = vcmask 720512
    %40 = vst.msk [vmem:[#allocation0] sm:$0x1] %vm39, %v38
    %s41 = scalar_lea.vmem %s0, 9
    %v42 = vld [vmem:[%s41] sm:$0x1]
    %43 = vrot.lane.b32.xlu0 %v42, 72
    %v44 = vpop.permute.xlu0 %43
    %vm45 = vcmask 654912
    %46 = vst.msk [vmem:[#allocation0] sm:$0x1] %vm45, %v44
    %s47 = scalar_lea.vmem %s0, 8
    %v48 = vld [vmem:[%s47] sm:$0x1]
    %49 = vrot.lane.b32.xlu0 %v48, 64
    %v50 = vpop.permute.xlu0 %49
    %vm51 = vcmask 589312
    %52 = vst.msk [vmem:[#allocation0] sm:$0x1] %vm51, %v50
    %s53 = scalar_lea.vmem %s0, 7
    %v54 = vld [vmem:[%s53] sm:$0x1]
    %55 = vrot.lane.b32.xlu0 %v54, 56
    %v56 = vpop.permute.xlu0 %55
    %vm57 = vcmask 523712
    %58 = vst.msk [vmem:[#allocation0] sm:$0x1] %vm57, %v56
    %s59 = scalar_lea.vmem %s0, 6
    %v60 = vld [vmem:[%s59] sm:$0x1]
    %61 = vrot.lane.b32.xlu0 %v60, 48
    %v62 = vpop.permute.xlu0 %61
    %vm63 = vcmask 458112
    %64 = vst.msk [vmem:[#allocation0] sm:$0x1] %vm63, %v62
    %s65 = scalar_lea.vmem %s0, 5
    %v66 = vld [vmem:[%s65] sm:$0x1]
    %67 = vrot.lane.b32.xlu0 %v66, 40
    %v68 = vpop.permute.xlu0 %67
    %vm69 = vcmask 392512
    %70 = vst.msk [vmem:[#allocation0] sm:$0x1] %vm69, %v68
    %s71 = scalar_lea.vmem %s0, 4
    %v72 = vld [vmem:[%s71] sm:$0x1]
    %73 = vrot.lane.b32.xlu0 %v72, 32
    %v74 = vpop.permute.xlu0 %73
    %vm75 = vcmask 326912
    %76 = vst.msk [vmem:[#allocation0] sm:$0x1] %vm75, %v74
    %s77 = scalar_lea.vmem %s0, 3
    %v78 = vld [vmem:[%s77] sm:$0x1]
    %79 = vrot.lane.b32.xlu0 %v78, 24
    %v80 = vpop.permute.xlu0 %79
    %vm81 = vcmask 261312
    %82 = vst.msk [vmem:[#allocation0] sm:$0x1] %vm81, %v80
    %s83 = scalar_lea.vmem %s0, 2
    %v84 = vld [vmem:[%s83] sm:$0x1]
    %85 = vrot.lane.b32.xlu0 %v84, 16
    %v86 = vpop.permute.xlu0 %85
    %vm87 = vcmask 195712
    %88 = vst.msk [vmem:[#allocation0] sm:$0x1] %vm87, %v86
    %s89 = scalar_lea.vmem %s0, 1
    %v90 = vld [vmem:[%s89] sm:$0x1]
    %91 = vrot.lane.b32.xlu0 %v90, 8
    %v92 = vpop.permute.xlu0 %91
    %vm93 = vcmask 130112
    %94 = vst.msk [vmem:[#allocation0] sm:$0x1] %vm93, %v92
    %s96 = sshllo.u32 0, 1
    %v98 = vld [vmem:[#allocation0] sm:%s96]
    %s99 = sshllo.u32 0, 1
    %100 = vst [vmem:[%s1] sm:%s99] %v98

// kernel: tile.18
$region0: #{tile.18}
  #allocation0 [shape = 's32[1]{0}', space=sflag, size = 0x4, scoped, tag = 'scoped memory for tile.18']
  %s0 = inlined_call_operand.vmem [shape: f32[16], index: 0, kind: input, shape index: {}]
  %s1 = inlined_call_operand.vmem [shape: f32[8,16], index: 1, kind: output, shape index: {}]
  // Predicated region
  $region2: #{tile.18} parent=0 // pred_check
    _
  $region3: #{tile.18} parent=0 // pred_check_branch
    %3 = sbr.rel (0) target = $region5
  $region4: #{tile.18} parent=0 // pred_region
    _
  $region5: #{tile.18} parent=0 // pred_fallthru
    _
  %v4 = vld [vmem:[%s0] ss:$0 sm:$0xff]
  %5 = vst [vmem:[%s1] sm:$0xff] %v4

// kernel: tile.19
$region0: #{tile.19}
  %s0 = inlined_call_operand.vmem [shape: f32[8,16], index: 0, kind: input, shape index: {}]
  %s1 = inlined_call_operand.vmem [shape: f32[1,128], index: 1, kind: output, shape index: {}]
  $region1: #{tile.19} parent=0
    #allocation0 [shape = 'u8[4096]{0}', space=vmem, size = 0x1000, scoped, tag = 'scoped mem for output reshape']
    %v2 = vld [vmem:[%s0] sm:$0x1]
    %vm3 = vcmask 130048
    %4 = vst.msk [vmem:[#allocation0] sm:$0x1] %vm3, %v2
    %s5 = scalar_lea.vmem %s0, 7
    %v6 = vld [vmem:[%s5] sm:$0x1]
    %7 = vrot.lane.b32.xlu0 %v6, 112
    %v8 = vpop.permute.xlu0 %7
    %vm9 = vcmask 1048448
    %10 = vst.msk [vmem:[#allocation0] sm:$0x1] %vm9, %v8
    %s11 = scalar_lea.vmem %s0, 6
    %v12 = vld [vmem:[%s11] sm:$0x1]
    %13 = vrot.lane.b32.xlu0 %v12, 96
    %v14 = vpop.permute.xlu0 %13
    %vm15 = vcmask 917248
    %16 = vst.msk [vmem:[#allocation0] sm:$0x1] %vm15, %v14
    %s17 = scalar_lea.vmem %s0, 5
    %v18 = vld [vmem:[%s17] sm:$0x1]
    %19 = vrot.lane.b32.xlu0 %v18, 80
    %v20 = vpop.permute.xlu0 %19
    %vm21 = vcmask 786048
    %22 = vst.msk [vmem:[#allocation0] sm:$0x1] %vm21, %v20
    %s23 = scalar_lea.vmem %s0, 4
    %v24 = vld [vmem:[%s23] sm:$0x1]
    %25 = vrot.lane.b32.xlu0 %v24, 64
    %v26 = vpop.permute.xlu0 %25
    %vm27 = vcmask 654848
    %28 = vst.msk [vmem:[#allocation0] sm:$0x1] %vm27, %v26
    %s29 = scalar_lea.vmem %s0, 3
    %v30 = vld [vmem:[%s29] sm:$0x1]
    %31 = vrot.lane.b32.xlu0 %v30, 48
    %v32 = vpop.permute.xlu0 %31
    %vm33 = vcmask 523648
    %34 = vst.msk [vmem:[#allocation0] sm:$0x1] %vm33, %v32
    %s35 = scalar_lea.vmem %s0, 2
    %v36 = vld [vmem:[%s35] sm:$0x1]
    %37 = vrot.lane.b32.xlu0 %v36, 32
    %v38 = vpop.permute.xlu0 %37
    %vm39 = vcmask 392448
    %40 = vst.msk [vmem:[#allocation0] sm:$0x1] %vm39, %v38
    %s41 = scalar_lea.vmem %s0, 1
    %v42 = vld [vmem:[%s41] sm:$0x1]
    %43 = vrot.lane.b32.xlu0 %v42, 16
    %v44 = vpop.permute.xlu0 %43
    %vm45 = vcmask 261248
    %46 = vst.msk [vmem:[#allocation0] sm:$0x1] %vm45, %v44
    %s48 = sshllo.u32 0, 1
    %v50 = vld [vmem:[#allocation0] sm:%s48]
    %s51 = sshllo.u32 0, 1
    %52 = vst [vmem:[%s1] sm:%s51] %v50

// kernel: simple_model_convolutional.1
$region0: #{simple_model_convolutional.1}
  #allocation0 [shape = 'u32[]', space=smem, size = 0x4, offset = 0x4, fixed_abs, tag = 'smem constant byte address 0x4 - core index']
  #allocation1 [shape = 'u32[144,128]{1,0:T(1,128)}', space=vmem, size = 0x12000, scoped, tag = 'internal scratch']
  #allocation2 [shape = 'f32[64,16,64]{2,1,0:T(8,128)}', space=vmem, size = 0x80000, scoped, tag = 'scratch operand']
  #allocation3 [shape = 'f32[64,10,64]{2,1,0:T(8,128)}', space=vmem, size = 0x80000, scoped, tag = 'scratch operand']
  #allocation4 [shape = 'f32[64,8,64]{2,1,0:T(8,128)}', space=vmem, size = 0x40000, scoped, tag = 'scratch operand']
  %s0 = inlined_call_operand.vmem [shape: f32[1024,48], index: 0, kind: input, shape index: {}]
  %s1 = inlined_call_operand.vmem [shape: f32[48,128], index: 1, kind: input, shape index: {}]
  %s2 = inlined_call_operand.vmem [shape: f32[1,128], index: 2, kind: input, shape index: {}]
  %s3 = inlined_call_operand.vmem [shape: f32[3,64,128], index: 3, kind: input, shape index: {}]
  %s4 = inlined_call_operand.vmem [shape: f32[1,128], index: 4, kind: input, shape index: {}]
  %s5 = inlined_call_operand.vmem [shape: f32[64,256], index: 5, kind: output, shape index: {}]
  %s6 = sld [smem:[#allocation0]]
  $region30: #{simple_model_convolutional.1} parent=0
    _
  %s8 = ssub.s32 1, %s6
  %s9 = scalar_select 0, %s8, %s6
  // Predicated region
  $region2: #{simple_model_convolutional.1} parent=0 // pred_check
    _
  $region3: #{simple_model_convolutional.1} parent=0 // pred_check_branch
    %11 = sbr.rel (0) target = $region5
  $region4: #{simple_model_convolutional.1} parent=0 // pred_region
    _
  $region5: #{simple_model_convolutional.1} parent=0 // pred_fallthru
    _
  // Predicated region
  $region6: #{simple_model_convolutional.1} parent=0 // pred_check
    _
  $region7: #{simple_model_convolutional.1} parent=0 // pred_check_branch
    %13 = sbr.rel (0) target = $region9
  $region8: #{simple_model_convolutional.1} parent=0 // pred_region
    _
  $region9: #{simple_model_convolutional.1} parent=0 // pred_fallthru
    _
  // Predicated region
  $region10: #{simple_model_convolutional.1} parent=0 // pred_check
    _
  $region11: #{simple_model_convolutional.1} parent=0 // pred_check_branch
    %15 = sbr.rel (0) target = $region13
  $region12: #{simple_model_convolutional.1} parent=0 // pred_region
    _
  $region13: #{simple_model_convolutional.1} parent=0 // pred_fallthru
    _
  // Predicated region
  $region14: #{simple_model_convolutional.1} parent=0 // pred_check
    _
  $region15: #{simple_model_convolutional.1} parent=0 // pred_check_branch
    %17 = sbr.rel (0) target = $region17
  $region16: #{simple_model_convolutional.1} parent=0 // pred_region
    _
  $region17: #{simple_model_convolutional.1} parent=0 // pred_fallthru
    _
  // Predicated region
  $region18: #{simple_model_convolutional.1} parent=0 // pred_check
    _
  $region19: #{simple_model_convolutional.1} parent=0 // pred_check_branch
    %19 = sbr.rel (0) target = $region21
  $region20: #{simple_model_convolutional.1} parent=0 // pred_region
    _
  $region21: #{simple_model_convolutional.1} parent=0 // pred_fallthru
    _
  %v20 = vld [vmem:[%s0] sm:$0xff]
  %v21 = vld [vmem:[%s0 + $0x8] sm:$0xff]
  %v22 = vld [vmem:[%s0 + $0x10] sm:$0xff]
  %v23 = vld [vmem:[%s0 + $0x18] sm:$0xff]
  %v24 = vld [vmem:[%s0 + $0x20] sm:$0xff]
  %v25 = vld [vmem:[%s0 + $0x28] sm:$0xff]
  %v26 = vld [vmem:[%s0 + $0x30] sm:$0xff]
  %v27 = vld [vmem:[%s0 + $0x38] sm:$0xff]
  %v28 = vld [vmem:[%s0 + $0x40] sm:$0xff]
  %v29 = vld [vmem:[%s0 + $0x48] sm:$0xff]
  %v30 = vld [vmem:[%s0 + $0x50] sm:$0xff]
  %v31 = vld [vmem:[%s0 + $0x58] sm:$0xff]
  %v32 = vld [vmem:[%s0 + $0x60] sm:$0xff]
  %v33 = vld [vmem:[%s0 + $0x68] sm:$0xff]
  %v34 = vld [vmem:[%s0 + $0x70] sm:$0xff]
  %v35 = vld [vmem:[%s0 + $0x78] sm:$0xff]
  %v36 = vld [vmem:[%s0 + $0x80] sm:$0xff]
  %v37 = vld [vmem:[%s0 + $0x88] sm:$0xff]
  %v38 = vld [vmem:[%s0 + $0x90] sm:$0xff]
  %v39 = vld [vmem:[%s0 + $0x98] sm:$0xff]
  %v40 = vld [vmem:[%s0 + $0xa0] sm:$0xff]
  %v41 = vld [vmem:[%s0 + $0xa8] sm:$0xff]
  %v42 = vld [vmem:[%s0 + $0xb0] sm:$0xff]
  %v43 = vld [vmem:[%s0 + $0xb8] sm:$0xff]
  %v44 = vld [vmem:[%s0 + $0xc0] sm:$0xff]
  %v45 = vld [vmem:[%s0 + $0xc8] sm:$0xff]
  %v46 = vld [vmem:[%s0 + $0xd0] sm:$0xff]
  %v47 = vld [vmem:[%s0 + $0xd8] sm:$0xff]
  %v48 = vld [vmem:[%s0 + $0xe0] sm:$0xff]
  %v49 = vld [vmem:[%s0 + $0xe8] sm:$0xff]
  %v50 = vld [vmem:[%s0 + $0xf0] sm:$0xff]
  %v51 = vld [vmem:[%s0 + $0xf8] sm:$0xff]
  %v52 = vld [vmem:[%s0 + $0x100] sm:$0xff]
  %v53 = vld [vmem:[%s0 + $0x108] sm:$0xff]
  %v54 = vld [vmem:[%s0 + $0x110] sm:$0xff]
  %v55 = vld [vmem:[%s0 + $0x118] sm:$0xff]
  %v56 = vld [vmem:[%s0 + $0x120] sm:$0xff]
  %v57 = vld [vmem:[%s0 + $0x128] sm:$0xff]
  %v58 = vld [vmem:[%s0 + $0x130] sm:$0xff]
  %v59 = vld [vmem:[%s0 + $0x138] sm:$0xff]
  %v60 = vld [vmem:[%s0 + $0x140] sm:$0xff]
  %v61 = vld [vmem:[%s0 + $0x148] sm:$0xff]
  %v62 = vld [vmem:[%s0 + $0x150] sm:$0xff]
  %v63 = vld [vmem:[%s0 + $0x158] sm:$0xff]
  %v64 = vld [vmem:[%s0 + $0x160] sm:$0xff]
  %v65 = vld [vmem:[%s0 + $0x168] sm:$0xff]
  %v66 = vld [vmem:[%s0 + $0x170] sm:$0xff]
  %v67 = vld [vmem:[%s0 + $0x178] sm:$0xff]
  %v68 = vld [vmem:[%s0 + $0x180] sm:$0xff]
  %v69 = vld [vmem:[%s0 + $0x188] sm:$0xff]
  %v70 = vld [vmem:[%s0 + $0x190] sm:$0xff]
  %v71 = vld [vmem:[%s0 + $0x198] sm:$0xff]
  %v72 = vld [vmem:[%s0 + $0x1a0] sm:$0xff]
  %v73 = vld [vmem:[%s0 + $0x1a8] sm:$0xff]
  %v74 = vld [vmem:[%s0 + $0x1b0] sm:$0xff]
  %v75 = vld [vmem:[%s0 + $0x1b8] sm:$0xff]
  %v76 = vld [vmem:[%s0 + $0x1c0] sm:$0xff]
  %v77 = vld [vmem:[%s0 + $0x1c8] sm:$0xff]
  %v78 = vld [vmem:[%s0 + $0x1d0] sm:$0xff]
  %v79 = vld [vmem:[%s0 + $0x1d8] sm:$0xff]
  %v80 = vld [vmem:[%s0 + $0x1e0] sm:$0xff]
  %v81 = vld [vmem:[%s0 + $0x1e8] sm:$0xff]
  %v82 = vld [vmem:[%s0 + $0x1f0] sm:$0xff]
  %v83 = vld [vmem:[%s0 + $0x1f8] sm:$0xff]
  %v84 = vld [vmem:[%s0 + $0x200] sm:$0xff]
  %v85 = vld [vmem:[%s0 + $0x208] sm:$0xff]
  %v86 = vld [vmem:[%s0 + $0x210] sm:$0xff]
  %v87 = vld [vmem:[%s0 + $0x218] sm:$0xff]
  %v88 = vld [vmem:[%s0 + $0x220] sm:$0xff]
  %v89 = vld [vmem:[%s0 + $0x228] sm:$0xff]
  %v90 = vld [vmem:[%s0 + $0x230] sm:$0xff]
  %v91 = vld [vmem:[%s0 + $0x238] sm:$0xff]
  %v92 = vld [vmem:[%s0 + $0x240] sm:$0xff]
  %v93 = vld [vmem:[%s0 + $0x248] sm:$0xff]
  %v94 = vld [vmem:[%s0 + $0x250] sm:$0xff]
  %v95 = vld [vmem:[%s0 + $0x258] sm:$0xff]
  %v96 = vld [vmem:[%s0 + $0x260] sm:$0xff]
  %v97 = vld [vmem:[%s0 + $0x268] sm:$0xff]
  %v98 = vld [vmem:[%s0 + $0x270] sm:$0xff]
  %v99 = vld [vmem:[%s0 + $0x278] sm:$0xff]
  %v100 = vld [vmem:[%s0 + $0x280] sm:$0xff]
  %v101 = vld [vmem:[%s0 + $0x288] sm:$0xff]
  %v102 = vld [vmem:[%s0 + $0x290] sm:$0xff]
  %v103 = vld [vmem:[%s0 + $0x298] sm:$0xff]
  %v104 = vld [vmem:[%s0 + $0x2a0] sm:$0xff]
  %v105 = vld [vmem:[%s0 + $0x2a8] sm:$0xff]
  %v106 = vld [vmem:[%s0 + $0x2b0] sm:$0xff]
  %v107 = vld [vmem:[%s0 + $0x2b8] sm:$0xff]
  %v108 = vld [vmem:[%s0 + $0x2c0] sm:$0xff]
  %v109 = vld [vmem:[%s0 + $0x2c8] sm:$0xff]
  %v110 = vld [vmem:[%s0 + $0x2d0] sm:$0xff]
  %v111 = vld [vmem:[%s0 + $0x2d8] sm:$0xff]
  %v112 = vld [vmem:[%s0 + $0x2e0] sm:$0xff]
  %v113 = vld [vmem:[%s0 + $0x2e8] sm:$0xff]
  %v114 = vld [vmem:[%s0 + $0x2f0] sm:$0xff]
  %v115 = vld [vmem:[%s0 + $0x2f8] sm:$0xff]
  %v116 = vld [vmem:[%s0 + $0x300] sm:$0xff]
  %v117 = vld [vmem:[%s0 + $0x308] sm:$0xff]
  %v118 = vld [vmem:[%s0 + $0x310] sm:$0xff]
  %v119 = vld [vmem:[%s0 + $0x318] sm:$0xff]
  %v120 = vld [vmem:[%s0 + $0x320] sm:$0xff]
  %v121 = vld [vmem:[%s0 + $0x328] sm:$0xff]
  %v122 = vld [vmem:[%s0 + $0x330] sm:$0xff]
  %v123 = vld [vmem:[%s0 + $0x338] sm:$0xff]
  %v124 = vld [vmem:[%s0 + $0x340] sm:$0xff]
  %v125 = vld [vmem:[%s0 + $0x348] sm:$0xff]
  %v126 = vld [vmem:[%s0 + $0x350] sm:$0xff]
  %v127 = vld [vmem:[%s0 + $0x358] sm:$0xff]
  %v128 = vld [vmem:[%s0 + $0x360] sm:$0xff]
  %v129 = vld [vmem:[%s0 + $0x368] sm:$0xff]
  %v130 = vld [vmem:[%s0 + $0x370] sm:$0xff]
  %v131 = vld [vmem:[%s0 + $0x378] sm:$0xff]
  %v132 = vld [vmem:[%s0 + $0x380] sm:$0xff]
  %v133 = vld [vmem:[%s0 + $0x388] sm:$0xff]
  %v134 = vld [vmem:[%s0 + $0x390] sm:$0xff]
  %v135 = vld [vmem:[%s0 + $0x398] sm:$0xff]
  %v136 = vld [vmem:[%s0 + $0x3a0] sm:$0xff]
  %v137 = vld [vmem:[%s0 + $0x3a8] sm:$0xff]
  %v138 = vld [vmem:[%s0 + $0x3b0] sm:$0xff]
  %v139 = vld [vmem:[%s0 + $0x3b8] sm:$0xff]
  %v140 = vld [vmem:[%s0 + $0x3c0] sm:$0xff]
  %v141 = vld [vmem:[%s0 + $0x3c8] sm:$0xff]
  %v142 = vld [vmem:[%s0 + $0x3d0] sm:$0xff]
  %v143 = vld [vmem:[%s0 + $0x3d8] sm:$0xff]
  %v144 = vld [vmem:[%s0 + $0x3e0] sm:$0xff]
  %v145 = vld [vmem:[%s0 + $0x3e8] sm:$0xff]
  %v146 = vld [vmem:[%s0 + $0x3f0] sm:$0xff]
  %v147 = vld [vmem:[%s0 + $0x3f8] sm:$0xff]
  %v148 = vld [vmem:[%s1] sm:$0xff]
  %v149 = vld [vmem:[%s1 + $0x8] sm:$0xff]
  %v150 = vld [vmem:[%s1 + $0x10] sm:$0xff]
  %v151 = vld [vmem:[%s1 + $0x18] sm:$0xff]
  %v152 = vld [vmem:[%s1 + $0x20] sm:$0xff]
  %v153 = vld [vmem:[%s1 + $0x28] sm:$0xff]
  %v154 = vld [vmem:[%s2] sm:$0x1]
  %v156 = vlaneseq
  %v157 = vshrl.u32 %v156, 7
  %v158 = vsub.s32 0, %v157
  %v159 = vrot.slane %v154, %v158
  %vm161 = vcmask 392192
  %v163 = vsel %vm161, %v20, 0
  %v166 = vsel %vm161, %v21, 0
  %v169 = vsel %vm161, %v22, 0
  %v172 = vsel %vm161, %v23, 0
  %v175 = vsel %vm161, %v24, 0
  %v178 = vsel %vm161, %v25, 0
  %v181 = vsel %vm161, %v26, 0
  %v184 = vsel %vm161, %v27, 0
  %v187 = vsel %vm161, %v28, 0
  %v190 = vsel %vm161, %v29, 0
  %v193 = vsel %vm161, %v30, 0
  %v196 = vsel %vm161, %v31, 0
  %v199 = vsel %vm161, %v32, 0
  %v202 = vsel %vm161, %v33, 0
  %v205 = vsel %vm161, %v34, 0
  %v208 = vsel %vm161, %v35, 0
  %v211 = vsel %vm161, %v36, 0
  %v214 = vsel %vm161, %v37, 0
  %v217 = vsel %vm161, %v38, 0
  %v220 = vsel %vm161, %v39, 0
  %v223 = vsel %vm161, %v40, 0
  %v226 = vsel %vm161, %v41, 0
  %v229 = vsel %vm161, %v42, 0
  %v232 = vsel %vm161, %v43, 0
  %v235 = vsel %vm161, %v44, 0
  %v238 = vsel %vm161, %v45, 0
  %v241 = vsel %vm161, %v46, 0
  %v244 = vsel %vm161, %v47, 0
  %v247 = vsel %vm161, %v48, 0
  %v250 = vsel %vm161, %v49, 0
  %v253 = vsel %vm161, %v50, 0
  %v256 = vsel %vm161, %v51, 0
  %v259 = vsel %vm161, %v52, 0
  %v262 = vsel %vm161, %v53, 0
  %v265 = vsel %vm161, %v54, 0
  %v268 = vsel %vm161, %v55, 0
  %v271 = vsel %vm161, %v56, 0
  %v274 = vsel %vm161, %v57, 0
  %v277 = vsel %vm161, %v58, 0
  %v280 = vsel %vm161, %v59, 0
  %v283 = vsel %vm161, %v60, 0
  %v286 = vsel %vm161, %v61, 0
  %v289 = vsel %vm161, %v62, 0
  %v292 = vsel %vm161, %v63, 0
  %v295 = vsel %vm161, %v64, 0
  %v298 = vsel %vm161, %v65, 0
  %v301 = vsel %vm161, %v66, 0
  %v304 = vsel %vm161, %v67, 0
  %v307 = vsel %vm161, %v68, 0
  %v310 = vsel %vm161, %v69, 0
  %v313 = vsel %vm161, %v70, 0
  %v316 = vsel %vm161, %v71, 0
  %v319 = vsel %vm161, %v72, 0
  %v322 = vsel %vm161, %v73, 0
  %v325 = vsel %vm161, %v74, 0
  %v328 = vsel %vm161, %v75, 0
  %v331 = vsel %vm161, %v76, 0
  %v334 = vsel %vm161, %v77, 0
  %v337 = vsel %vm161, %v78, 0
  %v340 = vsel %vm161, %v79, 0
  %v343 = vsel %vm161, %v80, 0
  %v346 = vsel %vm161, %v81, 0
  %v349 = vsel %vm161, %v82, 0
  %v352 = vsel %vm161, %v83, 0
  %v355 = vsel %vm161, %v84, 0
  %v358 = vsel %vm161, %v85, 0
  %v361 = vsel %vm161, %v86, 0
  %v364 = vsel %vm161, %v87, 0
  %v367 = vsel %vm161, %v88, 0
  %v370 = vsel %vm161, %v89, 0
  %v373 = vsel %vm161, %v90, 0
  %v376 = vsel %vm161, %v91, 0
  %v379 = vsel %vm161, %v92, 0
  %v382 = vsel %vm161, %v93, 0
  %v385 = vsel %vm161, %v94, 0
  %v388 = vsel %vm161, %v95, 0
  %v391 = vsel %vm161, %v96, 0
  %v394 = vsel %vm161, %v97, 0
  %v397 = vsel %vm161, %v98, 0
  %v400 = vsel %vm161, %v99, 0
  %v403 = vsel %vm161, %v100, 0
  %v406 = vsel %vm161, %v101, 0
  %v409 = vsel %vm161, %v102, 0
  %v412 = vsel %vm161, %v103, 0
  %v415 = vsel %vm161, %v104, 0
  %v418 = vsel %vm161, %v105, 0
  %v421 = vsel %vm161, %v106, 0
  %v424 = vsel %vm161, %v107, 0
  %v427 = vsel %vm161, %v108, 0
  %v430 = vsel %vm161, %v109, 0
  %v433 = vsel %vm161, %v110, 0
  %v436 = vsel %vm161, %v111, 0
  %v439 = vsel %vm161, %v112, 0
  %v442 = vsel %vm161, %v113, 0
  %v445 = vsel %vm161, %v114, 0
  %v448 = vsel %vm161, %v115, 0
  %v451 = vsel %vm161, %v116, 0
  %v454 = vsel %vm161, %v117, 0
  %v457 = vsel %vm161, %v118, 0
  %v460 = vsel %vm161, %v119, 0
  %v463 = vsel %vm161, %v120, 0
  %v466 = vsel %vm161, %v121, 0
  %v469 = vsel %vm161, %v122, 0
  %v472 = vsel %vm161, %v123, 0
  %v475 = vsel %vm161, %v124, 0
  %v478 = vsel %vm161, %v125, 0
  %v481 = vsel %vm161, %v126, 0
  %v484 = vsel %vm161, %v127, 0
  %v487 = vsel %vm161, %v128, 0
  %v490 = vsel %vm161, %v129, 0
  %v493 = vsel %vm161, %v130, 0
  %v496 = vsel %vm161, %v131, 0
  %v499 = vsel %vm161, %v132, 0
  %v502 = vsel %vm161, %v133, 0
  %v505 = vsel %vm161, %v134, 0
  %v508 = vsel %vm161, %v135, 0
  %v511 = vsel %vm161, %v136, 0
  %v514 = vsel %vm161, %v137, 0
  %v517 = vsel %vm161, %v138, 0
  %v520 = vsel %vm161, %v139, 0
  %v523 = vsel %vm161, %v140, 0
  %v526 = vsel %vm161, %v141, 0
  %v529 = vsel %vm161, %v142, 0
  %v532 = vsel %vm161, %v143, 0
  %v535 = vsel %vm161, %v144, 0
  %v538 = vsel %vm161, %v145, 0
  %v541 = vsel %vm161, %v146, 0
  %v544 = vsel %vm161, %v147, 0
  %546 = vmatprep.subr.mxu0 0.0
  %547 = vmatpush1.msra.mxu0 %v148
  %548 = vmatprep.subr.mxu0 0.0
  %549 = vmatpush1.msra.mxu0 %v149
  %550 = vmatprep.subr.mxu0 0.0
  %551 = vmatpush1.msra.mxu0 %v150
  %552 = vmatprep.subr.mxu0 0.0
  %553 = vmatpush1.msra.mxu0 %v151
  %554 = vmatprep.subr.mxu0 0.0
  %555 = vmatpush1.msra.mxu0 %v152
  %556 = vmatprep.subr.mxu0 0.0
  %557 = vmatpush1.msra.mxu0 %v153
  %558 = vmatprep.subr.mxu0 0.0
  %559 = vmatpush1.msra.mxu0 0.0
  %560 = vmatprep.subr.mxu0 0.0
  %561 = vmatpush1.msra.mxu0 0.0
  %562 = vmatprep.subr.mxu0 0.0
  %563 = vmatpush1.msra.mxu0 0.0
  %564 = vmatprep.subr.mxu0 0.0
  %565 = vmatpush1.msra.mxu0 0.0
  %566 = vmatprep.subr.mxu0 0.0
  %567 = vmatpush1.msra.mxu0 0.0
  %568 = vmatprep.subr.mxu0 0.0
  %569 = vmatpush1.msra.mxu0 0.0
  %570 = vmatprep.subr.mxu0 0.0
  %571 = vmatpush1.msra.mxu0 0.0
  %572 = vmatprep.subr.mxu0 0.0
  %573 = vmatpush1.msra.mxu0 0.0
  %574 = vmatprep.subr.mxu0 0.0
  %575 = vmatpush1.msra.mxu0 0.0
  %576 = vmatprep.subr.mxu0 0.0
  %577 = vmatpush1.msra.mxu0 0.0
  %578 = vmatprep.subr.mxu0 0.0
  %579 = vmatpush1.msra.mxu0 0.0
  %580 = vmatprep.subr.mxu0 0.0
  %581 = vmatpush1.msra.mxu0 0.0
  %582 = vmatprep.subr.mxu0 0.0
  %583 = vmatpush1.msra.mxu0 0.0
  %584 = vmatprep.subr.mxu0 0.0
  %585 = vmatpush1.msra.mxu0 0.0
  %586 = vmatprep.subr.mxu0 0.0
  %587 = vmatpush1.msra.mxu0 0.0
  %588 = vmatprep.subr.mxu0 0.0
  %589 = vmatpush1.msra.mxu0 0.0
  %590 = vmatprep.subr.mxu0 0.0
  %591 = vmatpush1.msra.mxu0 0.0
  %592 = vmatprep.subr.mxu0 0.0
  %593 = vmatpush1.msra.mxu0 0.0
  %594 = vmatprep.subr.mxu0 0.0
  %595 = vmatpush1.msra.mxu0 0.0
  %596 = vmatprep.subr.mxu0 0.0
  %597 = vmatpush1.msra.mxu0 0.0
  %598 = vmatprep.subr.mxu0 0.0
  %599 = vmatpush1.msra.mxu0 0.0
  %600 = vmatprep.subr.mxu0 0.0
  %601 = vmatpush1.msra.mxu0 0.0
  %602 = vmatprep.subr.mxu0 0.0
  %603 = vmatpush1.msra.mxu0 0.0
  %604 = vmatprep.subr.mxu0 0.0
  %605 = vmatpush1.msra.mxu0 0.0
  %606 = vmatprep.subr.mxu0 0.0
  %607 = vmatpush1.msra.mxu0 0.0
  %608 = vmatprep.subr.mxu0 0.0
  %609 = vmatpush1.msra.mxu0 0.0
  %610 = vmatprep.mubr.f32.mxu0 0.0
  %611 = vmatmul.mubr.f32.gmra.mrb[0].mxu0 %v163
  %v612 = vpop.f32.mrb[0].mxu0
  %v613 = vadd.f32 %v159, %v612
  %v614 = vpop.f32.mrb[0].mxu0
  %615 = vmatprep.mubr.f32.mxu0 0.0
  %616 = vmatmul.mubr.f32.gmra.mrb[0].mxu0 %v166
  %v617 = vpop.f32.mrb[0].mxu0
  %v618 = vadd.f32 %v159, %v617
  %v619 = vpop.f32.mrb[0].mxu0
  %620 = vmatprep.mubr.f32.mxu0 0.0
  %621 = vmatmul.mubr.f32.gmra.mrb[0].mxu0 %v169
  %v622 = vpop.f32.mrb[0].mxu0
  %v623 = vadd.f32 %v159, %v622
  %v624 = vpop.f32.mrb[0].mxu0
  %625 = vmatprep.mubr.f32.mxu0 0.0
  %626 = vmatmul.mubr.f32.gmra.mrb[0].mxu0 %v172
  %v627 = vpop.f32.mrb[0].mxu0
  %v628 = vadd.f32 %v159, %v627
  %v629 = vpop.f32.mrb[0].mxu0
  %630 = vmatprep.mubr.f32.mxu0 0.0
  %631 = vmatmul.mubr.f32.gmra.mrb[0].mxu0 %v175
  %v632 = vpop.f32.mrb[0].mxu0
  %v633 = vadd.f32 %v159, %v632
  %v634 = vpop.f32.mrb[0].mxu0
  %635 = vmatprep.mubr.f32.mxu0 0.0
  %636 = vmatmul.mubr.f32.gmra.mrb[0].mxu0 %v178
  %v637 = vpop.f32.mrb[0].mxu0
  %v638 = vadd.f32 %v159, %v637
  %v639 = vpop.f32.mrb[0].mxu0
  %640 = vmatprep.mubr.f32.mxu0 0.0
  %641 = vmatmul.mubr.f32.gmra.mrb[0].mxu0 %v181
  %v642 = vpop.f32.mrb[0].mxu0
  %v643 = vadd.f32 %v159, %v642
  %v644 = vpop.f32.mrb[0].mxu0
  %645 = vmatprep.mubr.f32.mxu0 0.0
  %646 = vmatmul.mubr.f32.gmra.mrb[0].mxu0 %v184
  %v647 = vpop.f32.mrb[0].mxu0
  %v648 = vadd.f32 %v159, %v647
  %v649 = vpop.f32.mrb[0].mxu0
  %650 = vmatprep.mubr.f32.mxu0 0.0
  %651 = vmatmul.mubr.f32.gmra.mrb[0].mxu0 %v187
  %v652 = vpop.f32.mrb[0].mxu0
  %v653 = vadd.f32 %v159, %v652
  %v654 = vpop.f32.mrb[0].mxu0
  %655 = vmatprep.mubr.f32.mxu0 0.0
  %656 = vmatmul.mubr.f32.gmra.mrb[0].mxu0 %v190
  %v657 = vpop.f32.mrb[0].mxu0
  %v658 = vadd.f32 %v159, %v657
  %v659 = vpop.f32.mrb[0].mxu0
  %660 = vmatprep.mubr.f32.mxu0 0.0
  %661 = vmatmul.mubr.f32.gmra.mrb[0].mxu0 %v193
  %v662 = vpop.f32.mrb[0].mxu0
  %v663 = vadd.f32 %v159, %v662
  %v664 = vpop.f32.mrb[0].mxu0
  %665 = vmatprep.mubr.f32.mxu0 0.0
  %666 = vmatmul.mubr.f32.gmra.mrb[0].mxu0 %v196
  %v667 = vpop.f32.mrb[0].mxu0
  %v668 = vadd.f32 %v159, %v667
  %v669 = vpop.f32.mrb[0].mxu0
  %670 = vmatprep.mubr.f32.mxu0 0.0
  %671 = vmatmul.mubr.f32.gmra.mrb[0].mxu0 %v199
  %v672 = vpop.f32.mrb[0].mxu0
  %v673 = vadd.f32 %v159, %v672
  %v674 = vpop.f32.mrb[0].mxu0
  %675 = vmatprep.mubr.f32.mxu0 0.0
  %676 = vmatmul.mubr.f32.gmra.mrb[0].mxu0 %v202
  %v677 = vpop.f32.mrb[0].mxu0
  %v678 = vadd.f32 %v159, %v677
  %v679 = vpop.f32.mrb[0].mxu0
  %680 = vmatprep.mubr.f32.mxu0 0.0
  %681 = vmatmul.mubr.f32.gmra.mrb[0].mxu0 %v205
  %v682 = vpop.f32.mrb[0].mxu0
  %v683 = vadd.f32 %v159, %v682
  %v684 = vpop.f32.mrb[0].mxu0
  %685 = vmatprep.mubr.f32.mxu0 0.0
  %686 = vmatmul.mubr.f32.gmra.mrb[0].mxu0 %v208
  %v687 = vpop.f32.mrb[0].mxu0
  %v688 = vadd.f32 %v159, %v687
  %v689 = vpop.f32.mrb[0].mxu0
  %690 = vmatprep.mubr.f32.mxu0 0.0
  %691 = vmatmul.mubr.f32.gmra.mrb[0].mxu0 %v211
  %v692 = vpop.f32.mrb[0].mxu0
  %v693 = vadd.f32 %v159, %v692
  %v694 = vpop.f32.mrb[0].mxu0
  %695 = vmatprep.mubr.f32.mxu0 0.0
  %696 = vmatmul.mubr.f32.gmra.mrb[0].mxu0 %v214
  %v697 = vpop.f32.mrb[0].mxu0
  %v698 = vadd.f32 %v159, %v697
  %v699 = vpop.f32.mrb[0].mxu0
  %700 = vmatprep.mubr.f32.mxu0 0.0
  %701 = vmatmul.mubr.f32.gmra.mrb[0].mxu0 %v217
  %v702 = vpop.f32.mrb[0].mxu0
  %v703 = vadd.f32 %v159, %v702
  %v704 = vpop.f32.mrb[0].mxu0
  %705 = vmatprep.mubr.f32.mxu0 0.0
  %706 = vmatmul.mubr.f32.gmra.mrb[0].mxu0 %v220
  %v707 = vpop.f32.mrb[0].mxu0
  %v708 = vadd.f32 %v159, %v707
  %v709 = vpop.f32.mrb[0].mxu0
  %710 = vmatprep.mubr.f32.mxu0 0.0
  %711 = vmatmul.mubr.f32.gmra.mrb[0].mxu0 %v223
  %v712 = vpop.f32.mrb[0].mxu0
  %v713 = vadd.f32 %v159, %v712
  %v714 = vpop.f32.mrb[0].mxu0
  %715 = vmatprep.mubr.f32.mxu0 0.0
  %716 = vmatmul.mubr.f32.gmra.mrb[0].mxu0 %v226
  %v717 = vpop.f32.mrb[0].mxu0
  %v718 = vadd.f32 %v159, %v717
  %v719 = vpop.f32.mrb[0].mxu0
  %720 = vmatprep.mubr.f32.mxu0 0.0
  %721 = vmatmul.mubr.f32.gmra.mrb[0].mxu0 %v229
  %v722 = vpop.f32.mrb[0].mxu0
  %v723 = vadd.f32 %v159, %v722
  %v724 = vpop.f32.mrb[0].mxu0
  %725 = vmatprep.mubr.f32.mxu0 0.0
  %726 = vmatmul.mubr.f32.gmra.mrb[0].mxu0 %v232
  %v727 = vpop.f32.mrb[0].mxu0
  %v728 = vadd.f32 %v159, %v727
  %v729 = vpop.f32.mrb[0].mxu0
  %730 = vmatprep.mubr.f32.mxu0 0.0
  %731 = vmatmul.mubr.f32.gmra.mrb[0].mxu0 %v235
  %v732 = vpop.f32.mrb[0].mxu0
  %v733 = vadd.f32 %v159, %v732
  %v734 = vpop.f32.mrb[0].mxu0
  %735 = vmatprep.mubr.f32.mxu0 0.0
  %736 = vmatmul.mubr.f32.gmra.mrb[0].mxu0 %v238
  %v737 = vpop.f32.mrb[0].mxu0
  %v738 = vadd.f32 %v159, %v737
  %v739 = vpop.f32.mrb[0].mxu0
  %740 = vmatprep.mubr.f32.mxu0 0.0
  %741 = vmatmul.mubr.f32.gmra.mrb[0].mxu0 %v241
  %v742 = vpop.f32.mrb[0].mxu0
  %v743 = vadd.f32 %v159, %v742
  %v744 = vpop.f32.mrb[0].mxu0
  %745 = vmatprep.mubr.f32.mxu0 0.0
  %746 = vmatmul.mubr.f32.gmra.mrb[0].mxu0 %v244
  %v747 = vpop.f32.mrb[0].mxu0
  %v748 = vadd.f32 %v159, %v747
  %v749 = vpop.f32.mrb[0].mxu0
  %750 = vmatprep.mubr.f32.mxu0 0.0
  %751 = vmatmul.mubr.f32.gmra.mrb[0].mxu0 %v247
  %v752 = vpop.f32.mrb[0].mxu0
  %v753 = vadd.f32 %v159, %v752
  %v754 = vpop.f32.mrb[0].mxu0
  %755 = vmatprep.mubr.f32.mxu0 0.0
  %756 = vmatmul.mubr.f32.gmra.mrb[0].mxu0 %v250
  %v757 = vpop.f32.mrb[0].mxu0
  %v758 = vadd.f32 %v159, %v757
  %v759 = vpop.f32.mrb[0].mxu0
  %760 = vmatprep.mubr.f32.mxu0 0.0
  %761 = vmatmul.mubr.f32.gmra.mrb[0].mxu0 %v253
  %v762 = vpop.f32.mrb[0].mxu0
  %v763 = vadd.f32 %v159, %v762
  %v764 = vpop.f32.mrb[0].mxu0
  %765 = vmatprep.mubr.f32.mxu0 0.0
  %766 = vmatmul.mubr.f32.gmra.mrb[0].mxu0 %v256
  %v767 = vpop.f32.mrb[0].mxu0
  %v768 = vadd.f32 %v159, %v767
  %v769 = vpop.f32.mrb[0].mxu0
  %770 = vmatprep.mubr.f32.mxu0 0.0
  %771 = vmatmul.mubr.f32.gmra.mrb[0].mxu0 %v259
  %v772 = vpop.f32.mrb[0].mxu0
  %v773 = vadd.f32 %v159, %v772
  %v774 = vpop.f32.mrb[0].mxu0
  %775 = vmatprep.mubr.f32.mxu0 0.0
  %776 = vmatmul.mubr.f32.gmra.mrb[0].mxu0 %v262
  %v777 = vpop.f32.mrb[0].mxu0
  %v778 = vadd.f32 %v159, %v777
  %v779 = vpop.f32.mrb[0].mxu0
  %780 = vmatprep.mubr.f32.mxu0 0.0
  %781 = vmatmul.mubr.f32.gmra.mrb[0].mxu0 %v265
  %v782 = vpop.f32.mrb[0].mxu0
  %v783 = vadd.f32 %v159, %v782
  %v784 = vpop.f32.mrb[0].mxu0
  %785 = vmatprep.mubr.f32.mxu0 0.0
  %786 = vmatmul.mubr.f32.gmra.mrb[0].mxu0 %v268
  %v787 = vpop.f32.mrb[0].mxu0
  %v788 = vadd.f32 %v159, %v787
  %v789 = vpop.f32.mrb[0].mxu0
  %790 = vmatprep.mubr.f32.mxu0 0.0
  %791 = vmatmul.mubr.f32.gmra.mrb[0].mxu0 %v271
  %v792 = vpop.f32.mrb[0].mxu0
  %v793 = vadd.f32 %v159, %v792
  %v794 = vpop.f32.mrb[0].mxu0
  %795 = vmatprep.mubr.f32.mxu0 0.0
  %796 = vmatmul.mubr.f32.gmra.mrb[0].mxu0 %v274
  %v797 = vpop.f32.mrb[0].mxu0
  %v798 = vadd.f32 %v159, %v797
  %v799 = vpop.f32.mrb[0].mxu0
  %800 = vmatprep.mubr.f32.mxu0 0.0
  %801 = vmatmul.mubr.f32.gmra.mrb[0].mxu0 %v277
  %v802 = vpop.f32.mrb[0].mxu0
  %v803 = vadd.f32 %v159, %v802
  %v804 = vpop.f32.mrb[0].mxu0
  %805 = vmatprep.mubr.f32.mxu0 0.0
  %806 = vmatmul.mubr.f32.gmra.mrb[0].mxu0 %v280
  %v807 = vpop.f32.mrb[0].mxu0
  %v808 = vadd.f32 %v159, %v807
  %v809 = vpop.f32.mrb[0].mxu0
  %810 = vmatprep.mubr.f32.mxu0 0.0
  %811 = vmatmul.mubr.f32.gmra.mrb[0].mxu0 %v283
  %v812 = vpop.f32.mrb[0].mxu0
  %v813 = vadd.f32 %v159, %v812
  %v814 = vpop.f32.mrb[0].mxu0
  %815 = vmatprep.mubr.f32.mxu0 0.0
  %816 = vmatmul.mubr.f32.gmra.mrb[0].mxu0 %v286
  %v817 = vpop.f32.mrb[0].mxu0
  %v818 = vadd.f32 %v159, %v817
  %v819 = vpop.f32.mrb[0].mxu0
  %820 = vmatprep.mubr.f32.mxu0 0.0
  %821 = vmatmul.mubr.f32.gmra.mrb[0].mxu0 %v289
  %v822 = vpop.f32.mrb[0].mxu0
  %v823 = vadd.f32 %v159, %v822
  %v824 = vpop.f32.mrb[0].mxu0
  %825 = vmatprep.mubr.f32.mxu0 0.0
  %826 = vmatmul.mubr.f32.gmra.mrb[0].mxu0 %v292
  %v827 = vpop.f32.mrb[0].mxu0
  %v828 = vadd.f32 %v159, %v827
  %v829 = vpop.f32.mrb[0].mxu0
  %830 = vmatprep.mubr.f32.mxu0 0.0
  %831 = vmatmul.mubr.f32.gmra.mrb[0].mxu0 %v295
  %v832 = vpop.f32.mrb[0].mxu0
  %v833 = vadd.f32 %v159, %v832
  %v834 = vpop.f32.mrb[0].mxu0
  %835 = vmatprep.mubr.f32.mxu0 0.0
  %836 = vmatmul.mubr.f32.gmra.mrb[0].mxu0 %v298
  %v837 = vpop.f32.mrb[0].mxu0
  %v838 = vadd.f32 %v159, %v837
  %v839 = vpop.f32.mrb[0].mxu0
  %840 = vmatprep.mubr.f32.mxu0 0.0
  %841 = vmatmul.mubr.f32.gmra.mrb[0].mxu0 %v301
  %v842 = vpop.f32.mrb[0].mxu0
  %v843 = vadd.f32 %v159, %v842
  %v844 = vpop.f32.mrb[0].mxu0
  %845 = vmatprep.mubr.f32.mxu0 0.0
  %846 = vmatmul.mubr.f32.gmra.mrb[0].mxu0 %v304
  %v847 = vpop.f32.mrb[0].mxu0
  %v848 = vadd.f32 %v159, %v847
  %v849 = vpop.f32.mrb[0].mxu0
  %850 = vmatprep.mubr.f32.mxu0 0.0
  %851 = vmatmul.mubr.f32.gmra.mrb[0].mxu0 %v307
  %v852 = vpop.f32.mrb[0].mxu0
  %v853 = vadd.f32 %v159, %v852
  %v854 = vpop.f32.mrb[0].mxu0
  %855 = vmatprep.mubr.f32.mxu0 0.0
  %856 = vmatmul.mubr.f32.gmra.mrb[0].mxu0 %v310
  %v857 = vpop.f32.mrb[0].mxu0
  %v858 = vadd.f32 %v159, %v857
  %v859 = vpop.f32.mrb[0].mxu0
  %860 = vmatprep.mubr.f32.mxu0 0.0
  %861 = vmatmul.mubr.f32.gmra.mrb[0].mxu0 %v313
  %v862 = vpop.f32.mrb[0].mxu0
  %v863 = vadd.f32 %v159, %v862
  %v864 = vpop.f32.mrb[0].mxu0
  %865 = vmatprep.mubr.f32.mxu0 0.0
  %866 = vmatmul.mubr.f32.gmra.mrb[0].mxu0 %v316
  %v867 = vpop.f32.mrb[0].mxu0
  %v868 = vadd.f32 %v159, %v867
  %v869 = vpop.f32.mrb[0].mxu0
  %870 = vmatprep.mubr.f32.mxu0 0.0
  %871 = vmatmul.mubr.f32.gmra.mrb[0].mxu0 %v319
  %v872 = vpop.f32.mrb[0].mxu0
  %v873 = vadd.f32 %v159, %v872
  %v874 = vpop.f32.mrb[0].mxu0
  %875 = vmatprep.mubr.f32.mxu0 0.0
  %876 = vmatmul.mubr.f32.gmra.mrb[0].mxu0 %v322
  %v877 = vpop.f32.mrb[0].mxu0
  %v878 = vadd.f32 %v159, %v877
  %v879 = vpop.f32.mrb[0].mxu0
  %880 = vmatprep.mubr.f32.mxu0 0.0
  %881 = vmatmul.mubr.f32.gmra.mrb[0].mxu0 %v325
  %v882 = vpop.f32.mrb[0].mxu0
  %v883 = vadd.f32 %v159, %v882
  %v884 = vpop.f32.mrb[0].mxu0
  %885 = vmatprep.mubr.f32.mxu0 0.0
  %886 = vmatmul.mubr.f32.gmra.mrb[0].mxu0 %v328
  %v887 = vpop.f32.mrb[0].mxu0
  %v888 = vadd.f32 %v159, %v887
  %v889 = vpop.f32.mrb[0].mxu0
  %890 = vmatprep.mubr.f32.mxu0 0.0
  %891 = vmatmul.mubr.f32.gmra.mrb[0].mxu0 %v331
  %v892 = vpop.f32.mrb[0].mxu0
  %v893 = vadd.f32 %v159, %v892
  %v894 = vpop.f32.mrb[0].mxu0
  %895 = vmatprep.mubr.f32.mxu0 0.0
  %896 = vmatmul.mubr.f32.gmra.mrb[0].mxu0 %v334
  %v897 = vpop.f32.mrb[0].mxu0
  %v898 = vadd.f32 %v159, %v897
  %v899 = vpop.f32.mrb[0].mxu0
  %900 = vmatprep.mubr.f32.mxu0 0.0
  %901 = vmatmul.mubr.f32.gmra.mrb[0].mxu0 %v337
  %v902 = vpop.f32.mrb[0].mxu0
  %v903 = vadd.f32 %v159, %v902
  %v904 = vpop.f32.mrb[0].mxu0
  %905 = vmatprep.mubr.f32.mxu0 0.0
  %906 = vmatmul.mubr.f32.gmra.mrb[0].mxu0 %v340
  %v907 = vpop.f32.mrb[0].mxu0
  %v908 = vadd.f32 %v159, %v907
  %v909 = vpop.f32.mrb[0].mxu0
  %910 = vmatprep.mubr.f32.mxu0 0.0
  %911 = vmatmul.mubr.f32.gmra.mrb[0].mxu0 %v343
  %v912 = vpop.f32.mrb[0].mxu0
  %v913 = vadd.f32 %v159, %v912
  %v914 = vpop.f32.mrb[0].mxu0
  %915 = vmatprep.mubr.f32.mxu0 0.0
  %916 = vmatmul.mubr.f32.gmra.mrb[0].mxu0 %v346
  %v917 = vpop.f32.mrb[0].mxu0
  %v918 = vadd.f32 %v159, %v917
  %v919 = vpop.f32.mrb[0].mxu0
  %920 = vmatprep.mubr.f32.mxu0 0.0
  %921 = vmatmul.mubr.f32.gmra.mrb[0].mxu0 %v349
  %v922 = vpop.f32.mrb[0].mxu0
  %v923 = vadd.f32 %v159, %v922
  %v924 = vpop.f32.mrb[0].mxu0
  %925 = vmatprep.mubr.f32.mxu0 0.0
  %926 = vmatmul.mubr.f32.gmra.mrb[0].mxu0 %v352
  %v927 = vpop.f32.mrb[0].mxu0
  %v928 = vadd.f32 %v159, %v927
  %v929 = vpop.f32.mrb[0].mxu0
  %930 = vmatprep.mubr.f32.mxu0 0.0
  %931 = vmatmul.mubr.f32.gmra.mrb[0].mxu0 %v355
  %v932 = vpop.f32.mrb[0].mxu0
  %v933 = vadd.f32 %v159, %v932
  %v934 = vpop.f32.mrb[0].mxu0
  %935 = vmatprep.mubr.f32.mxu0 0.0
  %936 = vmatmul.mubr.f32.gmra.mrb[0].mxu0 %v358
  %v937 = vpop.f32.mrb[0].mxu0
  %v938 = vadd.f32 %v159, %v937
  %v939 = vpop.f32.mrb[0].mxu0
  %940 = vmatprep.mubr.f32.mxu0 0.0
  %941 = vmatmul.mubr.f32.gmra.mrb[0].mxu0 %v361
  %v942 = vpop.f32.mrb[0].mxu0
  %v943 = vadd.f32 %v159, %v942
  %v944 = vpop.f32.mrb[0].mxu0
  %945 = vmatprep.mubr.f32.mxu0 0.0
  %946 = vmatmul.mubr.f32.gmra.mrb[0].mxu0 %v364
  %v947 = vpop.f32.mrb[0].mxu0
  %v948 = vadd.f32 %v159, %v947
  %v949 = vpop.f32.mrb[0].mxu0
  %950 = vmatprep.mubr.f32.mxu0 0.0
  %951 = vmatmul.mubr.f32.gmra.mrb[0].mxu0 %v367
  %v952 = vpop.f32.mrb[0].mxu0
  %v953 = vadd.f32 %v159, %v952
  %v954 = vpop.f32.mrb[0].mxu0
  %955 = vmatprep.mubr.f32.mxu0 0.0
  %956 = vmatmul.mubr.f32.gmra.mrb[0].mxu0 %v370
  %v957 = vpop.f32.mrb[0].mxu0
  %v958 = vadd.f32 %v159, %v957
  %v959 = vpop.f32.mrb[0].mxu0
  %960 = vmatprep.mubr.f32.mxu0 0.0
  %961 = vmatmul.mubr.f32.gmra.mrb[0].mxu0 %v373
  %v962 = vpop.f32.mrb[0].mxu0
  %v963 = vadd.f32 %v159, %v962
  %v964 = vpop.f32.mrb[0].mxu0
  %965 = vmatprep.mubr.f32.mxu0 0.0
  %966 = vmatmul.mubr.f32.gmra.mrb[0].mxu0 %v376
  %v967 = vpop.f32.mrb[0].mxu0
  %v968 = vadd.f32 %v159, %v967
  %v969 = vpop.f32.mrb[0].mxu0
  %970 = vmatprep.mubr.f32.mxu0 0.0
  %971 = vmatmul.mubr.f32.gmra.mrb[0].mxu0 %v379
  %v972 = vpop.f32.mrb[0].mxu0
  %v973 = vadd.f32 %v159, %v972
  %v974 = vpop.f32.mrb[0].mxu0
  %975 = vmatprep.mubr.f32.mxu0 0.0
  %976 = vmatmul.mubr.f32.gmra.mrb[0].mxu0 %v382
  %v977 = vpop.f32.mrb[0].mxu0
  %v978 = vadd.f32 %v159, %v977
  %v979 = vpop.f32.mrb[0].mxu0
  %980 = vmatprep.mubr.f32.mxu0 0.0
  %981 = vmatmul.mubr.f32.gmra.mrb[0].mxu0 %v385
  %v982 = vpop.f32.mrb[0].mxu0
  %v983 = vadd.f32 %v159, %v982
  %v984 = vpop.f32.mrb[0].mxu0
  %985 = vmatprep.mubr.f32.mxu0 0.0
  %986 = vmatmul.mubr.f32.gmra.mrb[0].mxu0 %v388
  %v987 = vpop.f32.mrb[0].mxu0
  %v988 = vadd.f32 %v159, %v987
  %v989 = vpop.f32.mrb[0].mxu0
  %990 = vmatprep.mubr.f32.mxu0 0.0
  %991 = vmatmul.mubr.f32.gmra.mrb[0].mxu0 %v391
  %v992 = vpop.f32.mrb[0].mxu0
  %v993 = vadd.f32 %v159, %v992
  %v994 = vpop.f32.mrb[0].mxu0
  %995 = vmatprep.mubr.f32.mxu0 0.0
  %996 = vmatmul.mubr.f32.gmra.mrb[0].mxu0 %v394
  %v997 = vpop.f32.mrb[0].mxu0
  %v998 = vadd.f32 %v159, %v997
  %v999 = vpop.f32.mrb[0].mxu0
  %1000 = vmatprep.mubr.f32.mxu0 0.0
  %1001 = vmatmul.mubr.f32.gmra.mrb[0].mxu0 %v397
  %v1002 = vpop.f32.mrb[0].mxu0
  %v1003 = vadd.f32 %v159, %v1002
  %v1004 = vpop.f32.mrb[0].mxu0
  %1005 = vmatprep.mubr.f32.mxu0 0.0
  %1006 = vmatmul.mubr.f32.gmra.mrb[0].mxu0 %v400
  %v1007 = vpop.f32.mrb[0].mxu0
  %v1008 = vadd.f32 %v159, %v1007
  %v1009 = vpop.f32.mrb[0].mxu0
  %1010 = vmatprep.mubr.f32.mxu0 0.0
  %1011 = vmatmul.mubr.f32.gmra.mrb[0].mxu0 %v403
  %v1012 = vpop.f32.mrb[0].mxu0
  %v1013 = vadd.f32 %v159, %v1012
  %v1014 = vpop.f32.mrb[0].mxu0
  %1015 = vmatprep.mubr.f32.mxu0 0.0
  %1016 = vmatmul.mubr.f32.gmra.mrb[0].mxu0 %v406
  %v1017 = vpop.f32.mrb[0].mxu0
  %v1018 = vadd.f32 %v159, %v1017
  %v1019 = vpop.f32.mrb[0].mxu0
  %1020 = vmatprep.mubr.f32.mxu0 0.0
  %1021 = vmatmul.mubr.f32.gmra.mrb[0].mxu0 %v409
  %v1022 = vpop.f32.mrb[0].mxu0
  %v1023 = vadd.f32 %v159, %v1022
  %v1024 = vpop.f32.mrb[0].mxu0
  %1025 = vmatprep.mubr.f32.mxu0 0.0
  %1026 = vmatmul.mubr.f32.gmra.mrb[0].mxu0 %v412
  %v1027 = vpop.f32.mrb[0].mxu0
  %v1028 = vadd.f32 %v159, %v1027
  %v1029 = vpop.f32.mrb[0].mxu0
  %1030 = vmatprep.mubr.f32.mxu0 0.0
  %1031 = vmatmul.mubr.f32.gmra.mrb[0].mxu0 %v415
  %v1032 = vpop.f32.mrb[0].mxu0
  %v1033 = vadd.f32 %v159, %v1032
  %v1034 = vpop.f32.mrb[0].mxu0
  %1035 = vmatprep.mubr.f32.mxu0 0.0
  %1036 = vmatmul.mubr.f32.gmra.mrb[0].mxu0 %v418
  %v1037 = vpop.f32.mrb[0].mxu0
  %v1038 = vadd.f32 %v159, %v1037
  %v1039 = vpop.f32.mrb[0].mxu0
  %1040 = vmatprep.mubr.f32.mxu0 0.0
  %1041 = vmatmul.mubr.f32.gmra.mrb[0].mxu0 %v421
  %v1042 = vpop.f32.mrb[0].mxu0
  %v1043 = vadd.f32 %v159, %v1042
  %v1044 = vpop.f32.mrb[0].mxu0
  %1045 = vmatprep.mubr.f32.mxu0 0.0
  %1046 = vmatmul.mubr.f32.gmra.mrb[0].mxu0 %v424
  %v1047 = vpop.f32.mrb[0].mxu0
  %v1048 = vadd.f32 %v159, %v1047
  %v1049 = vpop.f32.mrb[0].mxu0
  %1050 = vmatprep.mubr.f32.mxu0 0.0
  %1051 = vmatmul.mubr.f32.gmra.mrb[0].mxu0 %v427
  %v1052 = vpop.f32.mrb[0].mxu0
  %v1053 = vadd.f32 %v159, %v1052
  %v1054 = vpop.f32.mrb[0].mxu0
  %1055 = vmatprep.mubr.f32.mxu0 0.0
  %1056 = vmatmul.mubr.f32.gmra.mrb[0].mxu0 %v430
  %v1057 = vpop.f32.mrb[0].mxu0
  %v1058 = vadd.f32 %v159, %v1057
  %v1059 = vpop.f32.mrb[0].mxu0
  %1060 = vmatprep.mubr.f32.mxu0 0.0
  %1061 = vmatmul.mubr.f32.gmra.mrb[0].mxu0 %v433
  %v1062 = vpop.f32.mrb[0].mxu0
  %v1063 = vadd.f32 %v159, %v1062
  %v1064 = vpop.f32.mrb[0].mxu0
  %1065 = vmatprep.mubr.f32.mxu0 0.0
  %1066 = vmatmul.mubr.f32.gmra.mrb[0].mxu0 %v436
  %v1067 = vpop.f32.mrb[0].mxu0
  %v1068 = vadd.f32 %v159, %v1067
  %v1069 = vpop.f32.mrb[0].mxu0
  %1070 = vmatprep.mubr.f32.mxu0 0.0
  %1071 = vmatmul.mubr.f32.gmra.mrb[0].mxu0 %v439
  %v1072 = vpop.f32.mrb[0].mxu0
  %v1073 = vadd.f32 %v159, %v1072
  %v1074 = vpop.f32.mrb[0].mxu0
  %1075 = vmatprep.mubr.f32.mxu0 0.0
  %1076 = vmatmul.mubr.f32.gmra.mrb[0].mxu0 %v442
  %v1077 = vpop.f32.mrb[0].mxu0
  %v1078 = vadd.f32 %v159, %v1077
  %v1079 = vpop.f32.mrb[0].mxu0
  %1080 = vmatprep.mubr.f32.mxu0 0.0
  %1081 = vmatmul.mubr.f32.gmra.mrb[0].mxu0 %v445
  %v1082 = vpop.f32.mrb[0].mxu0
  %v1083 = vadd.f32 %v159, %v1082
  %v1084 = vpop.f32.mrb[0].mxu0
  %1085 = vmatprep.mubr.f32.mxu0 0.0
  %1086 = vmatmul.mubr.f32.gmra.mrb[0].mxu0 %v448
  %v1087 = vpop.f32.mrb[0].mxu0
  %v1088 = vadd.f32 %v159, %v1087
  %v1089 = vpop.f32.mrb[0].mxu0
  %1090 = vmatprep.mubr.f32.mxu0 0.0
  %1091 = vmatmul.mubr.f32.gmra.mrb[0].mxu0 %v451
  %v1092 = vpop.f32.mrb[0].mxu0
  %v1093 = vadd.f32 %v159, %v1092
  %v1094 = vpop.f32.mrb[0].mxu0
  %1095 = vmatprep.mubr.f32.mxu0 0.0
  %1096 = vmatmul.mubr.f32.gmra.mrb[0].mxu0 %v454
  %v1097 = vpop.f32.mrb[0].mxu0
  %v1098 = vadd.f32 %v159, %v1097
  %v1099 = vpop.f32.mrb[0].mxu0
  %1100 = vmatprep.mubr.f32.mxu0 0.0
  %1101 = vmatmul.mubr.f32.gmra.mrb[0].mxu0 %v457
  %v1102 = vpop.f32.mrb[0].mxu0
  %v1103 = vadd.f32 %v159, %v1102
  %v1104 = vpop.f32.mrb[0].mxu0
  %1105 = vmatprep.mubr.f32.mxu0 0.0
  %1106 = vmatmul.mubr.f32.gmra.mrb[0].mxu0 %v460
  %v1107 = vpop.f32.mrb[0].mxu0
  %v1108 = vadd.f32 %v159, %v1107
  %v1109 = vpop.f32.mrb[0].mxu0
  %1110 = vmatprep.mubr.f32.mxu0 0.0
  %1111 = vmatmul.mubr.f32.gmra.mrb[0].mxu0 %v463
  %v1112 = vpop.f32.mrb[0].mxu0
  %v1113 = vadd.f32 %v159, %v1112
  %v1114 = vpop.f32.mrb[0].mxu0
  %1115 = vmatprep.mubr.f32.mxu0 0.0
  %1116 = vmatmul.mubr.f32.gmra.mrb[0].mxu0 %v466
  %v1117 = vpop.f32.mrb[0].mxu0
  %v1118 = vadd.f32 %v159, %v1117
  %v1119 = vpop.f32.mrb[0].mxu0
  %1120 = vmatprep.mubr.f32.mxu0 0.0
  %1121 = vmatmul.mubr.f32.gmra.mrb[0].mxu0 %v469
  %v1122 = vpop.f32.mrb[0].mxu0
  %v1123 = vadd.f32 %v159, %v1122
  %v1124 = vpop.f32.mrb[0].mxu0
  %1125 = vmatprep.mubr.f32.mxu0 0.0
  %1126 = vmatmul.mubr.f32.gmra.mrb[0].mxu0 %v472
  %v1127 = vpop.f32.mrb[0].mxu0
  %v1128 = vadd.f32 %v159, %v1127
  %v1129 = vpop.f32.mrb[0].mxu0
  %1130 = vmatprep.mubr.f32.mxu0 0.0
  %1131 = vmatmul.mubr.f32.gmra.mrb[0].mxu0 %v475
  %v1132 = vpop.f32.mrb[0].mxu0
  %v1133 = vadd.f32 %v159, %v1132
  %v1134 = vpop.f32.mrb[0].mxu0
  %1135 = vmatprep.mubr.f32.mxu0 0.0
  %1136 = vmatmul.mubr.f32.gmra.mrb[0].mxu0 %v478
  %v1137 = vpop.f32.mrb[0].mxu0
  %v1138 = vadd.f32 %v159, %v1137
  %v1139 = vpop.f32.mrb[0].mxu0
  %1140 = vmatprep.mubr.f32.mxu0 0.0
  %1141 = vmatmul.mubr.f32.gmra.mrb[0].mxu0 %v481
  %v1142 = vpop.f32.mrb[0].mxu0
  %v1143 = vadd.f32 %v159, %v1142
  %v1144 = vpop.f32.mrb[0].mxu0
  %1145 = vmatprep.mubr.f32.mxu0 0.0
  %1146 = vmatmul.mubr.f32.gmra.mrb[0].mxu0 %v484
  %v1147 = vpop.f32.mrb[0].mxu0
  %v1148 = vadd.f32 %v159, %v1147
  %v1149 = vpop.f32.mrb[0].mxu0
  %1150 = vmatprep.mubr.f32.mxu0 0.0
  %1151 = vmatmul.mubr.f32.gmra.mrb[0].mxu0 %v487
  %v1152 = vpop.f32.mrb[0].mxu0
  %v1153 = vadd.f32 %v159, %v1152
  %v1154 = vpop.f32.mrb[0].mxu0
  %1155 = vmatprep.mubr.f32.mxu0 0.0
  %1156 = vmatmul.mubr.f32.gmra.mrb[0].mxu0 %v490
  %v1157 = vpop.f32.mrb[0].mxu0
  %v1158 = vadd.f32 %v159, %v1157
  %v1159 = vpop.f32.mrb[0].mxu0
  %1160 = vmatprep.mubr.f32.mxu0 0.0
  %1161 = vmatmul.mubr.f32.gmra.mrb[0].mxu0 %v493
  %v1162 = vpop.f32.mrb[0].mxu0
  %v1163 = vadd.f32 %v159, %v1162
  %v1164 = vpop.f32.mrb[0].mxu0
  %1165 = vmatprep.mubr.f32.mxu0 0.0
  %1166 = vmatmul.mubr.f32.gmra.mrb[0].mxu0 %v496
  %v1167 = vpop.f32.mrb[0].mxu0
  %v1168 = vadd.f32 %v159, %v1167
  %v1169 = vpop.f32.mrb[0].mxu0
  %1170 = vmatprep.mubr.f32.mxu0 0.0
  %1171 = vmatmul.mubr.f32.gmra.mrb[0].mxu0 %v499
  %v1172 = vpop.f32.mrb[0].mxu0
  %v1173 = vadd.f32 %v159, %v1172
  %v1174 = vpop.f32.mrb[0].mxu0
  %1175 = vmatprep.mubr.f32.mxu0 0.0
  %1176 = vmatmul.mubr.f32.gmra.mrb[0].mxu0 %v502
  %v1177 = vpop.f32.mrb[0].mxu0
  %v1178 = vadd.f32 %v159, %v1177
  %v1179 = vpop.f32.mrb[0].mxu0
  %1180 = vmatprep.mubr.f32.mxu0 0.0
  %1181 = vmatmul.mubr.f32.gmra.mrb[0].mxu0 %v505
  %v1182 = vpop.f32.mrb[0].mxu0
  %v1183 = vadd.f32 %v159, %v1182
  %v1184 = vpop.f32.mrb[0].mxu0
  %1185 = vmatprep.mubr.f32.mxu0 0.0
  %1186 = vmatmul.mubr.f32.gmra.mrb[0].mxu0 %v508
  %v1187 = vpop.f32.mrb[0].mxu0
  %v1188 = vadd.f32 %v159, %v1187
  %v1189 = vpop.f32.mrb[0].mxu0
  %1190 = vmatprep.mubr.f32.mxu0 0.0
  %1191 = vmatmul.mubr.f32.gmra.mrb[0].mxu0 %v511
  %v1192 = vpop.f32.mrb[0].mxu0
  %v1193 = vadd.f32 %v159, %v1192
  %v1194 = vpop.f32.mrb[0].mxu0
  %1195 = vmatprep.mubr.f32.mxu0 0.0
  %1196 = vmatmul.mubr.f32.gmra.mrb[0].mxu0 %v514
  %v1197 = vpop.f32.mrb[0].mxu0
  %v1198 = vadd.f32 %v159, %v1197
  %v1199 = vpop.f32.mrb[0].mxu0
  %1200 = vmatprep.mubr.f32.mxu0 0.0
  %1201 = vmatmul.mubr.f32.gmra.mrb[0].mxu0 %v517
  %v1202 = vpop.f32.mrb[0].mxu0
  %v1203 = vadd.f32 %v159, %v1202
  %v1204 = vpop.f32.mrb[0].mxu0
  %1205 = vmatprep.mubr.f32.mxu0 0.0
  %1206 = vmatmul.mubr.f32.gmra.mrb[0].mxu0 %v520
  %v1207 = vpop.f32.mrb[0].mxu0
  %v1208 = vadd.f32 %v159, %v1207
  %v1209 = vpop.f32.mrb[0].mxu0
  %1210 = vmatprep.mubr.f32.mxu0 0.0
  %1211 = vmatmul.mubr.f32.gmra.mrb[0].mxu0 %v523
  %v1212 = vpop.f32.mrb[0].mxu0
  %v1213 = vadd.f32 %v159, %v1212
  %v1214 = vpop.f32.mrb[0].mxu0
  %1215 = vmatprep.mubr.f32.mxu0 0.0
  %1216 = vmatmul.mubr.f32.gmra.mrb[0].mxu0 %v526
  %v1217 = vpop.f32.mrb[0].mxu0
  %v1218 = vadd.f32 %v159, %v1217
  %v1219 = vpop.f32.mrb[0].mxu0
  %1220 = vmatprep.mubr.f32.mxu0 0.0
  %1221 = vmatmul.mubr.f32.gmra.mrb[0].mxu0 %v529
  %v1222 = vpop.f32.mrb[0].mxu0
  %v1223 = vadd.f32 %v159, %v1222
  %v1224 = vpop.f32.mrb[0].mxu0
  %1225 = vmatprep.mubr.f32.mxu0 0.0
  %1226 = vmatmul.mubr.f32.gmra.mrb[0].mxu0 %v532
  %v1227 = vpop.f32.mrb[0].mxu0
  %v1228 = vadd.f32 %v159, %v1227
  %v1229 = vpop.f32.mrb[0].mxu0
  %1230 = vmatprep.mubr.f32.mxu0 0.0
  %1231 = vmatmul.mubr.f32.gmra.mrb[0].mxu0 %v535
  %v1232 = vpop.f32.mrb[0].mxu0
  %v1233 = vadd.f32 %v159, %v1232
  %v1234 = vpop.f32.mrb[0].mxu0
  %1235 = vmatprep.mubr.f32.mxu0 0.0
  %1236 = vmatmul.mubr.f32.gmra.mrb[0].mxu0 %v538
  %v1237 = vpop.f32.mrb[0].mxu0
  %v1238 = vadd.f32 %v159, %v1237
  %v1239 = vpop.f32.mrb[0].mxu0
  %1240 = vmatprep.mubr.f32.mxu0 0.0
  %1241 = vmatmul.mubr.f32.gmra.mrb[0].mxu0 %v541
  %v1242 = vpop.f32.mrb[0].mxu0
  %v1243 = vadd.f32 %v159, %v1242
  %v1244 = vpop.f32.mrb[0].mxu0
  %1245 = vmatprep.mubr.f32.mxu0 0.0
  %1246 = vmatmul.mubr.f32.gmra.mrb[0].mxu0 %v544
  %v1247 = vpop.f32.mrb[0].mxu0
  %v1248 = vadd.f32 %v159, %v1247
  %v1249 = vpop.f32.mrb[0].mxu0
  %1250 = vdwg.mxu0
  %1379 = vrot.lane.b32.xlu0 %v613, 64
  %v1380 = vpop.permute.xlu0 %1379
  %1381 = vrot.lane.b32.xlu0 %v618, 64
  %v1382 = vpop.permute.xlu0 %1381
  %1383 = vrot.lane.b32.xlu0 %v623, 64
  %v1384 = vpop.permute.xlu0 %1383
  %1385 = vrot.lane.b32.xlu0 %v628, 64
  %v1386 = vpop.permute.xlu0 %1385
  %1387 = vrot.lane.b32.xlu0 %v633, 64
  %v1388 = vpop.permute.xlu0 %1387
  %1389 = vrot.lane.b32.xlu0 %v638, 64
  %v1390 = vpop.permute.xlu0 %1389
  %1391 = vrot.lane.b32.xlu0 %v643, 64
  %v1392 = vpop.permute.xlu0 %1391
  %1393 = vrot.lane.b32.xlu0 %v648, 64
  %v1394 = vpop.permute.xlu0 %1393
  %1395 = vrot.lane.b32.xlu0 %v653, 64
  %v1396 = vpop.permute.xlu0 %1395
  %1397 = vrot.lane.b32.xlu0 %v658, 64
  %v1398 = vpop.permute.xlu0 %1397
  %1399 = vrot.lane.b32.xlu0 %v663, 64
  %v1400 = vpop.permute.xlu0 %1399
  %1401 = vrot.lane.b32.xlu0 %v668, 64
  %v1402 = vpop.permute.xlu0 %1401
  %1403 = vrot.lane.b32.xlu0 %v673, 64
  %v1404 = vpop.permute.xlu0 %1403
  %1405 = vrot.lane.b32.xlu0 %v678, 64
  %v1406 = vpop.permute.xlu0 %1405
  %1407 = vrot.lane.b32.xlu0 %v683, 64
  %v1408 = vpop.permute.xlu0 %1407
  %1409 = vrot.lane.b32.xlu0 %v688, 64
  %v1410 = vpop.permute.xlu0 %1409
  %1411 = vrot.lane.b32.xlu0 %v693, 64
  %v1412 = vpop.permute.xlu0 %1411
  %1413 = vrot.lane.b32.xlu0 %v698, 64
  %v1414 = vpop.permute.xlu0 %1413
  %1415 = vrot.lane.b32.xlu0 %v703, 64
  %v1416 = vpop.permute.xlu0 %1415
  %1417 = vrot.lane.b32.xlu0 %v708, 64
  %v1418 = vpop.permute.xlu0 %1417
  %1419 = vrot.lane.b32.xlu0 %v713, 64
  %v1420 = vpop.permute.xlu0 %1419
  %1421 = vrot.lane.b32.xlu0 %v718, 64
  %v1422 = vpop.permute.xlu0 %1421
  %1423 = vrot.lane.b32.xlu0 %v723, 64
  %v1424 = vpop.permute.xlu0 %1423
  %1425 = vrot.lane.b32.xlu0 %v728, 64
  %v1426 = vpop.permute.xlu0 %1425
  %1427 = vrot.lane.b32.xlu0 %v733, 64
  %v1428 = vpop.permute.xlu0 %1427
  %1429 = vrot.lane.b32.xlu0 %v738, 64
  %v1430 = vpop.permute.xlu0 %1429
  %1431 = vrot.lane.b32.xlu0 %v743, 64
  %v1432 = vpop.permute.xlu0 %1431
  %1433 = vrot.lane.b32.xlu0 %v748, 64
  %v1434 = vpop.permute.xlu0 %1433
  %1435 = vrot.lane.b32.xlu0 %v753, 64
  %v1436 = vpop.permute.xlu0 %1435
  %1437 = vrot.lane.b32.xlu0 %v758, 64
  %v1438 = vpop.permute.xlu0 %1437
  %1439 = vrot.lane.b32.xlu0 %v763, 64
  %v1440 = vpop.permute.xlu0 %1439
  %1441 = vrot.lane.b32.xlu0 %v768, 64
  %v1442 = vpop.permute.xlu0 %1441
  %1443 = vrot.lane.b32.xlu0 %v773, 64
  %v1444 = vpop.permute.xlu0 %1443
  %1445 = vrot.lane.b32.xlu0 %v778, 64
  %v1446 = vpop.permute.xlu0 %1445
  %1447 = vrot.lane.b32.xlu0 %v783, 64
  %v1448 = vpop.permute.xlu0 %1447
  %1449 = vrot.lane.b32.xlu0 %v788, 64
  %v1450 = vpop.permute.xlu0 %1449
  %1451 = vrot.lane.b32.xlu0 %v793, 64
  %v1452 = vpop.permute.xlu0 %1451
  %1453 = vrot.lane.b32.xlu0 %v798, 64
  %v1454 = vpop.permute.xlu0 %1453
  %1455 = vrot.lane.b32.xlu0 %v803, 64
  %v1456 = vpop.permute.xlu0 %1455
  %1457 = vrot.lane.b32.xlu0 %v808, 64
  %v1458 = vpop.permute.xlu0 %1457
  %1459 = vrot.lane.b32.xlu0 %v813, 64
  %v1460 = vpop.permute.xlu0 %1459
  %1461 = vrot.lane.b32.xlu0 %v818, 64
  %v1462 = vpop.permute.xlu0 %1461
  %1463 = vrot.lane.b32.xlu0 %v823, 64
  %v1464 = vpop.permute.xlu0 %1463
  %1465 = vrot.lane.b32.xlu0 %v828, 64
  %v1466 = vpop.permute.xlu0 %1465
  %1467 = vrot.lane.b32.xlu0 %v833, 64
  %v1468 = vpop.permute.xlu0 %1467
  %1469 = vrot.lane.b32.xlu0 %v838, 64
  %v1470 = vpop.permute.xlu0 %1469
  %1471 = vrot.lane.b32.xlu0 %v843, 64
  %v1472 = vpop.permute.xlu0 %1471
  %1473 = vrot.lane.b32.xlu0 %v848, 64
  %v1474 = vpop.permute.xlu0 %1473
  %1475 = vrot.lane.b32.xlu0 %v853, 64
  %v1476 = vpop.permute.xlu0 %1475
  %1477 = vrot.lane.b32.xlu0 %v858, 64
  %v1478 = vpop.permute.xlu0 %1477
  %1479 = vrot.lane.b32.xlu0 %v863, 64
  %v1480 = vpop.permute.xlu0 %1479
  %1481 = vrot.lane.b32.xlu0 %v868, 64
  %v1482 = vpop.permute.xlu0 %1481
  %1483 = vrot.lane.b32.xlu0 %v873, 64
  %v1484 = vpop.permute.xlu0 %1483
  %1485 = vrot.lane.b32.xlu0 %v878, 64
  %v1486 = vpop.permute.xlu0 %1485
  %1487 = vrot.lane.b32.xlu0 %v883, 64
  %v1488 = vpop.permute.xlu0 %1487
  %1489 = vrot.lane.b32.xlu0 %v888, 64
  %v1490 = vpop.permute.xlu0 %1489
  %1491 = vrot.lane.b32.xlu0 %v893, 64
  %v1492 = vpop.permute.xlu0 %1491
  %1493 = vrot.lane.b32.xlu0 %v898, 64
  %v1494 = vpop.permute.xlu0 %1493
  %1495 = vrot.lane.b32.xlu0 %v903, 64
  %v1496 = vpop.permute.xlu0 %1495
  %1497 = vrot.lane.b32.xlu0 %v908, 64
  %v1498 = vpop.permute.xlu0 %1497
  %1499 = vrot.lane.b32.xlu0 %v913, 64
  %v1500 = vpop.permute.xlu0 %1499
  %1501 = vrot.lane.b32.xlu0 %v918, 64
  %v1502 = vpop.permute.xlu0 %1501
  %1503 = vrot.lane.b32.xlu0 %v923, 64
  %v1504 = vpop.permute.xlu0 %1503
  %1505 = vrot.lane.b32.xlu0 %v928, 64
  %v1506 = vpop.permute.xlu0 %1505
  %1507 = vrot.lane.b32.xlu0 %v933, 64
  %v1508 = vpop.permute.xlu0 %1507
  %1509 = vrot.lane.b32.xlu0 %v938, 64
  %v1510 = vpop.permute.xlu0 %1509
  %1511 = vrot.lane.b32.xlu0 %v943, 64
  %v1512 = vpop.permute.xlu0 %1511
  %1513 = vrot.lane.b32.xlu0 %v948, 64
  %v1514 = vpop.permute.xlu0 %1513
  %1515 = vrot.lane.b32.xlu0 %v953, 64
  %v1516 = vpop.permute.xlu0 %1515
  %1517 = vrot.lane.b32.xlu0 %v958, 64
  %v1518 = vpop.permute.xlu0 %1517
  %1519 = vrot.lane.b32.xlu0 %v963, 64
  %v1520 = vpop.permute.xlu0 %1519
  %1521 = vrot.lane.b32.xlu0 %v968, 64
  %v1522 = vpop.permute.xlu0 %1521
  %1523 = vrot.lane.b32.xlu0 %v973, 64
  %v1524 = vpop.permute.xlu0 %1523
  %1525 = vrot.lane.b32.xlu0 %v978, 64
  %v1526 = vpop.permute.xlu0 %1525
  %1527 = vrot.lane.b32.xlu0 %v983, 64
  %v1528 = vpop.permute.xlu0 %1527
  %1529 = vrot.lane.b32.xlu0 %v988, 64
  %v1530 = vpop.permute.xlu0 %1529
  %1531 = vrot.lane.b32.xlu0 %v993, 64
  %v1532 = vpop.permute.xlu0 %1531
  %1533 = vrot.lane.b32.xlu0 %v998, 64
  %v1534 = vpop.permute.xlu0 %1533
  %1535 = vrot.lane.b32.xlu0 %v1003, 64
  %v1536 = vpop.permute.xlu0 %1535
  %1537 = vrot.lane.b32.xlu0 %v1008, 64
  %v1538 = vpop.permute.xlu0 %1537
  %1539 = vrot.lane.b32.xlu0 %v1013, 64
  %v1540 = vpop.permute.xlu0 %1539
  %1541 = vrot.lane.b32.xlu0 %v1018, 64
  %v1542 = vpop.permute.xlu0 %1541
  %1543 = vrot.lane.b32.xlu0 %v1023, 64
  %v1544 = vpop.permute.xlu0 %1543
  %1545 = vrot.lane.b32.xlu0 %v1028, 64
  %v1546 = vpop.permute.xlu0 %1545
  %1547 = vrot.lane.b32.xlu0 %v1033, 64
  %v1548 = vpop.permute.xlu0 %1547
  %1549 = vrot.lane.b32.xlu0 %v1038, 64
  %v1550 = vpop.permute.xlu0 %1549
  %1551 = vrot.lane.b32.xlu0 %v1043, 64
  %v1552 = vpop.permute.xlu0 %1551
  %1553 = vrot.lane.b32.xlu0 %v1048, 64
  %v1554 = vpop.permute.xlu0 %1553
  %1555 = vrot.lane.b32.xlu0 %v1053, 64
  %v1556 = vpop.permute.xlu0 %1555
  %1557 = vrot.lane.b32.xlu0 %v1058, 64
  %v1558 = vpop.permute.xlu0 %1557
  %1559 = vrot.lane.b32.xlu0 %v1063, 64
  %v1560 = vpop.permute.xlu0 %1559
  %1561 = vrot.lane.b32.xlu0 %v1068, 64
  %v1562 = vpop.permute.xlu0 %1561
  %1563 = vrot.lane.b32.xlu0 %v1073, 64
  %v1564 = vpop.permute.xlu0 %1563
  %1565 = vrot.lane.b32.xlu0 %v1078, 64
  %v1566 = vpop.permute.xlu0 %1565
  %1567 = vrot.lane.b32.xlu0 %v1083, 64
  %v1568 = vpop.permute.xlu0 %1567
  %1569 = vrot.lane.b32.xlu0 %v1088, 64
  %v1570 = vpop.permute.xlu0 %1569
  %1571 = vrot.lane.b32.xlu0 %v1093, 64
  %v1572 = vpop.permute.xlu0 %1571
  %1573 = vrot.lane.b32.xlu0 %v1098, 64
  %v1574 = vpop.permute.xlu0 %1573
  %1575 = vrot.lane.b32.xlu0 %v1103, 64
  %v1576 = vpop.permute.xlu0 %1575
  %1577 = vrot.lane.b32.xlu0 %v1108, 64
  %v1578 = vpop.permute.xlu0 %1577
  %1579 = vrot.lane.b32.xlu0 %v1113, 64
  %v1580 = vpop.permute.xlu0 %1579
  %1581 = vrot.lane.b32.xlu0 %v1118, 64
  %v1582 = vpop.permute.xlu0 %1581
  %1583 = vrot.lane.b32.xlu0 %v1123, 64
  %v1584 = vpop.permute.xlu0 %1583
  %1585 = vrot.lane.b32.xlu0 %v1128, 64
  %v1586 = vpop.permute.xlu0 %1585
  %1587 = vrot.lane.b32.xlu0 %v1133, 64
  %v1588 = vpop.permute.xlu0 %1587
  %1589 = vrot.lane.b32.xlu0 %v1138, 64
  %v1590 = vpop.permute.xlu0 %1589
  %1591 = vrot.lane.b32.xlu0 %v1143, 64
  %v1592 = vpop.permute.xlu0 %1591
  %1593 = vrot.lane.b32.xlu0 %v1148, 64
  %v1594 = vpop.permute.xlu0 %1593
  %1595 = vrot.lane.b32.xlu0 %v1153, 64
  %v1596 = vpop.permute.xlu0 %1595
  %1597 = vrot.lane.b32.xlu0 %v1158, 64
  %v1598 = vpop.permute.xlu0 %1597
  %1599 = vrot.lane.b32.xlu0 %v1163, 64
  %v1600 = vpop.permute.xlu0 %1599
  %1601 = vrot.lane.b32.xlu0 %v1168, 64
  %v1602 = vpop.permute.xlu0 %1601
  %1603 = vrot.lane.b32.xlu0 %v1173, 64
  %v1604 = vpop.permute.xlu0 %1603
  %1605 = vrot.lane.b32.xlu0 %v1178, 64
  %v1606 = vpop.permute.xlu0 %1605
  %1607 = vrot.lane.b32.xlu0 %v1183, 64
  %v1608 = vpop.permute.xlu0 %1607
  %1609 = vrot.lane.b32.xlu0 %v1188, 64
  %v1610 = vpop.permute.xlu0 %1609
  %1611 = vrot.lane.b32.xlu0 %v1193, 64
  %v1612 = vpop.permute.xlu0 %1611
  %1613 = vrot.lane.b32.xlu0 %v1198, 64
  %v1614 = vpop.permute.xlu0 %1613
  %1615 = vrot.lane.b32.xlu0 %v1203, 64
  %v1616 = vpop.permute.xlu0 %1615
  %1617 = vrot.lane.b32.xlu0 %v1208, 64
  %v1618 = vpop.permute.xlu0 %1617
  %1619 = vrot.lane.b32.xlu0 %v1213, 64
  %v1620 = vpop.permute.xlu0 %1619
  %1621 = vrot.lane.b32.xlu0 %v1218, 64
  %v1622 = vpop.permute.xlu0 %1621
  %1623 = vrot.lane.b32.xlu0 %v1223, 64
  %v1624 = vpop.permute.xlu0 %1623
  %1625 = vrot.lane.b32.xlu0 %v1228, 64
  %v1626 = vpop.permute.xlu0 %1625
  %1627 = vrot.lane.b32.xlu0 %v1233, 64
  %v1628 = vpop.permute.xlu0 %1627
  %1629 = vrot.lane.b32.xlu0 %v1238, 64
  %v1630 = vpop.permute.xlu0 %1629
  %1631 = vrot.lane.b32.xlu0 %v1243, 64
  %v1632 = vpop.permute.xlu0 %1631
  %1633 = vrot.lane.b32.xlu0 %v1248, 64
  %v1634 = vpop.permute.xlu0 %1633
  %v1763 = vmax.f32 %v613, %v1380
  %v1764 = vmax.f32 %v618, %v1382
  %v1765 = vmax.f32 %v623, %v1384
  %v1766 = vmax.f32 %v628, %v1386
  %v1767 = vmax.f32 %v633, %v1388
  %v1768 = vmax.f32 %v638, %v1390
  %v1769 = vmax.f32 %v643, %v1392
  %v1770 = vmax.f32 %v648, %v1394
  %v1771 = vmax.f32 %v653, %v1396
  %v1772 = vmax.f32 %v658, %v1398
  %v1773 = vmax.f32 %v663, %v1400
  %v1774 = vmax.f32 %v668, %v1402
  %v1775 = vmax.f32 %v673, %v1404
  %v1776 = vmax.f32 %v678, %v1406
  %v1777 = vmax.f32 %v683, %v1408
  %v1778 = vmax.f32 %v688, %v1410
  %v1779 = vmax.f32 %v693, %v1412
  %v1780 = vmax.f32 %v698, %v1414
  %v1781 = vmax.f32 %v703, %v1416
  %v1782 = vmax.f32 %v708, %v1418
  %v1783 = vmax.f32 %v713, %v1420
  %v1784 = vmax.f32 %v718, %v1422
  %v1785 = vmax.f32 %v723, %v1424
  %v1786 = vmax.f32 %v728, %v1426
  %v1787 = vmax.f32 %v733, %v1428
  %v1788 = vmax.f32 %v738, %v1430
  %v1789 = vmax.f32 %v743, %v1432
  %v1790 = vmax.f32 %v748, %v1434
  %v1791 = vmax.f32 %v753, %v1436
  %v1792 = vmax.f32 %v758, %v1438
  %v1793 = vmax.f32 %v763, %v1440
  %v1794 = vmax.f32 %v768, %v1442
  %v1795 = vmax.f32 %v773, %v1444
  %v1796 = vmax.f32 %v778, %v1446
  %v1797 = vmax.f32 %v783, %v1448
  %v1798 = vmax.f32 %v788, %v1450
  %v1799 = vmax.f32 %v793, %v1452
  %v1800 = vmax.f32 %v798, %v1454
  %v1801 = vmax.f32 %v803, %v1456
  %v1802 = vmax.f32 %v808, %v1458
  %v1803 = vmax.f32 %v813, %v1460
  %v1804 = vmax.f32 %v818, %v1462
  %v1805 = vmax.f32 %v823, %v1464
  %v1806 = vmax.f32 %v828, %v1466
  %v1807 = vmax.f32 %v833, %v1468
  %v1808 = vmax.f32 %v838, %v1470
  %v1809 = vmax.f32 %v843, %v1472
  %v1810 = vmax.f32 %v848, %v1474
  %v1811 = vmax.f32 %v853, %v1476
  %v1812 = vmax.f32 %v858, %v1478
  %v1813 = vmax.f32 %v863, %v1480
  %v1814 = vmax.f32 %v868, %v1482
  %v1815 = vmax.f32 %v873, %v1484
  %v1816 = vmax.f32 %v878, %v1486
  %v1817 = vmax.f32 %v883, %v1488
  %v1818 = vmax.f32 %v888, %v1490
  %v1819 = vmax.f32 %v893, %v1492
  %v1820 = vmax.f32 %v898, %v1494
  %v1821 = vmax.f32 %v903, %v1496
  %v1822 = vmax.f32 %v908, %v1498
  %v1823 = vmax.f32 %v913, %v1500
  %v1824 = vmax.f32 %v918, %v1502
  %v1825 = vmax.f32 %v923, %v1504
  %v1826 = vmax.f32 %v928, %v1506
  %v1827 = vmax.f32 %v933, %v1508
  %v1828 = vmax.f32 %v938, %v1510
  %v1829 = vmax.f32 %v943, %v1512
  %v1830 = vmax.f32 %v948, %v1514
  %v1831 = vmax.f32 %v953, %v1516
  %v1832 = vmax.f32 %v958, %v1518
  %v1833 = vmax.f32 %v963, %v1520
  %v1834 = vmax.f32 %v968, %v1522
  %v1835 = vmax.f32 %v973, %v1524
  %v1836 = vmax.f32 %v978, %v1526
  %v1837 = vmax.f32 %v983, %v1528
  %v1838 = vmax.f32 %v988, %v1530
  %v1839 = vmax.f32 %v993, %v1532
  %v1840 = vmax.f32 %v998, %v1534
  %v1841 = vmax.f32 %v1003, %v1536
  %v1842 = vmax.f32 %v1008, %v1538
  %v1843 = vmax.f32 %v1013, %v1540
  %v1844 = vmax.f32 %v1018, %v1542
  %v1845 = vmax.f32 %v1023, %v1544
  %v1846 = vmax.f32 %v1028, %v1546
  %v1847 = vmax.f32 %v1033, %v1548
  %v1848 = vmax.f32 %v1038, %v1550
  %v1849 = vmax.f32 %v1043, %v1552
  %v1850 = vmax.f32 %v1048, %v1554
  %v1851 = vmax.f32 %v1053, %v1556
  %v1852 = vmax.f32 %v1058, %v1558
  %v1853 = vmax.f32 %v1063, %v1560
  %v1854 = vmax.f32 %v1068, %v1562
  %v1855 = vmax.f32 %v1073, %v1564
  %v1856 = vmax.f32 %v1078, %v1566
  %v1857 = vmax.f32 %v1083, %v1568
  %v1858 = vmax.f32 %v1088, %v1570
  %v1859 = vmax.f32 %v1093, %v1572
  %v1860 = vmax.f32 %v1098, %v1574
  %v1861 = vmax.f32 %v1103, %v1576
  %v1862 = vmax.f32 %v1108, %v1578
  %v1863 = vmax.f32 %v1113, %v1580
  %v1864 = vmax.f32 %v1118, %v1582
  %v1865 = vmax.f32 %v1123, %v1584
  %v1866 = vmax.f32 %v1128, %v1586
  %v1867 = vmax.f32 %v1133, %v1588
  %v1868 = vmax.f32 %v1138, %v1590
  %v1869 = vmax.f32 %v1143, %v1592
  %v1870 = vmax.f32 %v1148, %v1594
  %v1871 = vmax.f32 %v1153, %v1596
  %v1872 = vmax.f32 %v1158, %v1598
  %v1873 = vmax.f32 %v1163, %v1600
  %v1874 = vmax.f32 %v1168, %v1602
  %v1875 = vmax.f32 %v1173, %v1604
  %v1876 = vmax.f32 %v1178, %v1606
  %v1877 = vmax.f32 %v1183, %v1608
  %v1878 = vmax.f32 %v1188, %v1610
  %v1879 = vmax.f32 %v1193, %v1612
  %v1880 = vmax.f32 %v1198, %v1614
  %v1881 = vmax.f32 %v1203, %v1616
  %v1882 = vmax.f32 %v1208, %v1618
  %v1883 = vmax.f32 %v1213, %v1620
  %v1884 = vmax.f32 %v1218, %v1622
  %v1885 = vmax.f32 %v1223, %v1624
  %v1886 = vmax.f32 %v1228, %v1626
  %v1887 = vmax.f32 %v1233, %v1628
  %v1888 = vmax.f32 %v1238, %v1630
  %v1889 = vmax.f32 %v1243, %v1632
  %v1890 = vmax.f32 %v1248, %v1634
  %v1891 = vmax.f32 %v1763, 0.0
  %v1892 = vmax.f32 %v1764, 0.0
  %v1893 = vmax.f32 %v1765, 0.0
  %v1894 = vmax.f32 %v1766, 0.0
  %v1895 = vmax.f32 %v1767, 0.0
  %v1896 = vmax.f32 %v1768, 0.0
  %v1897 = vmax.f32 %v1769, 0.0
  %v1898 = vmax.f32 %v1770, 0.0
  %v1899 = vmax.f32 %v1771, 0.0
  %v1900 = vmax.f32 %v1772, 0.0
  %v1901 = vmax.f32 %v1773, 0.0
  %v1902 = vmax.f32 %v1774, 0.0
  %v1903 = vmax.f32 %v1775, 0.0
  %v1904 = vmax.f32 %v1776, 0.0
  %v1905 = vmax.f32 %v1777, 0.0
  %v1906 = vmax.f32 %v1778, 0.0
  %v1907 = vmax.f32 %v1779, 0.0
  %v1908 = vmax.f32 %v1780, 0.0
  %v1909 = vmax.f32 %v1781, 0.0
  %v1910 = vmax.f32 %v1782, 0.0
  %v1911 = vmax.f32 %v1783, 0.0
  %v1912 = vmax.f32 %v1784, 0.0
  %v1913 = vmax.f32 %v1785, 0.0
  %v1914 = vmax.f32 %v1786, 0.0
  %v1915 = vmax.f32 %v1787, 0.0
  %v1916 = vmax.f32 %v1788, 0.0
  %v1917 = vmax.f32 %v1789, 0.0
  %v1918 = vmax.f32 %v1790, 0.0
  %v1919 = vmax.f32 %v1791, 0.0
  %v1920 = vmax.f32 %v1792, 0.0
  %v1921 = vmax.f32 %v1793, 0.0
  %v1922 = vmax.f32 %v1794, 0.0
  %v1923 = vmax.f32 %v1795, 0.0
  %v1924 = vmax.f32 %v1796, 0.0
  %v1925 = vmax.f32 %v1797, 0.0
  %v1926 = vmax.f32 %v1798, 0.0
  %v1927 = vmax.f32 %v1799, 0.0
  %v1928 = vmax.f32 %v1800, 0.0
  %v1929 = vmax.f32 %v1801, 0.0
  %v1930 = vmax.f32 %v1802, 0.0
  %v1931 = vmax.f32 %v1803, 0.0
  %v1932 = vmax.f32 %v1804, 0.0
  %v1933 = vmax.f32 %v1805, 0.0
  %v1934 = vmax.f32 %v1806, 0.0
  %v1935 = vmax.f32 %v1807, 0.0
  %v1936 = vmax.f32 %v1808, 0.0
  %v1937 = vmax.f32 %v1809, 0.0
  %v1938 = vmax.f32 %v1810, 0.0
  %v1939 = vmax.f32 %v1811, 0.0
  %v1940 = vmax.f32 %v1812, 0.0
  %v1941 = vmax.f32 %v1813, 0.0
  %v1942 = vmax.f32 %v1814, 0.0
  %v1943 = vmax.f32 %v1815, 0.0
  %v1944 = vmax.f32 %v1816, 0.0
  %v1945 = vmax.f32 %v1817, 0.0
  %v1946 = vmax.f32 %v1818, 0.0
  %v1947 = vmax.f32 %v1819, 0.0
  %v1948 = vmax.f32 %v1820, 0.0
  %v1949 = vmax.f32 %v1821, 0.0
  %v1950 = vmax.f32 %v1822, 0.0
  %v1951 = vmax.f32 %v1823, 0.0
  %v1952 = vmax.f32 %v1824, 0.0
  %v1953 = vmax.f32 %v1825, 0.0
  %v1954 = vmax.f32 %v1826, 0.0
  %v1955 = vmax.f32 %v1827, 0.0
  %v1956 = vmax.f32 %v1828, 0.0
  %v1957 = vmax.f32 %v1829, 0.0
  %v1958 = vmax.f32 %v1830, 0.0
  %v1959 = vmax.f32 %v1831, 0.0
  %v1960 = vmax.f32 %v1832, 0.0
  %v1961 = vmax.f32 %v1833, 0.0
  %v1962 = vmax.f32 %v1834, 0.0
  %v1963 = vmax.f32 %v1835, 0.0
  %v1964 = vmax.f32 %v1836, 0.0
  %v1965 = vmax.f32 %v1837, 0.0
  %v1966 = vmax.f32 %v1838, 0.0
  %v1967 = vmax.f32 %v1839, 0.0
  %v1968 = vmax.f32 %v1840, 0.0
  %v1969 = vmax.f32 %v1841, 0.0
  %v1970 = vmax.f32 %v1842, 0.0
  %v1971 = vmax.f32 %v1843, 0.0
  %v1972 = vmax.f32 %v1844, 0.0
  %v1973 = vmax.f32 %v1845, 0.0
  %v1974 = vmax.f32 %v1846, 0.0
  %v1975 = vmax.f32 %v1847, 0.0
  %v1976 = vmax.f32 %v1848, 0.0
  %v1977 = vmax.f32 %v1849, 0.0
  %v1978 = vmax.f32 %v1850, 0.0
  %v1979 = vmax.f32 %v1851, 0.0
  %v1980 = vmax.f32 %v1852, 0.0
  %v1981 = vmax.f32 %v1853, 0.0
  %v1982 = vmax.f32 %v1854, 0.0
  %v1983 = vmax.f32 %v1855, 0.0
  %v1984 = vmax.f32 %v1856, 0.0
  %v1985 = vmax.f32 %v1857, 0.0
  %v1986 = vmax.f32 %v1858, 0.0
  %v1987 = vmax.f32 %v1859, 0.0
  %v1988 = vmax.f32 %v1860, 0.0
  %v1989 = vmax.f32 %v1861, 0.0
  %v1990 = vmax.f32 %v1862, 0.0
  %v1991 = vmax.f32 %v1863, 0.0
  %v1992 = vmax.f32 %v1864, 0.0
  %v1993 = vmax.f32 %v1865, 0.0
  %v1994 = vmax.f32 %v1866, 0.0
  %v1995 = vmax.f32 %v1867, 0.0
  %v1996 = vmax.f32 %v1868, 0.0
  %v1997 = vmax.f32 %v1869, 0.0
  %v1998 = vmax.f32 %v1870, 0.0
  %v1999 = vmax.f32 %v1871, 0.0
  %v2000 = vmax.f32 %v1872, 0.0
  %v2001 = vmax.f32 %v1873, 0.0
  %v2002 = vmax.f32 %v1874, 0.0
  %v2003 = vmax.f32 %v1875, 0.0
  %v2004 = vmax.f32 %v1876, 0.0
  %v2005 = vmax.f32 %v1877, 0.0
  %v2006 = vmax.f32 %v1878, 0.0
  %v2007 = vmax.f32 %v1879, 0.0
  %v2008 = vmax.f32 %v1880, 0.0
  %v2009 = vmax.f32 %v1881, 0.0
  %v2010 = vmax.f32 %v1882, 0.0
  %v2011 = vmax.f32 %v1883, 0.0
  %v2012 = vmax.f32 %v1884, 0.0
  %v2013 = vmax.f32 %v1885, 0.0
  %v2014 = vmax.f32 %v1886, 0.0
  %v2015 = vmax.f32 %v1887, 0.0
  %v2016 = vmax.f32 %v1888, 0.0
  %v2017 = vmax.f32 %v1889, 0.0
  %v2018 = vmax.f32 %v1890, 0.0
  %vm2019 = vcmask 523264
  %2020 = vst.msk [vmem:[#allocation2] sm:$0xff] %vm2019, %v1891
  %2021 = vst.msk [vmem:[#allocation2 + $0x8] sm:$0xff] %vm2019, %v1892
  %2022 = vst.msk [vmem:[#allocation2 + $0x10] sm:$0xff] %vm2019, %v1893
  %2023 = vst.msk [vmem:[#allocation2 + $0x18] sm:$0xff] %vm2019, %v1894
  %2024 = vst.msk [vmem:[#allocation2 + $0x20] sm:$0xff] %vm2019, %v1895
  %2025 = vst.msk [vmem:[#allocation2 + $0x28] sm:$0xff] %vm2019, %v1896
  %2026 = vst.msk [vmem:[#allocation2 + $0x30] sm:$0xff] %vm2019, %v1897
  %2027 = vst.msk [vmem:[#allocation2 + $0x38] sm:$0xff] %vm2019, %v1898
  %2028 = vst.msk [vmem:[#allocation2 + $0x40] sm:$0xff] %vm2019, %v1899
  %2029 = vst.msk [vmem:[#allocation2 + $0x48] sm:$0xff] %vm2019, %v1900
  %2030 = vst.msk [vmem:[#allocation2 + $0x50] sm:$0xff] %vm2019, %v1901
  %2031 = vst.msk [vmem:[#allocation2 + $0x58] sm:$0xff] %vm2019, %v1902
  %2032 = vst.msk [vmem:[#allocation2 + $0x60] sm:$0xff] %vm2019, %v1903
  %2033 = vst.msk [vmem:[#allocation2 + $0x68] sm:$0xff] %vm2019, %v1904
  %2034 = vst.msk [vmem:[#allocation2 + $0x70] sm:$0xff] %vm2019, %v1905
  %2035 = vst.msk [vmem:[#allocation2 + $0x78] sm:$0xff] %vm2019, %v1906
  %2036 = vst.msk [vmem:[#allocation2 + $0x80] sm:$0xff] %vm2019, %v1907
  %2037 = vst.msk [vmem:[#allocation2 + $0x88] sm:$0xff] %vm2019, %v1908
  %2038 = vst.msk [vmem:[#allocation2 + $0x90] sm:$0xff] %vm2019, %v1909
  %2039 = vst.msk [vmem:[#allocation2 + $0x98] sm:$0xff] %vm2019, %v1910
  %2040 = vst.msk [vmem:[#allocation2 + $0xa0] sm:$0xff] %vm2019, %v1911
  %2041 = vst.msk [vmem:[#allocation2 + $0xa8] sm:$0xff] %vm2019, %v1912
  %2042 = vst.msk [vmem:[#allocation2 + $0xb0] sm:$0xff] %vm2019, %v1913
  %2043 = vst.msk [vmem:[#allocation2 + $0xb8] sm:$0xff] %vm2019, %v1914
  %2044 = vst.msk [vmem:[#allocation2 + $0xc0] sm:$0xff] %vm2019, %v1915
  %2045 = vst.msk [vmem:[#allocation2 + $0xc8] sm:$0xff] %vm2019, %v1916
  %2046 = vst.msk [vmem:[#allocation2 + $0xd0] sm:$0xff] %vm2019, %v1917
  %2047 = vst.msk [vmem:[#allocation2 + $0xd8] sm:$0xff] %vm2019, %v1918
  %2048 = vst.msk [vmem:[#allocation2 + $0xe0] sm:$0xff] %vm2019, %v1919
  %2049 = vst.msk [vmem:[#allocation2 + $0xe8] sm:$0xff] %vm2019, %v1920
  %2050 = vst.msk [vmem:[#allocation2 + $0xf0] sm:$0xff] %vm2019, %v1921
  %2051 = vst.msk [vmem:[#allocation2 + $0xf8] sm:$0xff] %vm2019, %v1922
  %2052 = vst.msk [vmem:[#allocation2 + $0x100] sm:$0xff] %vm2019, %v1923
  %2053 = vst.msk [vmem:[#allocation2 + $0x108] sm:$0xff] %vm2019, %v1924
  %2054 = vst.msk [vmem:[#allocation2 + $0x110] sm:$0xff] %vm2019, %v1925
  %2055 = vst.msk [vmem:[#allocation2 + $0x118] sm:$0xff] %vm2019, %v1926
  %2056 = vst.msk [vmem:[#allocation2 + $0x120] sm:$0xff] %vm2019, %v1927
  %2057 = vst.msk [vmem:[#allocation2 + $0x128] sm:$0xff] %vm2019, %v1928
  %2058 = vst.msk [vmem:[#allocation2 + $0x130] sm:$0xff] %vm2019, %v1929
  %2059 = vst.msk [vmem:[#allocation2 + $0x138] sm:$0xff] %vm2019, %v1930
  %2060 = vst.msk [vmem:[#allocation2 + $0x140] sm:$0xff] %vm2019, %v1931
  %2061 = vst.msk [vmem:[#allocation2 + $0x148] sm:$0xff] %vm2019, %v1932
  %2062 = vst.msk [vmem:[#allocation2 + $0x150] sm:$0xff] %vm2019, %v1933
  %2063 = vst.msk [vmem:[#allocation2 + $0x158] sm:$0xff] %vm2019, %v1934
  %2064 = vst.msk [vmem:[#allocation2 + $0x160] sm:$0xff] %vm2019, %v1935
  %2065 = vst.msk [vmem:[#allocation2 + $0x168] sm:$0xff] %vm2019, %v1936
  %2066 = vst.msk [vmem:[#allocation2 + $0x170] sm:$0xff] %vm2019, %v1937
  %2067 = vst.msk [vmem:[#allocation2 + $0x178] sm:$0xff] %vm2019, %v1938
  %2068 = vst.msk [vmem:[#allocation2 + $0x180] sm:$0xff] %vm2019, %v1939
  %2069 = vst.msk [vmem:[#allocation2 + $0x188] sm:$0xff] %vm2019, %v1940
  %2070 = vst.msk [vmem:[#allocation2 + $0x190] sm:$0xff] %vm2019, %v1941
  %2071 = vst.msk [vmem:[#allocation2 + $0x198] sm:$0xff] %vm2019, %v1942
  %2072 = vst.msk [vmem:[#allocation2 + $0x1a0] sm:$0xff] %vm2019, %v1943
  %2073 = vst.msk [vmem:[#allocation2 + $0x1a8] sm:$0xff] %vm2019, %v1944
  %2074 = vst.msk [vmem:[#allocation2 + $0x1b0] sm:$0xff] %vm2019, %v1945
  %2075 = vst.msk [vmem:[#allocation2 + $0x1b8] sm:$0xff] %vm2019, %v1946
  %2076 = vst.msk [vmem:[#allocation2 + $0x1c0] sm:$0xff] %vm2019, %v1947
  %2077 = vst.msk [vmem:[#allocation2 + $0x1c8] sm:$0xff] %vm2019, %v1948
  %2078 = vst.msk [vmem:[#allocation2 + $0x1d0] sm:$0xff] %vm2019, %v1949
  %2079 = vst.msk [vmem:[#allocation2 + $0x1d8] sm:$0xff] %vm2019, %v1950
  %2080 = vst.msk [vmem:[#allocation2 + $0x1e0] sm:$0xff] %vm2019, %v1951
  %2081 = vst.msk [vmem:[#allocation2 + $0x1e8] sm:$0xff] %vm2019, %v1952
  %2082 = vst.msk [vmem:[#allocation2 + $0x1f0] sm:$0xff] %vm2019, %v1953
  %2083 = vst.msk [vmem:[#allocation2 + $0x1f8] sm:$0xff] %vm2019, %v1954
  %2084 = vst.msk [vmem:[#allocation2 + $0x200] sm:$0xff] %vm2019, %v1955
  %2085 = vst.msk [vmem:[#allocation2 + $0x208] sm:$0xff] %vm2019, %v1956
  %2086 = vst.msk [vmem:[#allocation2 + $0x210] sm:$0xff] %vm2019, %v1957
  %2087 = vst.msk [vmem:[#allocation2 + $0x218] sm:$0xff] %vm2019, %v1958
  %2088 = vst.msk [vmem:[#allocation2 + $0x220] sm:$0xff] %vm2019, %v1959
  %2089 = vst.msk [vmem:[#allocation2 + $0x228] sm:$0xff] %vm2019, %v1960
  %2090 = vst.msk [vmem:[#allocation2 + $0x230] sm:$0xff] %vm2019, %v1961
  %2091 = vst.msk [vmem:[#allocation2 + $0x238] sm:$0xff] %vm2019, %v1962
  %2092 = vst.msk [vmem:[#allocation2 + $0x240] sm:$0xff] %vm2019, %v1963
  %2093 = vst.msk [vmem:[#allocation2 + $0x248] sm:$0xff] %vm2019, %v1964
  %2094 = vst.msk [vmem:[#allocation2 + $0x250] sm:$0xff] %vm2019, %v1965
  %2095 = vst.msk [vmem:[#allocation2 + $0x258] sm:$0xff] %vm2019, %v1966
  %2096 = vst.msk [vmem:[#allocation2 + $0x260] sm:$0xff] %vm2019, %v1967
  %2097 = vst.msk [vmem:[#allocation2 + $0x268] sm:$0xff] %vm2019, %v1968
  %2098 = vst.msk [vmem:[#allocation2 + $0x270] sm:$0xff] %vm2019, %v1969
  %2099 = vst.msk [vmem:[#allocation2 + $0x278] sm:$0xff] %vm2019, %v1970
  %2100 = vst.msk [vmem:[#allocation2 + $0x280] sm:$0xff] %vm2019, %v1971
  %2101 = vst.msk [vmem:[#allocation2 + $0x288] sm:$0xff] %vm2019, %v1972
  %2102 = vst.msk [vmem:[#allocation2 + $0x290] sm:$0xff] %vm2019, %v1973
  %2103 = vst.msk [vmem:[#allocation2 + $0x298] sm:$0xff] %vm2019, %v1974
  %2104 = vst.msk [vmem:[#allocation2 + $0x2a0] sm:$0xff] %vm2019, %v1975
  %2105 = vst.msk [vmem:[#allocation2 + $0x2a8] sm:$0xff] %vm2019, %v1976
  %2106 = vst.msk [vmem:[#allocation2 + $0x2b0] sm:$0xff] %vm2019, %v1977
  %2107 = vst.msk [vmem:[#allocation2 + $0x2b8] sm:$0xff] %vm2019, %v1978
  %2108 = vst.msk [vmem:[#allocation2 + $0x2c0] sm:$0xff] %vm2019, %v1979
  %2109 = vst.msk [vmem:[#allocation2 + $0x2c8] sm:$0xff] %vm2019, %v1980
  %2110 = vst.msk [vmem:[#allocation2 + $0x2d0] sm:$0xff] %vm2019, %v1981
  %2111 = vst.msk [vmem:[#allocation2 + $0x2d8] sm:$0xff] %vm2019, %v1982
  %2112 = vst.msk [vmem:[#allocation2 + $0x2e0] sm:$0xff] %vm2019, %v1983
  %2113 = vst.msk [vmem:[#allocation2 + $0x2e8] sm:$0xff] %vm2019, %v1984
  %2114 = vst.msk [vmem:[#allocation2 + $0x2f0] sm:$0xff] %vm2019, %v1985
  %2115 = vst.msk [vmem:[#allocation2 + $0x2f8] sm:$0xff] %vm2019, %v1986
  %2116 = vst.msk [vmem:[#allocation2 + $0x300] sm:$0xff] %vm2019, %v1987
  %2117 = vst.msk [vmem:[#allocation2 + $0x308] sm:$0xff] %vm2019, %v1988
  %2118 = vst.msk [vmem:[#allocation2 + $0x310] sm:$0xff] %vm2019, %v1989
  %2119 = vst.msk [vmem:[#allocation2 + $0x318] sm:$0xff] %vm2019, %v1990
  %2120 = vst.msk [vmem:[#allocation2 + $0x320] sm:$0xff] %vm2019, %v1991
  %2121 = vst.msk [vmem:[#allocation2 + $0x328] sm:$0xff] %vm2019, %v1992
  %2122 = vst.msk [vmem:[#allocation2 + $0x330] sm:$0xff] %vm2019, %v1993
  %2123 = vst.msk [vmem:[#allocation2 + $0x338] sm:$0xff] %vm2019, %v1994
  %2124 = vst.msk [vmem:[#allocation2 + $0x340] sm:$0xff] %vm2019, %v1995
  %2125 = vst.msk [vmem:[#allocation2 + $0x348] sm:$0xff] %vm2019, %v1996
  %2126 = vst.msk [vmem:[#allocation2 + $0x350] sm:$0xff] %vm2019, %v1997
  %2127 = vst.msk [vmem:[#allocation2 + $0x358] sm:$0xff] %vm2019, %v1998
  %2128 = vst.msk [vmem:[#allocation2 + $0x360] sm:$0xff] %vm2019, %v1999
  %2129 = vst.msk [vmem:[#allocation2 + $0x368] sm:$0xff] %vm2019, %v2000
  %2130 = vst.msk [vmem:[#allocation2 + $0x370] sm:$0xff] %vm2019, %v2001
  %2131 = vst.msk [vmem:[#allocation2 + $0x378] sm:$0xff] %vm2019, %v2002
  %2132 = vst.msk [vmem:[#allocation2 + $0x380] sm:$0xff] %vm2019, %v2003
  %2133 = vst.msk [vmem:[#allocation2 + $0x388] sm:$0xff] %vm2019, %v2004
  %2134 = vst.msk [vmem:[#allocation2 + $0x390] sm:$0xff] %vm2019, %v2005
  %2135 = vst.msk [vmem:[#allocation2 + $0x398] sm:$0xff] %vm2019, %v2006
  %2136 = vst.msk [vmem:[#allocation2 + $0x3a0] sm:$0xff] %vm2019, %v2007
  %2137 = vst.msk [vmem:[#allocation2 + $0x3a8] sm:$0xff] %vm2019, %v2008
  %2138 = vst.msk [vmem:[#allocation2 + $0x3b0] sm:$0xff] %vm2019, %v2009
  %2139 = vst.msk [vmem:[#allocation2 + $0x3b8] sm:$0xff] %vm2019, %v2010
  %2140 = vst.msk [vmem:[#allocation2 + $0x3c0] sm:$0xff] %vm2019, %v2011
  %2141 = vst.msk [vmem:[#allocation2 + $0x3c8] sm:$0xff] %vm2019, %v2012
  %2142 = vst.msk [vmem:[#allocation2 + $0x3d0] sm:$0xff] %vm2019, %v2013
  %2143 = vst.msk [vmem:[#allocation2 + $0x3d8] sm:$0xff] %vm2019, %v2014
  %2144 = vst.msk [vmem:[#allocation2 + $0x3e0] sm:$0xff] %vm2019, %v2015
  %2145 = vst.msk [vmem:[#allocation2 + $0x3e8] sm:$0xff] %vm2019, %v2016
  %2146 = vst.msk [vmem:[#allocation2 + $0x3f0] sm:$0xff] %vm2019, %v2017
  %2147 = vst.msk [vmem:[#allocation2 + $0x3f8] sm:$0xff] %vm2019, %v2018
  %v2148 = vld [vmem:[#allocation2] ss:$2 sm:$0xff]
  %s2149 = scalar_lea.vmem [#allocation2], 16
  %v2150 = vld [vmem:[%s2149] ss:$2 sm:$0xff]
  %s2151 = scalar_lea.vmem [#allocation2], 32
  %v2152 = vld [vmem:[%s2151] ss:$2 sm:$0xff]
  %s2153 = scalar_lea.vmem [#allocation2], 48
  %v2154 = vld [vmem:[%s2153] ss:$2 sm:$0xff]
  %s2155 = scalar_lea.vmem [#allocation2], 64
  %v2156 = vld [vmem:[%s2155] ss:$2 sm:$0xff]
  %s2157 = scalar_lea.vmem [#allocation2], 80
  %v2158 = vld [vmem:[%s2157] ss:$2 sm:$0xff]
  %s2159 = scalar_lea.vmem [#allocation2], 96
  %v2160 = vld [vmem:[%s2159] ss:$2 sm:$0xff]
  %s2161 = scalar_lea.vmem [#allocation2], 112
  %v2162 = vld [vmem:[%s2161] ss:$2 sm:$0xff]
  %s2163 = scalar_lea.vmem [#allocation2], 128
  %v2164 = vld [vmem:[%s2163] ss:$2 sm:$0xff]
  %s2165 = scalar_lea.vmem [#allocation2], 144
  %v2166 = vld [vmem:[%s2165] ss:$2 sm:$0xff]
  %s2167 = scalar_lea.vmem [#allocation2], 160
  %v2168 = vld [vmem:[%s2167] ss:$2 sm:$0xff]
  %s2169 = scalar_lea.vmem [#allocation2], 176
  %v2170 = vld [vmem:[%s2169] ss:$2 sm:$0xff]
  %s2171 = scalar_lea.vmem [#allocation2], 192
  %v2172 = vld [vmem:[%s2171] ss:$2 sm:$0xff]
  %s2173 = scalar_lea.vmem [#allocation2], 208
  %v2174 = vld [vmem:[%s2173] ss:$2 sm:$0xff]
  %s2175 = scalar_lea.vmem [#allocation2], 224
  %v2176 = vld [vmem:[%s2175] ss:$2 sm:$0xff]
  %s2177 = scalar_lea.vmem [#allocation2], 240
  %v2178 = vld [vmem:[%s2177] ss:$2 sm:$0xff]
  %s2179 = scalar_lea.vmem [#allocation2], 256
  %v2180 = vld [vmem:[%s2179] ss:$2 sm:$0xff]
  %s2181 = scalar_lea.vmem [#allocation2], 272
  %v2182 = vld [vmem:[%s2181] ss:$2 sm:$0xff]
  %s2183 = scalar_lea.vmem [#allocation2], 288
  %v2184 = vld [vmem:[%s2183] ss:$2 sm:$0xff]
  %s2185 = scalar_lea.vmem [#allocation2], 304
  %v2186 = vld [vmem:[%s2185] ss:$2 sm:$0xff]
  %s2187 = scalar_lea.vmem [#allocation2], 320
  %v2188 = vld [vmem:[%s2187] ss:$2 sm:$0xff]
  %s2189 = scalar_lea.vmem [#allocation2], 336
  %v2190 = vld [vmem:[%s2189] ss:$2 sm:$0xff]
  %s2191 = scalar_lea.vmem [#allocation2], 352
  %v2192 = vld [vmem:[%s2191] ss:$2 sm:$0xff]
  %s2193 = scalar_lea.vmem [#allocation2], 368
  %v2194 = vld [vmem:[%s2193] ss:$2 sm:$0xff]
  %s2195 = scalar_lea.vmem [#allocation2], 384
  %v2196 = vld [vmem:[%s2195] ss:$2 sm:$0xff]
  %s2197 = scalar_lea.vmem [#allocation2], 400
  %v2198 = vld [vmem:[%s2197] ss:$2 sm:$0xff]
  %s2199 = scalar_lea.vmem [#allocation2], 416
  %v2200 = vld [vmem:[%s2199] ss:$2 sm:$0xff]
  %s2201 = scalar_lea.vmem [#allocation2], 432
  %v2202 = vld [vmem:[%s2201] ss:$2 sm:$0xff]
  %s2203 = scalar_lea.vmem [#allocation2], 448
  %v2204 = vld [vmem:[%s2203] ss:$2 sm:$0xff]
  %s2205 = scalar_lea.vmem [#allocation2], 464
  %v2206 = vld [vmem:[%s2205] ss:$2 sm:$0xff]
  %s2207 = scalar_lea.vmem [#allocation2], 480
  %v2208 = vld [vmem:[%s2207] ss:$2 sm:$0xff]
  %s2209 = scalar_lea.vmem [#allocation2], 496
  %v2210 = vld [vmem:[%s2209] ss:$2 sm:$0xff]
  %s2211 = scalar_lea.vmem [#allocation2], 512
  %v2212 = vld [vmem:[%s2211] ss:$2 sm:$0xff]
  %s2213 = scalar_lea.vmem [#allocation2], 528
  %v2214 = vld [vmem:[%s2213] ss:$2 sm:$0xff]
  %s2215 = scalar_lea.vmem [#allocation2], 544
  %v2216 = vld [vmem:[%s2215] ss:$2 sm:$0xff]
  %s2217 = scalar_lea.vmem [#allocation2], 560
  %v2218 = vld [vmem:[%s2217] ss:$2 sm:$0xff]
  %s2219 = scalar_lea.vmem [#allocation2], 576
  %v2220 = vld [vmem:[%s2219] ss:$2 sm:$0xff]
  %s2221 = scalar_lea.vmem [#allocation2], 592
  %v2222 = vld [vmem:[%s2221] ss:$2 sm:$0xff]
  %s2223 = scalar_lea.vmem [#allocation2], 608
  %v2224 = vld [vmem:[%s2223] ss:$2 sm:$0xff]
  %s2225 = scalar_lea.vmem [#allocation2], 624
  %v2226 = vld [vmem:[%s2225] ss:$2 sm:$0xff]
  %s2227 = scalar_lea.vmem [#allocation2], 640
  %v2228 = vld [vmem:[%s2227] ss:$2 sm:$0xff]
  %s2229 = scalar_lea.vmem [#allocation2], 656
  %v2230 = vld [vmem:[%s2229] ss:$2 sm:$0xff]
  %s2231 = scalar_lea.vmem [#allocation2], 672
  %v2232 = vld [vmem:[%s2231] ss:$2 sm:$0xff]
  %s2233 = scalar_lea.vmem [#allocation2], 688
  %v2234 = vld [vmem:[%s2233] ss:$2 sm:$0xff]
  %s2235 = scalar_lea.vmem [#allocation2], 704
  %v2236 = vld [vmem:[%s2235] ss:$2 sm:$0xff]
  %s2237 = scalar_lea.vmem [#allocation2], 720
  %v2238 = vld [vmem:[%s2237] ss:$2 sm:$0xff]
  %s2239 = scalar_lea.vmem [#allocation2], 736
  %v2240 = vld [vmem:[%s2239] ss:$2 sm:$0xff]
  %s2241 = scalar_lea.vmem [#allocation2], 752
  %v2242 = vld [vmem:[%s2241] ss:$2 sm:$0xff]
  %s2243 = scalar_lea.vmem [#allocation2], 768
  %v2244 = vld [vmem:[%s2243] ss:$2 sm:$0xff]
  %s2245 = scalar_lea.vmem [#allocation2], 784
  %v2246 = vld [vmem:[%s2245] ss:$2 sm:$0xff]
  %s2247 = scalar_lea.vmem [#allocation2], 800
  %v2248 = vld [vmem:[%s2247] ss:$2 sm:$0xff]
  %s2249 = scalar_lea.vmem [#allocation2], 816
  %v2250 = vld [vmem:[%s2249] ss:$2 sm:$0xff]
  %s2251 = scalar_lea.vmem [#allocation2], 832
  %v2252 = vld [vmem:[%s2251] ss:$2 sm:$0xff]
  %s2253 = scalar_lea.vmem [#allocation2], 848
  %v2254 = vld [vmem:[%s2253] ss:$2 sm:$0xff]
  %s2255 = scalar_lea.vmem [#allocation2], 864
  %v2256 = vld [vmem:[%s2255] ss:$2 sm:$0xff]
  %s2257 = scalar_lea.vmem [#allocation2], 880
  %v2258 = vld [vmem:[%s2257] ss:$2 sm:$0xff]
  %s2259 = scalar_lea.vmem [#allocation2], 896
  %v2260 = vld [vmem:[%s2259] ss:$2 sm:$0xff]
  %s2261 = scalar_lea.vmem [#allocation2], 912
  %v2262 = vld [vmem:[%s2261] ss:$2 sm:$0xff]
  %s2263 = scalar_lea.vmem [#allocation2], 928
  %v2264 = vld [vmem:[%s2263] ss:$2 sm:$0xff]
  %s2265 = scalar_lea.vmem [#allocation2], 944
  %v2266 = vld [vmem:[%s2265] ss:$2 sm:$0xff]
  %s2267 = scalar_lea.vmem [#allocation2], 960
  %v2268 = vld [vmem:[%s2267] ss:$2 sm:$0xff]
  %s2269 = scalar_lea.vmem [#allocation2], 976
  %v2270 = vld [vmem:[%s2269] ss:$2 sm:$0xff]
  %s2271 = scalar_lea.vmem [#allocation2], 992
  %v2272 = vld [vmem:[%s2271] ss:$2 sm:$0xff]
  %s2273 = scalar_lea.vmem [#allocation2], 1008
  %v2274 = vld [vmem:[%s2273] ss:$2 sm:$0xff]
  %s2275 = scalar_lea.vmem [#allocation2], 1
  %v2276 = vld [vmem:[%s2275] ss:$2 sm:$0xff]
  %s2277 = scalar_lea.vmem [#allocation2], 17
  %v2278 = vld [vmem:[%s2277] ss:$2 sm:$0xff]
  %s2279 = scalar_lea.vmem [#allocation2], 33
  %v2280 = vld [vmem:[%s2279] ss:$2 sm:$0xff]
  %s2281 = scalar_lea.vmem [#allocation2], 49
  %v2282 = vld [vmem:[%s2281] ss:$2 sm:$0xff]
  %s2283 = scalar_lea.vmem [#allocation2], 65
  %v2284 = vld [vmem:[%s2283] ss:$2 sm:$0xff]
  %s2285 = scalar_lea.vmem [#allocation2], 81
  %v2286 = vld [vmem:[%s2285] ss:$2 sm:$0xff]
  %s2287 = scalar_lea.vmem [#allocation2], 97
  %v2288 = vld [vmem:[%s2287] ss:$2 sm:$0xff]
  %s2289 = scalar_lea.vmem [#allocation2], 113
  %v2290 = vld [vmem:[%s2289] ss:$2 sm:$0xff]
  %s2291 = scalar_lea.vmem [#allocation2], 129
  %v2292 = vld [vmem:[%s2291] ss:$2 sm:$0xff]
  %s2293 = scalar_lea.vmem [#allocation2], 145
  %v2294 = vld [vmem:[%s2293] ss:$2 sm:$0xff]
  %s2295 = scalar_lea.vmem [#allocation2], 161
  %v2296 = vld [vmem:[%s2295] ss:$2 sm:$0xff]
  %s2297 = scalar_lea.vmem [#allocation2], 177
  %v2298 = vld [vmem:[%s2297] ss:$2 sm:$0xff]
  %s2299 = scalar_lea.vmem [#allocation2], 193
  %v2300 = vld [vmem:[%s2299] ss:$2 sm:$0xff]
  %s2301 = scalar_lea.vmem [#allocation2], 209
  %v2302 = vld [vmem:[%s2301] ss:$2 sm:$0xff]
  %s2303 = scalar_lea.vmem [#allocation2], 225
  %v2304 = vld [vmem:[%s2303] ss:$2 sm:$0xff]
  %s2305 = scalar_lea.vmem [#allocation2], 241
  %v2306 = vld [vmem:[%s2305] ss:$2 sm:$0xff]
  %s2307 = scalar_lea.vmem [#allocation2], 257
  %v2308 = vld [vmem:[%s2307] ss:$2 sm:$0xff]
  %s2309 = scalar_lea.vmem [#allocation2], 273
  %v2310 = vld [vmem:[%s2309] ss:$2 sm:$0xff]
  %s2311 = scalar_lea.vmem [#allocation2], 289
  %v2312 = vld [vmem:[%s2311] ss:$2 sm:$0xff]
  %s2313 = scalar_lea.vmem [#allocation2], 305
  %v2314 = vld [vmem:[%s2313] ss:$2 sm:$0xff]
  %s2315 = scalar_lea.vmem [#allocation2], 321
  %v2316 = vld [vmem:[%s2315] ss:$2 sm:$0xff]
  %s2317 = scalar_lea.vmem [#allocation2], 337
  %v2318 = vld [vmem:[%s2317] ss:$2 sm:$0xff]
  %s2319 = scalar_lea.vmem [#allocation2], 353
  %v2320 = vld [vmem:[%s2319] ss:$2 sm:$0xff]
  %s2321 = scalar_lea.vmem [#allocation2], 369
  %v2322 = vld [vmem:[%s2321] ss:$2 sm:$0xff]
  %s2323 = scalar_lea.vmem [#allocation2], 385
  %v2324 = vld [vmem:[%s2323] ss:$2 sm:$0xff]
  %s2325 = scalar_lea.vmem [#allocation2], 401
  %v2326 = vld [vmem:[%s2325] ss:$2 sm:$0xff]
  %s2327 = scalar_lea.vmem [#allocation2], 417
  %v2328 = vld [vmem:[%s2327] ss:$2 sm:$0xff]
  %s2329 = scalar_lea.vmem [#allocation2], 433
  %v2330 = vld [vmem:[%s2329] ss:$2 sm:$0xff]
  %s2331 = scalar_lea.vmem [#allocation2], 449
  %v2332 = vld [vmem:[%s2331] ss:$2 sm:$0xff]
  %s2333 = scalar_lea.vmem [#allocation2], 465
  %v2334 = vld [vmem:[%s2333] ss:$2 sm:$0xff]
  %s2335 = scalar_lea.vmem [#allocation2], 481
  %v2336 = vld [vmem:[%s2335] ss:$2 sm:$0xff]
  %s2337 = scalar_lea.vmem [#allocation2], 497
  %v2338 = vld [vmem:[%s2337] ss:$2 sm:$0xff]
  %s2339 = scalar_lea.vmem [#allocation2], 513
  %v2340 = vld [vmem:[%s2339] ss:$2 sm:$0xff]
  %s2341 = scalar_lea.vmem [#allocation2], 529
  %v2342 = vld [vmem:[%s2341] ss:$2 sm:$0xff]
  %s2343 = scalar_lea.vmem [#allocation2], 545
  %v2344 = vld [vmem:[%s2343] ss:$2 sm:$0xff]
  %s2345 = scalar_lea.vmem [#allocation2], 561
  %v2346 = vld [vmem:[%s2345] ss:$2 sm:$0xff]
  %s2347 = scalar_lea.vmem [#allocation2], 577
  %v2348 = vld [vmem:[%s2347] ss:$2 sm:$0xff]
  %s2349 = scalar_lea.vmem [#allocation2], 593
  %v2350 = vld [vmem:[%s2349] ss:$2 sm:$0xff]
  %s2351 = scalar_lea.vmem [#allocation2], 609
  %v2352 = vld [vmem:[%s2351] ss:$2 sm:$0xff]
  %s2353 = scalar_lea.vmem [#allocation2], 625
  %v2354 = vld [vmem:[%s2353] ss:$2 sm:$0xff]
  %s2355 = scalar_lea.vmem [#allocation2], 641
  %v2356 = vld [vmem:[%s2355] ss:$2 sm:$0xff]
  %s2357 = scalar_lea.vmem [#allocation2], 657
  %v2358 = vld [vmem:[%s2357] ss:$2 sm:$0xff]
  %s2359 = scalar_lea.vmem [#allocation2], 673
  %v2360 = vld [vmem:[%s2359] ss:$2 sm:$0xff]
  %s2361 = scalar_lea.vmem [#allocation2], 689
  %v2362 = vld [vmem:[%s2361] ss:$2 sm:$0xff]
  %s2363 = scalar_lea.vmem [#allocation2], 705
  %v2364 = vld [vmem:[%s2363] ss:$2 sm:$0xff]
  %s2365 = scalar_lea.vmem [#allocation2], 721
  %v2366 = vld [vmem:[%s2365] ss:$2 sm:$0xff]
  %s2367 = scalar_lea.vmem [#allocation2], 737
  %v2368 = vld [vmem:[%s2367] ss:$2 sm:$0xff]
  %s2369 = scalar_lea.vmem [#allocation2], 753
  %v2370 = vld [vmem:[%s2369] ss:$2 sm:$0xff]
  %s2371 = scalar_lea.vmem [#allocation2], 769
  %v2372 = vld [vmem:[%s2371] ss:$2 sm:$0xff]
  %s2373 = scalar_lea.vmem [#allocation2], 785
  %v2374 = vld [vmem:[%s2373] ss:$2 sm:$0xff]
  %s2375 = scalar_lea.vmem [#allocation2], 801
  %v2376 = vld [vmem:[%s2375] ss:$2 sm:$0xff]
  %s2377 = scalar_lea.vmem [#allocation2], 817
  %v2378 = vld [vmem:[%s2377] ss:$2 sm:$0xff]
  %s2379 = scalar_lea.vmem [#allocation2], 833
  %v2380 = vld [vmem:[%s2379] ss:$2 sm:$0xff]
  %s2381 = scalar_lea.vmem [#allocation2], 849
  %v2382 = vld [vmem:[%s2381] ss:$2 sm:$0xff]
  %s2383 = scalar_lea.vmem [#allocation2], 865
  %v2384 = vld [vmem:[%s2383] ss:$2 sm:$0xff]
  %s2385 = scalar_lea.vmem [#allocation2], 881
  %v2386 = vld [vmem:[%s2385] ss:$2 sm:$0xff]
  %s2387 = scalar_lea.vmem [#allocation2], 897
  %v2388 = vld [vmem:[%s2387] ss:$2 sm:$0xff]
  %s2389 = scalar_lea.vmem [#allocation2], 913
  %v2390 = vld [vmem:[%s2389] ss:$2 sm:$0xff]
  %s2391 = scalar_lea.vmem [#allocation2], 929
  %v2392 = vld [vmem:[%s2391] ss:$2 sm:$0xff]
  %s2393 = scalar_lea.vmem [#allocation2], 945
  %v2394 = vld [vmem:[%s2393] ss:$2 sm:$0xff]
  %s2395 = scalar_lea.vmem [#allocation2], 961
  %v2396 = vld [vmem:[%s2395] ss:$2 sm:$0xff]
  %s2397 = scalar_lea.vmem [#allocation2], 977
  %v2398 = vld [vmem:[%s2397] ss:$2 sm:$0xff]
  %s2399 = scalar_lea.vmem [#allocation2], 993
  %v2400 = vld [vmem:[%s2399] ss:$2 sm:$0xff]
  %s2401 = scalar_lea.vmem [#allocation2], 1009
  %v2402 = vld [vmem:[%s2401] ss:$2 sm:$0xff]
  %v2403 = vmax.f32 %v2148, %v2276
  %v2404 = vmax.f32 %v2150, %v2278
  %v2405 = vmax.f32 %v2152, %v2280
  %v2406 = vmax.f32 %v2154, %v2282
  %v2407 = vmax.f32 %v2156, %v2284
  %v2408 = vmax.f32 %v2158, %v2286
  %v2409 = vmax.f32 %v2160, %v2288
  %v2410 = vmax.f32 %v2162, %v2290
  %v2411 = vmax.f32 %v2164, %v2292
  %v2412 = vmax.f32 %v2166, %v2294
  %v2413 = vmax.f32 %v2168, %v2296
  %v2414 = vmax.f32 %v2170, %v2298
  %v2415 = vmax.f32 %v2172, %v2300
  %v2416 = vmax.f32 %v2174, %v2302
  %v2417 = vmax.f32 %v2176, %v2304
  %v2418 = vmax.f32 %v2178, %v2306
  %v2419 = vmax.f32 %v2180, %v2308
  %v2420 = vmax.f32 %v2182, %v2310
  %v2421 = vmax.f32 %v2184, %v2312
  %v2422 = vmax.f32 %v2186, %v2314
  %v2423 = vmax.f32 %v2188, %v2316
  %v2424 = vmax.f32 %v2190, %v2318
  %v2425 = vmax.f32 %v2192, %v2320
  %v2426 = vmax.f32 %v2194, %v2322
  %v2427 = vmax.f32 %v2196, %v2324
  %v2428 = vmax.f32 %v2198, %v2326
  %v2429 = vmax.f32 %v2200, %v2328
  %v2430 = vmax.f32 %v2202, %v2330
  %v2431 = vmax.f32 %v2204, %v2332
  %v2432 = vmax.f32 %v2206, %v2334
  %v2433 = vmax.f32 %v2208, %v2336
  %v2434 = vmax.f32 %v2210, %v2338
  %v2435 = vmax.f32 %v2212, %v2340
  %v2436 = vmax.f32 %v2214, %v2342
  %v2437 = vmax.f32 %v2216, %v2344
  %v2438 = vmax.f32 %v2218, %v2346
  %v2439 = vmax.f32 %v2220, %v2348
  %v2440 = vmax.f32 %v2222, %v2350
  %v2441 = vmax.f32 %v2224, %v2352
  %v2442 = vmax.f32 %v2226, %v2354
  %v2443 = vmax.f32 %v2228, %v2356
  %v2444 = vmax.f32 %v2230, %v2358
  %v2445 = vmax.f32 %v2232, %v2360
  %v2446 = vmax.f32 %v2234, %v2362
  %v2447 = vmax.f32 %v2236, %v2364
  %v2448 = vmax.f32 %v2238, %v2366
  %v2449 = vmax.f32 %v2240, %v2368
  %v2450 = vmax.f32 %v2242, %v2370
  %v2451 = vmax.f32 %v2244, %v2372
  %v2452 = vmax.f32 %v2246, %v2374
  %v2453 = vmax.f32 %v2248, %v2376
  %v2454 = vmax.f32 %v2250, %v2378
  %v2455 = vmax.f32 %v2252, %v2380
  %v2456 = vmax.f32 %v2254, %v2382
  %v2457 = vmax.f32 %v2256, %v2384
  %v2458 = vmax.f32 %v2258, %v2386
  %v2459 = vmax.f32 %v2260, %v2388
  %v2460 = vmax.f32 %v2262, %v2390
  %v2461 = vmax.f32 %v2264, %v2392
  %v2462 = vmax.f32 %v2266, %v2394
  %v2463 = vmax.f32 %v2268, %v2396
  %v2464 = vmax.f32 %v2270, %v2398
  %v2465 = vmax.f32 %v2272, %v2400
  %v2466 = vmax.f32 %v2274, %v2402
  %vm2467 = vcmask 516096
  %2468 = vst.msk [vmem:[#allocation3] sm:$0x1] %vm2467, 0.0
  %2469 = vst.msk [vmem:[#allocation3 + $0x10] sm:$0x1] %vm2467, 0.0
  %2470 = vst.msk [vmem:[#allocation3 + $0x20] sm:$0x1] %vm2467, 0.0
  %2471 = vst.msk [vmem:[#allocation3 + $0x30] sm:$0x1] %vm2467, 0.0
  %2472 = vst.msk [vmem:[#allocation3 + $0x40] sm:$0x1] %vm2467, 0.0
  %2473 = vst.msk [vmem:[#allocation3 + $0x50] sm:$0x1] %vm2467, 0.0
  %2474 = vst.msk [vmem:[#allocation3 + $0x60] sm:$0x1] %vm2467, 0.0
  %2475 = vst.msk [vmem:[#allocation3 + $0x70] sm:$0x1] %vm2467, 0.0
  %2476 = vst.msk [vmem:[#allocation3 + $0x80] sm:$0x1] %vm2467, 0.0
  %2477 = vst.msk [vmem:[#allocation3 + $0x90] sm:$0x1] %vm2467, 0.0
  %2478 = vst.msk [vmem:[#allocation3 + $0xa0] sm:$0x1] %vm2467, 0.0
  %2479 = vst.msk [vmem:[#allocation3 + $0xb0] sm:$0x1] %vm2467, 0.0
  %2480 = vst.msk [vmem:[#allocation3 + $0xc0] sm:$0x1] %vm2467, 0.0
  %2481 = vst.msk [vmem:[#allocation3 + $0xd0] sm:$0x1] %vm2467, 0.0
  %2482 = vst.msk [vmem:[#allocation3 + $0xe0] sm:$0x1] %vm2467, 0.0
  %2483 = vst.msk [vmem:[#allocation3 + $0xf0] sm:$0x1] %vm2467, 0.0
  %2484 = vst.msk [vmem:[#allocation3 + $0x100] sm:$0x1] %vm2467, 0.0
  %2485 = vst.msk [vmem:[#allocation3 + $0x110] sm:$0x1] %vm2467, 0.0
  %2486 = vst.msk [vmem:[#allocation3 + $0x120] sm:$0x1] %vm2467, 0.0
  %2487 = vst.msk [vmem:[#allocation3 + $0x130] sm:$0x1] %vm2467, 0.0
  %2488 = vst.msk [vmem:[#allocation3 + $0x140] sm:$0x1] %vm2467, 0.0
  %2489 = vst.msk [vmem:[#allocation3 + $0x150] sm:$0x1] %vm2467, 0.0
  %2490 = vst.msk [vmem:[#allocation3 + $0x160] sm:$0x1] %vm2467, 0.0
  %2491 = vst.msk [vmem:[#allocation3 + $0x170] sm:$0x1] %vm2467, 0.0
  %2492 = vst.msk [vmem:[#allocation3 + $0x180] sm:$0x1] %vm2467, 0.0
  %2493 = vst.msk [vmem:[#allocation3 + $0x190] sm:$0x1] %vm2467, 0.0
  %2494 = vst.msk [vmem:[#allocation3 + $0x1a0] sm:$0x1] %vm2467, 0.0
  %2495 = vst.msk [vmem:[#allocation3 + $0x1b0] sm:$0x1] %vm2467, 0.0
  %2496 = vst.msk [vmem:[#allocation3 + $0x1c0] sm:$0x1] %vm2467, 0.0
  %2497 = vst.msk [vmem:[#allocation3 + $0x1d0] sm:$0x1] %vm2467, 0.0
  %2498 = vst.msk [vmem:[#allocation3 + $0x1e0] sm:$0x1] %vm2467, 0.0
  %2499 = vst.msk [vmem:[#allocation3 + $0x1f0] sm:$0x1] %vm2467, 0.0
  %2500 = vst.msk [vmem:[#allocation3 + $0x200] sm:$0x1] %vm2467, 0.0
  %2501 = vst.msk [vmem:[#allocation3 + $0x210] sm:$0x1] %vm2467, 0.0
  %2502 = vst.msk [vmem:[#allocation3 + $0x220] sm:$0x1] %vm2467, 0.0
  %2503 = vst.msk [vmem:[#allocation3 + $0x230] sm:$0x1] %vm2467, 0.0
  %2504 = vst.msk [vmem:[#allocation3 + $0x240] sm:$0x1] %vm2467, 0.0
  %2505 = vst.msk [vmem:[#allocation3 + $0x250] sm:$0x1] %vm2467, 0.0
  %2506 = vst.msk [vmem:[#allocation3 + $0x260] sm:$0x1] %vm2467, 0.0
  %2507 = vst.msk [vmem:[#allocation3 + $0x270] sm:$0x1] %vm2467, 0.0
  %2508 = vst.msk [vmem:[#allocation3 + $0x280] sm:$0x1] %vm2467, 0.0
  %2509 = vst.msk [vmem:[#allocation3 + $0x290] sm:$0x1] %vm2467, 0.0
  %2510 = vst.msk [vmem:[#allocation3 + $0x2a0] sm:$0x1] %vm2467, 0.0
  %2511 = vst.msk [vmem:[#allocation3 + $0x2b0] sm:$0x1] %vm2467, 0.0
  %2512 = vst.msk [vmem:[#allocation3 + $0x2c0] sm:$0x1] %vm2467, 0.0
  %2513 = vst.msk [vmem:[#allocation3 + $0x2d0] sm:$0x1] %vm2467, 0.0
  %2514 = vst.msk [vmem:[#allocation3 + $0x2e0] sm:$0x1] %vm2467, 0.0
  %2515 = vst.msk [vmem:[#allocation3 + $0x2f0] sm:$0x1] %vm2467, 0.0
  %2516 = vst.msk [vmem:[#allocation3 + $0x300] sm:$0x1] %vm2467, 0.0
  %2517 = vst.msk [vmem:[#allocation3 + $0x310] sm:$0x1] %vm2467, 0.0
  %2518 = vst.msk [vmem:[#allocation3 + $0x320] sm:$0x1] %vm2467, 0.0
  %2519 = vst.msk [vmem:[#allocation3 + $0x330] sm:$0x1] %vm2467, 0.0
  %2520 = vst.msk [vmem:[#allocation3 + $0x340] sm:$0x1] %vm2467, 0.0
  %2521 = vst.msk [vmem:[#allocation3 + $0x350] sm:$0x1] %vm2467, 0.0
  %2522 = vst.msk [vmem:[#allocation3 + $0x360] sm:$0x1] %vm2467, 0.0
  %2523 = vst.msk [vmem:[#allocation3 + $0x370] sm:$0x1] %vm2467, 0.0
  %2524 = vst.msk [vmem:[#allocation3 + $0x380] sm:$0x1] %vm2467, 0.0
  %2525 = vst.msk [vmem:[#allocation3 + $0x390] sm:$0x1] %vm2467, 0.0
  %2526 = vst.msk [vmem:[#allocation3 + $0x3a0] sm:$0x1] %vm2467, 0.0
  %2527 = vst.msk [vmem:[#allocation3 + $0x3b0] sm:$0x1] %vm2467, 0.0
  %2528 = vst.msk [vmem:[#allocation3 + $0x3c0] sm:$0x1] %vm2467, 0.0
  %2529 = vst.msk [vmem:[#allocation3 + $0x3d0] sm:$0x1] %vm2467, 0.0
  %2530 = vst.msk [vmem:[#allocation3 + $0x3e0] sm:$0x1] %vm2467, 0.0
  %2531 = vst.msk [vmem:[#allocation3 + $0x3f0] sm:$0x1] %vm2467, 0.0
  %2532 = vst.msk [vmem:[#allocation3 + $0x9] sm:$0x1] %vm2467, 0.0
  %2533 = vst.msk [vmem:[#allocation3 + $0x19] sm:$0x1] %vm2467, 0.0
  %2534 = vst.msk [vmem:[#allocation3 + $0x29] sm:$0x1] %vm2467, 0.0
  %2535 = vst.msk [vmem:[#allocation3 + $0x39] sm:$0x1] %vm2467, 0.0
  %2536 = vst.msk [vmem:[#allocation3 + $0x49] sm:$0x1] %vm2467, 0.0
  %2537 = vst.msk [vmem:[#allocation3 + $0x59] sm:$0x1] %vm2467, 0.0
  %2538 = vst.msk [vmem:[#allocation3 + $0x69] sm:$0x1] %vm2467, 0.0
  %2539 = vst.msk [vmem:[#allocation3 + $0x79] sm:$0x1] %vm2467, 0.0
  %2540 = vst.msk [vmem:[#allocation3 + $0x89] sm:$0x1] %vm2467, 0.0
  %2541 = vst.msk [vmem:[#allocation3 + $0x99] sm:$0x1] %vm2467, 0.0
  %2542 = vst.msk [vmem:[#allocation3 + $0xa9] sm:$0x1] %vm2467, 0.0
  %2543 = vst.msk [vmem:[#allocation3 + $0xb9] sm:$0x1] %vm2467, 0.0
  %2544 = vst.msk [vmem:[#allocation3 + $0xc9] sm:$0x1] %vm2467, 0.0
  %2545 = vst.msk [vmem:[#allocation3 + $0xd9] sm:$0x1] %vm2467, 0.0
  %2546 = vst.msk [vmem:[#allocation3 + $0xe9] sm:$0x1] %vm2467, 0.0
  %2547 = vst.msk [vmem:[#allocation3 + $0xf9] sm:$0x1] %vm2467, 0.0
  %2548 = vst.msk [vmem:[#allocation3 + $0x109] sm:$0x1] %vm2467, 0.0
  %2549 = vst.msk [vmem:[#allocation3 + $0x119] sm:$0x1] %vm2467, 0.0
  %2550 = vst.msk [vmem:[#allocation3 + $0x129] sm:$0x1] %vm2467, 0.0
  %2551 = vst.msk [vmem:[#allocation3 + $0x139] sm:$0x1] %vm2467, 0.0
  %2552 = vst.msk [vmem:[#allocation3 + $0x149] sm:$0x1] %vm2467, 0.0
  %2553 = vst.msk [vmem:[#allocation3 + $0x159] sm:$0x1] %vm2467, 0.0
  %2554 = vst.msk [vmem:[#allocation3 + $0x169] sm:$0x1] %vm2467, 0.0
  %2555 = vst.msk [vmem:[#allocation3 + $0x179] sm:$0x1] %vm2467, 0.0
  %2556 = vst.msk [vmem:[#allocation3 + $0x189] sm:$0x1] %vm2467, 0.0
  %2557 = vst.msk [vmem:[#allocation3 + $0x199] sm:$0x1] %vm2467, 0.0
  %2558 = vst.msk [vmem:[#allocation3 + $0x1a9] sm:$0x1] %vm2467, 0.0
  %2559 = vst.msk [vmem:[#allocation3 + $0x1b9] sm:$0x1] %vm2467, 0.0
  %2560 = vst.msk [vmem:[#allocation3 + $0x1c9] sm:$0x1] %vm2467, 0.0
  %2561 = vst.msk [vmem:[#allocation3 + $0x1d9] sm:$0x1] %vm2467, 0.0
  %2562 = vst.msk [vmem:[#allocation3 + $0x1e9] sm:$0x1] %vm2467, 0.0
  %2563 = vst.msk [vmem:[#allocation3 + $0x1f9] sm:$0x1] %vm2467, 0.0
  %2564 = vst.msk [vmem:[#allocation3 + $0x209] sm:$0x1] %vm2467, 0.0
  %2565 = vst.msk [vmem:[#allocation3 + $0x219] sm:$0x1] %vm2467, 0.0
  %2566 = vst.msk [vmem:[#allocation3 + $0x229] sm:$0x1] %vm2467, 0.0
  %2567 = vst.msk [vmem:[#allocation3 + $0x239] sm:$0x1] %vm2467, 0.0
  %2568 = vst.msk [vmem:[#allocation3 + $0x249] sm:$0x1] %vm2467, 0.0
  %2569 = vst.msk [vmem:[#allocation3 + $0x259] sm:$0x1] %vm2467, 0.0
  %2570 = vst.msk [vmem:[#allocation3 + $0x269] sm:$0x1] %vm2467, 0.0
  %2571 = vst.msk [vmem:[#allocation3 + $0x279] sm:$0x1] %vm2467, 0.0
  %2572 = vst.msk [vmem:[#allocation3 + $0x289] sm:$0x1] %vm2467, 0.0
  %2573 = vst.msk [vmem:[#allocation3 + $0x299] sm:$0x1] %vm2467, 0.0
  %2574 = vst.msk [vmem:[#allocation3 + $0x2a9] sm:$0x1] %vm2467, 0.0
  %2575 = vst.msk [vmem:[#allocation3 + $0x2b9] sm:$0x1] %vm2467, 0.0
  %2576 = vst.msk [vmem:[#allocation3 + $0x2c9] sm:$0x1] %vm2467, 0.0
  %2577 = vst.msk [vmem:[#allocation3 + $0x2d9] sm:$0x1] %vm2467, 0.0
  %2578 = vst.msk [vmem:[#allocation3 + $0x2e9] sm:$0x1] %vm2467, 0.0
  %2579 = vst.msk [vmem:[#allocation3 + $0x2f9] sm:$0x1] %vm2467, 0.0
  %2580 = vst.msk [vmem:[#allocation3 + $0x309] sm:$0x1] %vm2467, 0.0
  %2581 = vst.msk [vmem:[#allocation3 + $0x319] sm:$0x1] %vm2467, 0.0
  %2582 = vst.msk [vmem:[#allocation3 + $0x329] sm:$0x1] %vm2467, 0.0
  %2583 = vst.msk [vmem:[#allocation3 + $0x339] sm:$0x1] %vm2467, 0.0
  %2584 = vst.msk [vmem:[#allocation3 + $0x349] sm:$0x1] %vm2467, 0.0
  %2585 = vst.msk [vmem:[#allocation3 + $0x359] sm:$0x1] %vm2467, 0.0
  %2586 = vst.msk [vmem:[#allocation3 + $0x369] sm:$0x1] %vm2467, 0.0
  %2587 = vst.msk [vmem:[#allocation3 + $0x379] sm:$0x1] %vm2467, 0.0
  %2588 = vst.msk [vmem:[#allocation3 + $0x389] sm:$0x1] %vm2467, 0.0
  %2589 = vst.msk [vmem:[#allocation3 + $0x399] sm:$0x1] %vm2467, 0.0
  %2590 = vst.msk [vmem:[#allocation3 + $0x3a9] sm:$0x1] %vm2467, 0.0
  %2591 = vst.msk [vmem:[#allocation3 + $0x3b9] sm:$0x1] %vm2467, 0.0
  %2592 = vst.msk [vmem:[#allocation3 + $0x3c9] sm:$0x1] %vm2467, 0.0
  %2593 = vst.msk [vmem:[#allocation3 + $0x3d9] sm:$0x1] %vm2467, 0.0
  %2594 = vst.msk [vmem:[#allocation3 + $0x3e9] sm:$0x1] %vm2467, 0.0
  %2595 = vst.msk [vmem:[#allocation3 + $0x3f9] sm:$0x1] %vm2467, 0.0
  %2596 = vst.msk [vmem:[#allocation3 + $0x1] sm:$0xff] %vm2019, %v2403
  %2597 = vst.msk [vmem:[#allocation3 + $0x11] sm:$0xff] %vm2019, %v2404
  %2598 = vst.msk [vmem:[#allocation3 + $0x21] sm:$0xff] %vm2019, %v2405
  %2599 = vst.msk [vmem:[#allocation3 + $0x31] sm:$0xff] %vm2019, %v2406
  %2600 = vst.msk [vmem:[#allocation3 + $0x41] sm:$0xff] %vm2019, %v2407
  %2601 = vst.msk [vmem:[#allocation3 + $0x51] sm:$0xff] %vm2019, %v2408
  %2602 = vst.msk [vmem:[#allocation3 + $0x61] sm:$0xff] %vm2019, %v2409
  %2603 = vst.msk [vmem:[#allocation3 + $0x71] sm:$0xff] %vm2019, %v2410
  %2604 = vst.msk [vmem:[#allocation3 + $0x81] sm:$0xff] %vm2019, %v2411
  %2605 = vst.msk [vmem:[#allocation3 + $0x91] sm:$0xff] %vm2019, %v2412
  %2606 = vst.msk [vmem:[#allocation3 + $0xa1] sm:$0xff] %vm2019, %v2413
  %2607 = vst.msk [vmem:[#allocation3 + $0xb1] sm:$0xff] %vm2019, %v2414
  %2608 = vst.msk [vmem:[#allocation3 + $0xc1] sm:$0xff] %vm2019, %v2415
  %2609 = vst.msk [vmem:[#allocation3 + $0xd1] sm:$0xff] %vm2019, %v2416
  %2610 = vst.msk [vmem:[#allocation3 + $0xe1] sm:$0xff] %vm2019, %v2417
  %2611 = vst.msk [vmem:[#allocation3 + $0xf1] sm:$0xff] %vm2019, %v2418
  %2612 = vst.msk [vmem:[#allocation3 + $0x101] sm:$0xff] %vm2019, %v2419
  %2613 = vst.msk [vmem:[#allocation3 + $0x111] sm:$0xff] %vm2019, %v2420
  %2614 = vst.msk [vmem:[#allocation3 + $0x121] sm:$0xff] %vm2019, %v2421
  %2615 = vst.msk [vmem:[#allocation3 + $0x131] sm:$0xff] %vm2019, %v2422
  %2616 = vst.msk [vmem:[#allocation3 + $0x141] sm:$0xff] %vm2019, %v2423
  %2617 = vst.msk [vmem:[#allocation3 + $0x151] sm:$0xff] %vm2019, %v2424
  %2618 = vst.msk [vmem:[#allocation3 + $0x161] sm:$0xff] %vm2019, %v2425
  %2619 = vst.msk [vmem:[#allocation3 + $0x171] sm:$0xff] %vm2019, %v2426
  %2620 = vst.msk [vmem:[#allocation3 + $0x181] sm:$0xff] %vm2019, %v2427
  %2621 = vst.msk [vmem:[#allocation3 + $0x191] sm:$0xff] %vm2019, %v2428
  %2622 = vst.msk [vmem:[#allocation3 + $0x1a1] sm:$0xff] %vm2019, %v2429
  %2623 = vst.msk [vmem:[#allocation3 + $0x1b1] sm:$0xff] %vm2019, %v2430
  %2624 = vst.msk [vmem:[#allocation3 + $0x1c1] sm:$0xff] %vm2019, %v2431
  %2625 = vst.msk [vmem:[#allocation3 + $0x1d1] sm:$0xff] %vm2019, %v2432
  %2626 = vst.msk [vmem:[#allocation3 + $0x1e1] sm:$0xff] %vm2019, %v2433
  %2627 = vst.msk [vmem:[#allocation3 + $0x1f1] sm:$0xff] %vm2019, %v2434
  %2628 = vst.msk [vmem:[#allocation3 + $0x201] sm:$0xff] %vm2019, %v2435
  %2629 = vst.msk [vmem:[#allocation3 + $0x211] sm:$0xff] %vm2019, %v2436
  %2630 = vst.msk [vmem:[#allocation3 + $0x221] sm:$0xff] %vm2019, %v2437
  %2631 = vst.msk [vmem:[#allocation3 + $0x231] sm:$0xff] %vm2019, %v2438
  %2632 = vst.msk [vmem:[#allocation3 + $0x241] sm:$0xff] %vm2019, %v2439
  %2633 = vst.msk [vmem:[#allocation3 + $0x251] sm:$0xff] %vm2019, %v2440
  %2634 = vst.msk [vmem:[#allocation3 + $0x261] sm:$0xff] %vm2019, %v2441
  %2635 = vst.msk [vmem:[#allocation3 + $0x271] sm:$0xff] %vm2019, %v2442
  %2636 = vst.msk [vmem:[#allocation3 + $0x281] sm:$0xff] %vm2019, %v2443
  %2637 = vst.msk [vmem:[#allocation3 + $0x291] sm:$0xff] %vm2019, %v2444
  %2638 = vst.msk [vmem:[#allocation3 + $0x2a1] sm:$0xff] %vm2019, %v2445
  %2639 = vst.msk [vmem:[#allocation3 + $0x2b1] sm:$0xff] %vm2019, %v2446
  %2640 = vst.msk [vmem:[#allocation3 + $0x2c1] sm:$0xff] %vm2019, %v2447
  %2641 = vst.msk [vmem:[#allocation3 + $0x2d1] sm:$0xff] %vm2019, %v2448
  %2642 = vst.msk [vmem:[#allocation3 + $0x2e1] sm:$0xff] %vm2019, %v2449
  %2643 = vst.msk [vmem:[#allocation3 + $0x2f1] sm:$0xff] %vm2019, %v2450
  %2644 = vst.msk [vmem:[#allocation3 + $0x301] sm:$0xff] %vm2019, %v2451
  %2645 = vst.msk [vmem:[#allocation3 + $0x311] sm:$0xff] %vm2019, %v2452
  %2646 = vst.msk [vmem:[#allocation3 + $0x321] sm:$0xff] %vm2019, %v2453
  %2647 = vst.msk [vmem:[#allocation3 + $0x331] sm:$0xff] %vm2019, %v2454
  %2648 = vst.msk [vmem:[#allocation3 + $0x341] sm:$0xff] %vm2019, %v2455
  %2649 = vst.msk [vmem:[#allocation3 + $0x351] sm:$0xff] %vm2019, %v2456
  %2650 = vst.msk [vmem:[#allocation3 + $0x361] sm:$0xff] %vm2019, %v2457
  %2651 = vst.msk [vmem:[#allocation3 + $0x371] sm:$0xff] %vm2019, %v2458
  %2652 = vst.msk [vmem:[#allocation3 + $0x381] sm:$0xff] %vm2019, %v2459
  %2653 = vst.msk [vmem:[#allocation3 + $0x391] sm:$0xff] %vm2019, %v2460
  %2654 = vst.msk [vmem:[#allocation3 + $0x3a1] sm:$0xff] %vm2019, %v2461
  %2655 = vst.msk [vmem:[#allocation3 + $0x3b1] sm:$0xff] %vm2019, %v2462
  %2656 = vst.msk [vmem:[#allocation3 + $0x3c1] sm:$0xff] %vm2019, %v2463
  %2657 = vst.msk [vmem:[#allocation3 + $0x3d1] sm:$0xff] %vm2019, %v2464
  %2658 = vst.msk [vmem:[#allocation3 + $0x3e1] sm:$0xff] %vm2019, %v2465
  %2659 = vst.msk [vmem:[#allocation3 + $0x3f1] sm:$0xff] %vm2019, %v2466
  %v2660 = vld [vmem:[#allocation3] sm:$0xff]
  %v2661 = vld [vmem:[#allocation3 + $0x10] sm:$0xff]
  %v2662 = vld [vmem:[#allocation3 + $0x20] sm:$0xff]
  %v2663 = vld [vmem:[#allocation3 + $0x30] sm:$0xff]
  %v2664 = vld [vmem:[#allocation3 + $0x40] sm:$0xff]
  %v2665 = vld [vmem:[#allocation3 + $0x50] sm:$0xff]
  %v2666 = vld [vmem:[#allocation3 + $0x60] sm:$0xff]
  %v2667 = vld [vmem:[#allocation3 + $0x70] sm:$0xff]
  %v2668 = vld [vmem:[#allocation3 + $0x80] sm:$0xff]
  %v2669 = vld [vmem:[#allocation3 + $0x90] sm:$0xff]
  %v2670 = vld [vmem:[#allocation3 + $0xa0] sm:$0xff]
  %v2671 = vld [vmem:[#allocation3 + $0xb0] sm:$0xff]
  %v2672 = vld [vmem:[#allocation3 + $0xc0] sm:$0xff]
  %v2673 = vld [vmem:[#allocation3 + $0xd0] sm:$0xff]
  %v2674 = vld [vmem:[#allocation3 + $0xe0] sm:$0xff]
  %v2675 = vld [vmem:[#allocation3 + $0xf0] sm:$0xff]
  %v2676 = vld [vmem:[#allocation3 + $0x100] sm:$0xff]
  %v2677 = vld [vmem:[#allocation3 + $0x110] sm:$0xff]
  %v2678 = vld [vmem:[#allocation3 + $0x120] sm:$0xff]
  %v2679 = vld [vmem:[#allocation3 + $0x130] sm:$0xff]
  %v2680 = vld [vmem:[#allocation3 + $0x140] sm:$0xff]
  %v2681 = vld [vmem:[#allocation3 + $0x150] sm:$0xff]
  %v2682 = vld [vmem:[#allocation3 + $0x160] sm:$0xff]
  %v2683 = vld [vmem:[#allocation3 + $0x170] sm:$0xff]
  %v2684 = vld [vmem:[#allocation3 + $0x180] sm:$0xff]
  %v2685 = vld [vmem:[#allocation3 + $0x190] sm:$0xff]
  %v2686 = vld [vmem:[#allocation3 + $0x1a0] sm:$0xff]
  %v2687 = vld [vmem:[#allocation3 + $0x1b0] sm:$0xff]
  %v2688 = vld [vmem:[#allocation3 + $0x1c0] sm:$0xff]
  %v2689 = vld [vmem:[#allocation3 + $0x1d0] sm:$0xff]
  %v2690 = vld [vmem:[#allocation3 + $0x1e0] sm:$0xff]
  %v2691 = vld [vmem:[#allocation3 + $0x1f0] sm:$0xff]
  %v2692 = vld [vmem:[#allocation3 + $0x200] sm:$0xff]
  %v2693 = vld [vmem:[#allocation3 + $0x210] sm:$0xff]
  %v2694 = vld [vmem:[#allocation3 + $0x220] sm:$0xff]
  %v2695 = vld [vmem:[#allocation3 + $0x230] sm:$0xff]
  %v2696 = vld [vmem:[#allocation3 + $0x240] sm:$0xff]
  %v2697 = vld [vmem:[#allocation3 + $0x250] sm:$0xff]
  %v2698 = vld [vmem:[#allocation3 + $0x260] sm:$0xff]
  %v2699 = vld [vmem:[#allocation3 + $0x270] sm:$0xff]
  %v2700 = vld [vmem:[#allocation3 + $0x280] sm:$0xff]
  %v2701 = vld [vmem:[#allocation3 + $0x290] sm:$0xff]
  %v2702 = vld [vmem:[#allocation3 + $0x2a0] sm:$0xff]
  %v2703 = vld [vmem:[#allocation3 + $0x2b0] sm:$0xff]
  %v2704 = vld [vmem:[#allocation3 + $0x2c0] sm:$0xff]
  %v2705 = vld [vmem:[#allocation3 + $0x2d0] sm:$0xff]
  %v2706 = vld [vmem:[#allocation3 + $0x2e0] sm:$0xff]
  %v2707 = vld [vmem:[#allocation3 + $0x2f0] sm:$0xff]
  %v2708 = vld [vmem:[#allocation3 + $0x300] sm:$0xff]
  %v2709 = vld [vmem:[#allocation3 + $0x310] sm:$0xff]
  %v2710 = vld [vmem:[#allocation3 + $0x320] sm:$0xff]
  %v2711 = vld [vmem:[#allocation3 + $0x330] sm:$0xff]
  %v2712 = vld [vmem:[#allocation3 + $0x340] sm:$0xff]
  %v2713 = vld [vmem:[#allocation3 + $0x350] sm:$0xff]
  %v2714 = vld [vmem:[#allocation3 + $0x360] sm:$0xff]
  %v2715 = vld [vmem:[#allocation3 + $0x370] sm:$0xff]
  %v2716 = vld [vmem:[#allocation3 + $0x380] sm:$0xff]
  %v2717 = vld [vmem:[#allocation3 + $0x390] sm:$0xff]
  %v2718 = vld [vmem:[#allocation3 + $0x3a0] sm:$0xff]
  %v2719 = vld [vmem:[#allocation3 + $0x3b0] sm:$0xff]
  %v2720 = vld [vmem:[#allocation3 + $0x3c0] sm:$0xff]
  %v2721 = vld [vmem:[#allocation3 + $0x3d0] sm:$0xff]
  %v2722 = vld [vmem:[#allocation3 + $0x3e0] sm:$0xff]
  %v2723 = vld [vmem:[#allocation3 + $0x3f0] sm:$0xff]
  %v2724 = vld [vmem:[%s3] sm:$0xff]
  %v2725 = vld [vmem:[%s3 + $0x8] sm:$0xff]
  %v2726 = vld [vmem:[%s3 + $0x10] sm:$0xff]
  %v2727 = vld [vmem:[%s3 + $0x18] sm:$0xff]
  %v2728 = vld [vmem:[%s3 + $0x20] sm:$0xff]
  %v2729 = vld [vmem:[%s3 + $0x28] sm:$0xff]
  %v2730 = vld [vmem:[%s3 + $0x30] sm:$0xff]
  %v2731 = vld [vmem:[%s3 + $0x38] sm:$0xff]
  %v2732 = vld [vmem:[#allocation3 + $0x1] sm:$0xff]
  %v2733 = vld [vmem:[#allocation3 + $0x11] sm:$0xff]
  %v2734 = vld [vmem:[#allocation3 + $0x21] sm:$0xff]
  %v2735 = vld [vmem:[#allocation3 + $0x31] sm:$0xff]
  %v2736 = vld [vmem:[#allocation3 + $0x41] sm:$0xff]
  %v2737 = vld [vmem:[#allocation3 + $0x51] sm:$0xff]
  %v2738 = vld [vmem:[#allocation3 + $0x61] sm:$0xff]
  %v2739 = vld [vmem:[#allocation3 + $0x71] sm:$0xff]
  %v2740 = vld [vmem:[#allocation3 + $0x81] sm:$0xff]
  %v2741 = vld [vmem:[#allocation3 + $0x91] sm:$0xff]
  %v2742 = vld [vmem:[#allocation3 + $0xa1] sm:$0xff]
  %v2743 = vld [vmem:[#allocation3 + $0xb1] sm:$0xff]
  %v2744 = vld [vmem:[#allocation3 + $0xc1] sm:$0xff]
  %v2745 = vld [vmem:[#allocation3 + $0xd1] sm:$0xff]
  %v2746 = vld [vmem:[#allocation3 + $0xe1] sm:$0xff]
  %v2747 = vld [vmem:[#allocation3 + $0xf1] sm:$0xff]
  %v2748 = vld [vmem:[#allocation3 + $0x101] sm:$0xff]
  %v2749 = vld [vmem:[#allocation3 + $0x111] sm:$0xff]
  %v2750 = vld [vmem:[#allocation3 + $0x121] sm:$0xff]
  %v2751 = vld [vmem:[#allocation3 + $0x131] sm:$0xff]
  %v2752 = vld [vmem:[#allocation3 + $0x141] sm:$0xff]
  %v2753 = vld [vmem:[#allocation3 + $0x151] sm:$0xff]
  %v2754 = vld [vmem:[#allocation3 + $0x161] sm:$0xff]
  %v2755 = vld [vmem:[#allocation3 + $0x171] sm:$0xff]
  %v2756 = vld [vmem:[#allocation3 + $0x181] sm:$0xff]
  %v2757 = vld [vmem:[#allocation3 + $0x191] sm:$0xff]
  %v2758 = vld [vmem:[#allocation3 + $0x1a1] sm:$0xff]
  %v2759 = vld [vmem:[#allocation3 + $0x1b1] sm:$0xff]
  %v2760 = vld [vmem:[#allocation3 + $0x1c1] sm:$0xff]
  %v2761 = vld [vmem:[#allocation3 + $0x1d1] sm:$0xff]
  %v2762 = vld [vmem:[#allocation3 + $0x1e1] sm:$0xff]
  %v2763 = vld [vmem:[#allocation3 + $0x1f1] sm:$0xff]
  %v2764 = vld [vmem:[#allocation3 + $0x201] sm:$0xff]
  %v2765 = vld [vmem:[#allocation3 + $0x211] sm:$0xff]
  %v2766 = vld [vmem:[#allocation3 + $0x221] sm:$0xff]
  %v2767 = vld [vmem:[#allocation3 + $0x231] sm:$0xff]
  %v2768 = vld [vmem:[#allocation3 + $0x241] sm:$0xff]
  %v2769 = vld [vmem:[#allocation3 + $0x251] sm:$0xff]
  %v2770 = vld [vmem:[#allocation3 + $0x261] sm:$0xff]
  %v2771 = vld [vmem:[#allocation3 + $0x271] sm:$0xff]
  %v2772 = vld [vmem:[#allocation3 + $0x281] sm:$0xff]
  %v2773 = vld [vmem:[#allocation3 + $0x291] sm:$0xff]
  %v2774 = vld [vmem:[#allocation3 + $0x2a1] sm:$0xff]
  %v2775 = vld [vmem:[#allocation3 + $0x2b1] sm:$0xff]
  %v2776 = vld [vmem:[#allocation3 + $0x2c1] sm:$0xff]
  %v2777 = vld [vmem:[#allocation3 + $0x2d1] sm:$0xff]
  %v2778 = vld [vmem:[#allocation3 + $0x2e1] sm:$0xff]
  %v2779 = vld [vmem:[#allocation3 + $0x2f1] sm:$0xff]
  %v2780 = vld [vmem:[#allocation3 + $0x301] sm:$0xff]
  %v2781 = vld [vmem:[#allocation3 + $0x311] sm:$0xff]
  %v2782 = vld [vmem:[#allocation3 + $0x321] sm:$0xff]
  %v2783 = vld [vmem:[#allocation3 + $0x331] sm:$0xff]
  %v2784 = vld [vmem:[#allocation3 + $0x341] sm:$0xff]
  %v2785 = vld [vmem:[#allocation3 + $0x351] sm:$0xff]
  %v2786 = vld [vmem:[#allocation3 + $0x361] sm:$0xff]
  %v2787 = vld [vmem:[#allocation3 + $0x371] sm:$0xff]
  %v2788 = vld [vmem:[#allocation3 + $0x381] sm:$0xff]
  %v2789 = vld [vmem:[#allocation3 + $0x391] sm:$0xff]
  %v2790 = vld [vmem:[#allocation3 + $0x3a1] sm:$0xff]
  %v2791 = vld [vmem:[#allocation3 + $0x3b1] sm:$0xff]
  %v2792 = vld [vmem:[#allocation3 + $0x3c1] sm:$0xff]
  %v2793 = vld [vmem:[#allocation3 + $0x3d1] sm:$0xff]
  %v2794 = vld [vmem:[#allocation3 + $0x3e1] sm:$0xff]
  %v2795 = vld [vmem:[#allocation3 + $0x3f1] sm:$0xff]
  %s2796 = scalar_lea.vmem %s3, 64
  %v2797 = vld [vmem:[%s2796] sm:$0xff]
  %v2798 = vld [vmem:[%s2796 + $0x8] sm:$0xff]
  %v2799 = vld [vmem:[%s2796 + $0x10] sm:$0xff]
  %v2800 = vld [vmem:[%s2796 + $0x18] sm:$0xff]
  %v2801 = vld [vmem:[%s2796 + $0x20] sm:$0xff]
  %v2802 = vld [vmem:[%s2796 + $0x28] sm:$0xff]
  %v2803 = vld [vmem:[%s2796 + $0x30] sm:$0xff]
  %v2804 = vld [vmem:[%s2796 + $0x38] sm:$0xff]
  %v2806 = vsel %vm2019, %v2732, 0
  %v2809 = vsel %vm2019, %v2733, 0
  %v2812 = vsel %vm2019, %v2734, 0
  %v2815 = vsel %vm2019, %v2735, 0
  %v2818 = vsel %vm2019, %v2736, 0
  %v2821 = vsel %vm2019, %v2737, 0
  %v2824 = vsel %vm2019, %v2738, 0
  %v2827 = vsel %vm2019, %v2739, 0
  %v2830 = vsel %vm2019, %v2740, 0
  %v2833 = vsel %vm2019, %v2741, 0
  %v2836 = vsel %vm2019, %v2742, 0
  %v2839 = vsel %vm2019, %v2743, 0
  %v2842 = vsel %vm2019, %v2744, 0
  %v2845 = vsel %vm2019, %v2745, 0
  %v2848 = vsel %vm2019, %v2746, 0
  %v2851 = vsel %vm2019, %v2747, 0
  %v2854 = vsel %vm2019, %v2748, 0
  %v2857 = vsel %vm2019, %v2749, 0
  %v2860 = vsel %vm2019, %v2750, 0
  %v2863 = vsel %vm2019, %v2751, 0
  %v2866 = vsel %vm2019, %v2752, 0
  %v2869 = vsel %vm2019, %v2753, 0
  %v2872 = vsel %vm2019, %v2754, 0
  %v2875 = vsel %vm2019, %v2755, 0
  %v2878 = vsel %vm2019, %v2756, 0
  %v2881 = vsel %vm2019, %v2757, 0
  %v2884 = vsel %vm2019, %v2758, 0
  %v2887 = vsel %vm2019, %v2759, 0
  %v2890 = vsel %vm2019, %v2760, 0
  %v2893 = vsel %vm2019, %v2761, 0
  %v2896 = vsel %vm2019, %v2762, 0
  %v2899 = vsel %vm2019, %v2763, 0
  %v2902 = vsel %vm2019, %v2764, 0
  %v2905 = vsel %vm2019, %v2765, 0
  %v2908 = vsel %vm2019, %v2766, 0
  %v2911 = vsel %vm2019, %v2767, 0
  %v2914 = vsel %vm2019, %v2768, 0
  %v2917 = vsel %vm2019, %v2769, 0
  %v2920 = vsel %vm2019, %v2770, 0
  %v2923 = vsel %vm2019, %v2771, 0
  %v2926 = vsel %vm2019, %v2772, 0
  %v2929 = vsel %vm2019, %v2773, 0
  %v2932 = vsel %vm2019, %v2774, 0
  %v2935 = vsel %vm2019, %v2775, 0
  %v2938 = vsel %vm2019, %v2776, 0
  %v2941 = vsel %vm2019, %v2777, 0
  %v2944 = vsel %vm2019, %v2778, 0
  %v2947 = vsel %vm2019, %v2779, 0
  %v2950 = vsel %vm2019, %v2780, 0
  %v2953 = vsel %vm2019, %v2781, 0
  %v2956 = vsel %vm2019, %v2782, 0
  %v2959 = vsel %vm2019, %v2783, 0
  %v2962 = vsel %vm2019, %v2784, 0
  %v2965 = vsel %vm2019, %v2785, 0
  %v2968 = vsel %vm2019, %v2786, 0
  %v2971 = vsel %vm2019, %v2787, 0
  %v2974 = vsel %vm2019, %v2788, 0
  %v2977 = vsel %vm2019, %v2789, 0
  %v2980 = vsel %vm2019, %v2790, 0
  %v2983 = vsel %vm2019, %v2791, 0
  %v2986 = vsel %vm2019, %v2792, 0
  %v2989 = vsel %vm2019, %v2793, 0
  %v2992 = vsel %vm2019, %v2794, 0
  %v2995 = vsel %vm2019, %v2795, 0
  %2997 = vmatprep.subr.mxu0 0.0
  %2998 = vmatpush1.msra.mxu0 %v2797
  %2999 = vmatprep.subr.mxu0 0.0
  %3000 = vmatpush1.msra.mxu0 %v2798
  %3001 = vmatprep.subr.mxu0 0.0
  %3002 = vmatpush1.msra.mxu0 %v2799
  %3003 = vmatprep.subr.mxu0 0.0
  %3004 = vmatpush1.msra.mxu0 %v2800
  %3005 = vmatprep.subr.mxu0 0.0
  %3006 = vmatpush1.msra.mxu0 %v2801
  %3007 = vmatprep.subr.mxu0 0.0
  %3008 = vmatpush1.msra.mxu0 %v2802
  %3009 = vmatprep.subr.mxu0 0.0
  %3010 = vmatpush1.msra.mxu0 %v2803
  %3011 = vmatprep.subr.mxu0 0.0
  %3012 = vmatpush1.msra.mxu0 %v2804
  %3013 = vmatprep.subr.mxu0 0.0
  %3014 = vmatpush1.msra.mxu0 0.0
  %3015 = vmatprep.subr.mxu0 0.0
  %3016 = vmatpush1.msra.mxu0 0.0
  %3017 = vmatprep.subr.mxu0 0.0
  %3018 = vmatpush1.msra.mxu0 0.0
  %3019 = vmatprep.subr.mxu0 0.0
  %3020 = vmatpush1.msra.mxu0 0.0
  %3021 = vmatprep.subr.mxu0 0.0
  %3022 = vmatpush1.msra.mxu0 0.0
  %3023 = vmatprep.subr.mxu0 0.0
  %3024 = vmatpush1.msra.mxu0 0.0
  %3025 = vmatprep.subr.mxu0 0.0
  %3026 = vmatpush1.msra.mxu0 0.0
  %3027 = vmatprep.subr.mxu0 0.0
  %3028 = vmatpush1.msra.mxu0 0.0
  %3029 = vmatprep.subr.mxu0 0.0
  %3030 = vmatpush1.msra.mxu0 0.0
  %3031 = vmatprep.subr.mxu0 0.0
  %3032 = vmatpush1.msra.mxu0 0.0
  %3033 = vmatprep.subr.mxu0 0.0
  %3034 = vmatpush1.msra.mxu0 0.0
  %3035 = vmatprep.subr.mxu0 0.0
  %3036 = vmatpush1.msra.mxu0 0.0
  %3037 = vmatprep.subr.mxu0 0.0
  %3038 = vmatpush1.msra.mxu0 0.0
  %3039 = vmatprep.subr.mxu0 0.0
  %3040 = vmatpush1.msra.mxu0 0.0
  %3041 = vmatprep.subr.mxu0 0.0
  %3042 = vmatpush1.msra.mxu0 0.0
  %3043 = vmatprep.subr.mxu0 0.0
  %3044 = vmatpush1.msra.mxu0 0.0
  %3045 = vmatprep.subr.mxu0 0.0
  %3046 = vmatpush1.msra.mxu0 0.0
  %3047 = vmatprep.subr.mxu0 0.0
  %3048 = vmatpush1.msra.mxu0 0.0
  %3049 = vmatprep.subr.mxu0 0.0
  %3050 = vmatpush1.msra.mxu0 0.0
  %3051 = vmatprep.subr.mxu0 0.0
  %3052 = vmatpush1.msra.mxu0 0.0
  %3053 = vmatprep.subr.mxu0 0.0
  %3054 = vmatpush1.msra.mxu0 0.0
  %3055 = vmatprep.subr.mxu0 0.0
  %3056 = vmatpush1.msra.mxu0 0.0
  %3057 = vmatprep.subr.mxu0 0.0
  %3058 = vmatpush1.msra.mxu0 0.0
  %3059 = vmatprep.subr.mxu0 0.0
  %3060 = vmatpush1.msra.mxu0 0.0
  %3061 = vmatprep.mubr.f32.mxu0 0.0
  %3062 = vmatmul.mubr.f32.gmra.mrb[0].mxu0 %v2806
  %v3063 = vpop.f32.mrb[0].mxu0
  %v3064 = vadd.f32 0.0, %v3063
  %v3065 = vpop.f32.mrb[0].mxu0
  %3066 = vmatprep.mubr.f32.mxu0 0.0
  %3067 = vmatmul.mubr.f32.gmra.mrb[0].mxu0 %v2809
  %v3068 = vpop.f32.mrb[0].mxu0
  %v3069 = vadd.f32 0.0, %v3068
  %v3070 = vpop.f32.mrb[0].mxu0
  %3071 = vmatprep.mubr.f32.mxu0 0.0
  %3072 = vmatmul.mubr.f32.gmra.mrb[0].mxu0 %v2812
  %v3073 = vpop.f32.mrb[0].mxu0
  %v3074 = vadd.f32 0.0, %v3073
  %v3075 = vpop.f32.mrb[0].mxu0
  %3076 = vmatprep.mubr.f32.mxu0 0.0
  %3077 = vmatmul.mubr.f32.gmra.mrb[0].mxu0 %v2815
  %v3078 = vpop.f32.mrb[0].mxu0
  %v3079 = vadd.f32 0.0, %v3078
  %v3080 = vpop.f32.mrb[0].mxu0
  %3081 = vmatprep.mubr.f32.mxu0 0.0
  %3082 = vmatmul.mubr.f32.gmra.mrb[0].mxu0 %v2818
  %v3083 = vpop.f32.mrb[0].mxu0
  %v3084 = vadd.f32 0.0, %v3083
  %v3085 = vpop.f32.mrb[0].mxu0
  %3086 = vmatprep.mubr.f32.mxu0 0.0
  %3087 = vmatmul.mubr.f32.gmra.mrb[0].mxu0 %v2821
  %v3088 = vpop.f32.mrb[0].mxu0
  %v3089 = vadd.f32 0.0, %v3088
  %v3090 = vpop.f32.mrb[0].mxu0
  %3091 = vmatprep.mubr.f32.mxu0 0.0
  %3092 = vmatmul.mubr.f32.gmra.mrb[0].mxu0 %v2824
  %v3093 = vpop.f32.mrb[0].mxu0
  %v3094 = vadd.f32 0.0, %v3093
  %v3095 = vpop.f32.mrb[0].mxu0
  %3096 = vmatprep.mubr.f32.mxu0 0.0
  %3097 = vmatmul.mubr.f32.gmra.mrb[0].mxu0 %v2827
  %v3098 = vpop.f32.mrb[0].mxu0
  %v3099 = vadd.f32 0.0, %v3098
  %v3100 = vpop.f32.mrb[0].mxu0
  %3101 = vmatprep.mubr.f32.mxu0 0.0
  %3102 = vmatmul.mubr.f32.gmra.mrb[0].mxu0 %v2830
  %v3103 = vpop.f32.mrb[0].mxu0
  %v3104 = vadd.f32 0.0, %v3103
  %v3105 = vpop.f32.mrb[0].mxu0
  %3106 = vmatprep.mubr.f32.mxu0 0.0
  %3107 = vmatmul.mubr.f32.gmra.mrb[0].mxu0 %v2833
  %v3108 = vpop.f32.mrb[0].mxu0
  %v3109 = vadd.f32 0.0, %v3108
  %v3110 = vpop.f32.mrb[0].mxu0
  %3111 = vmatprep.mubr.f32.mxu0 0.0
  %3112 = vmatmul.mubr.f32.gmra.mrb[0].mxu0 %v2836
  %v3113 = vpop.f32.mrb[0].mxu0
  %v3114 = vadd.f32 0.0, %v3113
  %v3115 = vpop.f32.mrb[0].mxu0
  %3116 = vmatprep.mubr.f32.mxu0 0.0
  %3117 = vmatmul.mubr.f32.gmra.mrb[0].mxu0 %v2839
  %v3118 = vpop.f32.mrb[0].mxu0
  %v3119 = vadd.f32 0.0, %v3118
  %v3120 = vpop.f32.mrb[0].mxu0
  %3121 = vmatprep.mubr.f32.mxu0 0.0
  %3122 = vmatmul.mubr.f32.gmra.mrb[0].mxu0 %v2842
  %v3123 = vpop.f32.mrb[0].mxu0
  %v3124 = vadd.f32 0.0, %v3123
  %v3125 = vpop.f32.mrb[0].mxu0
  %3126 = vmatprep.mubr.f32.mxu0 0.0
  %3127 = vmatmul.mubr.f32.gmra.mrb[0].mxu0 %v2845
  %v3128 = vpop.f32.mrb[0].mxu0
  %v3129 = vadd.f32 0.0, %v3128
  %v3130 = vpop.f32.mrb[0].mxu0
  %3131 = vmatprep.mubr.f32.mxu0 0.0
  %3132 = vmatmul.mubr.f32.gmra.mrb[0].mxu0 %v2848
  %v3133 = vpop.f32.mrb[0].mxu0
  %v3134 = vadd.f32 0.0, %v3133
  %v3135 = vpop.f32.mrb[0].mxu0
  %3136 = vmatprep.mubr.f32.mxu0 0.0
  %3137 = vmatmul.mubr.f32.gmra.mrb[0].mxu0 %v2851
  %v3138 = vpop.f32.mrb[0].mxu0
  %v3139 = vadd.f32 0.0, %v3138
  %v3140 = vpop.f32.mrb[0].mxu0
  %3141 = vmatprep.mubr.f32.mxu0 0.0
  %3142 = vmatmul.mubr.f32.gmra.mrb[0].mxu0 %v2854
  %v3143 = vpop.f32.mrb[0].mxu0
  %v3144 = vadd.f32 0.0, %v3143
  %v3145 = vpop.f32.mrb[0].mxu0
  %3146 = vmatprep.mubr.f32.mxu0 0.0
  %3147 = vmatmul.mubr.f32.gmra.mrb[0].mxu0 %v2857
  %v3148 = vpop.f32.mrb[0].mxu0
  %v3149 = vadd.f32 0.0, %v3148
  %v3150 = vpop.f32.mrb[0].mxu0
  %3151 = vmatprep.mubr.f32.mxu0 0.0
  %3152 = vmatmul.mubr.f32.gmra.mrb[0].mxu0 %v2860
  %v3153 = vpop.f32.mrb[0].mxu0
  %v3154 = vadd.f32 0.0, %v3153
  %v3155 = vpop.f32.mrb[0].mxu0
  %3156 = vmatprep.mubr.f32.mxu0 0.0
  %3157 = vmatmul.mubr.f32.gmra.mrb[0].mxu0 %v2863
  %v3158 = vpop.f32.mrb[0].mxu0
  %v3159 = vadd.f32 0.0, %v3158
  %v3160 = vpop.f32.mrb[0].mxu0
  %3161 = vmatprep.mubr.f32.mxu0 0.0
  %3162 = vmatmul.mubr.f32.gmra.mrb[0].mxu0 %v2866
  %v3163 = vpop.f32.mrb[0].mxu0
  %v3164 = vadd.f32 0.0, %v3163
  %v3165 = vpop.f32.mrb[0].mxu0
  %3166 = vmatprep.mubr.f32.mxu0 0.0
  %3167 = vmatmul.mubr.f32.gmra.mrb[0].mxu0 %v2869
  %v3168 = vpop.f32.mrb[0].mxu0
  %v3169 = vadd.f32 0.0, %v3168
  %v3170 = vpop.f32.mrb[0].mxu0
  %3171 = vmatprep.mubr.f32.mxu0 0.0
  %3172 = vmatmul.mubr.f32.gmra.mrb[0].mxu0 %v2872
  %v3173 = vpop.f32.mrb[0].mxu0
  %v3174 = vadd.f32 0.0, %v3173
  %v3175 = vpop.f32.mrb[0].mxu0
  %3176 = vmatprep.mubr.f32.mxu0 0.0
  %3177 = vmatmul.mubr.f32.gmra.mrb[0].mxu0 %v2875
  %v3178 = vpop.f32.mrb[0].mxu0
  %v3179 = vadd.f32 0.0, %v3178
  %v3180 = vpop.f32.mrb[0].mxu0
  %3181 = vmatprep.mubr.f32.mxu0 0.0
  %3182 = vmatmul.mubr.f32.gmra.mrb[0].mxu0 %v2878
  %v3183 = vpop.f32.mrb[0].mxu0
  %v3184 = vadd.f32 0.0, %v3183
  %v3185 = vpop.f32.mrb[0].mxu0
  %3186 = vmatprep.mubr.f32.mxu0 0.0
  %3187 = vmatmul.mubr.f32.gmra.mrb[0].mxu0 %v2881
  %v3188 = vpop.f32.mrb[0].mxu0
  %v3189 = vadd.f32 0.0, %v3188
  %v3190 = vpop.f32.mrb[0].mxu0
  %3191 = vmatprep.mubr.f32.mxu0 0.0
  %3192 = vmatmul.mubr.f32.gmra.mrb[0].mxu0 %v2884
  %v3193 = vpop.f32.mrb[0].mxu0
  %v3194 = vadd.f32 0.0, %v3193
  %v3195 = vpop.f32.mrb[0].mxu0
  %3196 = vmatprep.mubr.f32.mxu0 0.0
  %3197 = vmatmul.mubr.f32.gmra.mrb[0].mxu0 %v2887
  %v3198 = vpop.f32.mrb[0].mxu0
  %v3199 = vadd.f32 0.0, %v3198
  %v3200 = vpop.f32.mrb[0].mxu0
  %3201 = vmatprep.mubr.f32.mxu0 0.0
  %3202 = vmatmul.mubr.f32.gmra.mrb[0].mxu0 %v2890
  %v3203 = vpop.f32.mrb[0].mxu0
  %v3204 = vadd.f32 0.0, %v3203
  %v3205 = vpop.f32.mrb[0].mxu0
  %3206 = vmatprep.mubr.f32.mxu0 0.0
  %3207 = vmatmul.mubr.f32.gmra.mrb[0].mxu0 %v2893
  %v3208 = vpop.f32.mrb[0].mxu0
  %v3209 = vadd.f32 0.0, %v3208
  %v3210 = vpop.f32.mrb[0].mxu0
  %3211 = vmatprep.mubr.f32.mxu0 0.0
  %3212 = vmatmul.mubr.f32.gmra.mrb[0].mxu0 %v2896
  %v3213 = vpop.f32.mrb[0].mxu0
  %v3214 = vadd.f32 0.0, %v3213
  %v3215 = vpop.f32.mrb[0].mxu0
  %3216 = vmatprep.mubr.f32.mxu0 0.0
  %3217 = vmatmul.mubr.f32.gmra.mrb[0].mxu0 %v2899
  %v3218 = vpop.f32.mrb[0].mxu0
  %v3219 = vadd.f32 0.0, %v3218
  %v3220 = vpop.f32.mrb[0].mxu0
  %3221 = vmatprep.mubr.f32.mxu0 0.0
  %3222 = vmatmul.mubr.f32.gmra.mrb[0].mxu0 %v2902
  %v3223 = vpop.f32.mrb[0].mxu0
  %v3224 = vadd.f32 0.0, %v3223
  %v3225 = vpop.f32.mrb[0].mxu0
  %3226 = vmatprep.mubr.f32.mxu0 0.0
  %3227 = vmatmul.mubr.f32.gmra.mrb[0].mxu0 %v2905
  %v3228 = vpop.f32.mrb[0].mxu0
  %v3229 = vadd.f32 0.0, %v3228
  %v3230 = vpop.f32.mrb[0].mxu0
  %3231 = vmatprep.mubr.f32.mxu0 0.0
  %3232 = vmatmul.mubr.f32.gmra.mrb[0].mxu0 %v2908
  %v3233 = vpop.f32.mrb[0].mxu0
  %v3234 = vadd.f32 0.0, %v3233
  %v3235 = vpop.f32.mrb[0].mxu0
  %3236 = vmatprep.mubr.f32.mxu0 0.0
  %3237 = vmatmul.mubr.f32.gmra.mrb[0].mxu0 %v2911
  %v3238 = vpop.f32.mrb[0].mxu0
  %v3239 = vadd.f32 0.0, %v3238
  %v3240 = vpop.f32.mrb[0].mxu0
  %3241 = vmatprep.mubr.f32.mxu0 0.0
  %3242 = vmatmul.mubr.f32.gmra.mrb[0].mxu0 %v2914
  %v3243 = vpop.f32.mrb[0].mxu0
  %v3244 = vadd.f32 0.0, %v3243
  %v3245 = vpop.f32.mrb[0].mxu0
  %3246 = vmatprep.mubr.f32.mxu0 0.0
  %3247 = vmatmul.mubr.f32.gmra.mrb[0].mxu0 %v2917
  %v3248 = vpop.f32.mrb[0].mxu0
  %v3249 = vadd.f32 0.0, %v3248
  %v3250 = vpop.f32.mrb[0].mxu0
  %3251 = vmatprep.mubr.f32.mxu0 0.0
  %3252 = vmatmul.mubr.f32.gmra.mrb[0].mxu0 %v2920
  %v3253 = vpop.f32.mrb[0].mxu0
  %v3254 = vadd.f32 0.0, %v3253
  %v3255 = vpop.f32.mrb[0].mxu0
  %3256 = vmatprep.mubr.f32.mxu0 0.0
  %3257 = vmatmul.mubr.f32.gmra.mrb[0].mxu0 %v2923
  %v3258 = vpop.f32.mrb[0].mxu0
  %v3259 = vadd.f32 0.0, %v3258
  %v3260 = vpop.f32.mrb[0].mxu0
  %3261 = vmatprep.mubr.f32.mxu0 0.0
  %3262 = vmatmul.mubr.f32.gmra.mrb[0].mxu0 %v2926
  %v3263 = vpop.f32.mrb[0].mxu0
  %v3264 = vadd.f32 0.0, %v3263
  %v3265 = vpop.f32.mrb[0].mxu0
  %3266 = vmatprep.mubr.f32.mxu0 0.0
  %3267 = vmatmul.mubr.f32.gmra.mrb[0].mxu0 %v2929
  %v3268 = vpop.f32.mrb[0].mxu0
  %v3269 = vadd.f32 0.0, %v3268
  %v3270 = vpop.f32.mrb[0].mxu0
  %3271 = vmatprep.mubr.f32.mxu0 0.0
  %3272 = vmatmul.mubr.f32.gmra.mrb[0].mxu0 %v2932
  %v3273 = vpop.f32.mrb[0].mxu0
  %v3274 = vadd.f32 0.0, %v3273
  %v3275 = vpop.f32.mrb[0].mxu0
  %3276 = vmatprep.mubr.f32.mxu0 0.0
  %3277 = vmatmul.mubr.f32.gmra.mrb[0].mxu0 %v2935
  %v3278 = vpop.f32.mrb[0].mxu0
  %v3279 = vadd.f32 0.0, %v3278
  %v3280 = vpop.f32.mrb[0].mxu0
  %3281 = vmatprep.mubr.f32.mxu0 0.0
  %3282 = vmatmul.mubr.f32.gmra.mrb[0].mxu0 %v2938
  %v3283 = vpop.f32.mrb[0].mxu0
  %v3284 = vadd.f32 0.0, %v3283
  %v3285 = vpop.f32.mrb[0].mxu0
  %3286 = vmatprep.mubr.f32.mxu0 0.0
  %3287 = vmatmul.mubr.f32.gmra.mrb[0].mxu0 %v2941
  %v3288 = vpop.f32.mrb[0].mxu0
  %v3289 = vadd.f32 0.0, %v3288
  %v3290 = vpop.f32.mrb[0].mxu0
  %3291 = vmatprep.mubr.f32.mxu0 0.0
  %3292 = vmatmul.mubr.f32.gmra.mrb[0].mxu0 %v2944
  %v3293 = vpop.f32.mrb[0].mxu0
  %v3294 = vadd.f32 0.0, %v3293
  %v3295 = vpop.f32.mrb[0].mxu0
  %3296 = vmatprep.mubr.f32.mxu0 0.0
  %3297 = vmatmul.mubr.f32.gmra.mrb[0].mxu0 %v2947
  %v3298 = vpop.f32.mrb[0].mxu0
  %v3299 = vadd.f32 0.0, %v3298
  %v3300 = vpop.f32.mrb[0].mxu0
  %3301 = vmatprep.mubr.f32.mxu0 0.0
  %3302 = vmatmul.mubr.f32.gmra.mrb[0].mxu0 %v2950
  %v3303 = vpop.f32.mrb[0].mxu0
  %v3304 = vadd.f32 0.0, %v3303
  %v3305 = vpop.f32.mrb[0].mxu0
  %3306 = vmatprep.mubr.f32.mxu0 0.0
  %3307 = vmatmul.mubr.f32.gmra.mrb[0].mxu0 %v2953
  %v3308 = vpop.f32.mrb[0].mxu0
  %v3309 = vadd.f32 0.0, %v3308
  %v3310 = vpop.f32.mrb[0].mxu0
  %3311 = vmatprep.mubr.f32.mxu0 0.0
  %3312 = vmatmul.mubr.f32.gmra.mrb[0].mxu0 %v2956
  %v3313 = vpop.f32.mrb[0].mxu0
  %v3314 = vadd.f32 0.0, %v3313
  %v3315 = vpop.f32.mrb[0].mxu0
  %3316 = vmatprep.mubr.f32.mxu0 0.0
  %3317 = vmatmul.mubr.f32.gmra.mrb[0].mxu0 %v2959
  %v3318 = vpop.f32.mrb[0].mxu0
  %v3319 = vadd.f32 0.0, %v3318
  %v3320 = vpop.f32.mrb[0].mxu0
  %3321 = vmatprep.mubr.f32.mxu0 0.0
  %3322 = vmatmul.mubr.f32.gmra.mrb[0].mxu0 %v2962
  %v3323 = vpop.f32.mrb[0].mxu0
  %v3324 = vadd.f32 0.0, %v3323
  %v3325 = vpop.f32.mrb[0].mxu0
  %3326 = vmatprep.mubr.f32.mxu0 0.0
  %3327 = vmatmul.mubr.f32.gmra.mrb[0].mxu0 %v2965
  %v3328 = vpop.f32.mrb[0].mxu0
  %v3329 = vadd.f32 0.0, %v3328
  %v3330 = vpop.f32.mrb[0].mxu0
  %3331 = vmatprep.mubr.f32.mxu0 0.0
  %3332 = vmatmul.mubr.f32.gmra.mrb[0].mxu0 %v2968
  %v3333 = vpop.f32.mrb[0].mxu0
  %v3334 = vadd.f32 0.0, %v3333
  %v3335 = vpop.f32.mrb[0].mxu0
  %3336 = vmatprep.mubr.f32.mxu0 0.0
  %3337 = vmatmul.mubr.f32.gmra.mrb[0].mxu0 %v2971
  %v3338 = vpop.f32.mrb[0].mxu0
  %v3339 = vadd.f32 0.0, %v3338
  %v3340 = vpop.f32.mrb[0].mxu0
  %3341 = vmatprep.mubr.f32.mxu0 0.0
  %3342 = vmatmul.mubr.f32.gmra.mrb[0].mxu0 %v2974
  %v3343 = vpop.f32.mrb[0].mxu0
  %v3344 = vadd.f32 0.0, %v3343
  %v3345 = vpop.f32.mrb[0].mxu0
  %3346 = vmatprep.mubr.f32.mxu0 0.0
  %3347 = vmatmul.mubr.f32.gmra.mrb[0].mxu0 %v2977
  %v3348 = vpop.f32.mrb[0].mxu0
  %v3349 = vadd.f32 0.0, %v3348
  %v3350 = vpop.f32.mrb[0].mxu0
  %3351 = vmatprep.mubr.f32.mxu0 0.0
  %3352 = vmatmul.mubr.f32.gmra.mrb[0].mxu0 %v2980
  %v3353 = vpop.f32.mrb[0].mxu0
  %v3354 = vadd.f32 0.0, %v3353
  %v3355 = vpop.f32.mrb[0].mxu0
  %3356 = vmatprep.mubr.f32.mxu0 0.0
  %3357 = vmatmul.mubr.f32.gmra.mrb[0].mxu0 %v2983
  %v3358 = vpop.f32.mrb[0].mxu0
  %v3359 = vadd.f32 0.0, %v3358
  %v3360 = vpop.f32.mrb[0].mxu0
  %3361 = vmatprep.mubr.f32.mxu0 0.0
  %3362 = vmatmul.mubr.f32.gmra.mrb[0].mxu0 %v2986
  %v3363 = vpop.f32.mrb[0].mxu0
  %v3364 = vadd.f32 0.0, %v3363
  %v3365 = vpop.f32.mrb[0].mxu0
  %3366 = vmatprep.mubr.f32.mxu0 0.0
  %3367 = vmatmul.mubr.f32.gmra.mrb[0].mxu0 %v2989
  %v3368 = vpop.f32.mrb[0].mxu0
  %v3369 = vadd.f32 0.0, %v3368
  %v3370 = vpop.f32.mrb[0].mxu0
  %3371 = vmatprep.mubr.f32.mxu0 0.0
  %3372 = vmatmul.mubr.f32.gmra.mrb[0].mxu0 %v2992
  %v3373 = vpop.f32.mrb[0].mxu0
  %v3374 = vadd.f32 0.0, %v3373
  %v3375 = vpop.f32.mrb[0].mxu0
  %3376 = vmatprep.mubr.f32.mxu0 0.0
  %3377 = vmatmul.mubr.f32.gmra.mrb[0].mxu0 %v2995
  %v3378 = vpop.f32.mrb[0].mxu0
  %v3379 = vadd.f32 0.0, %v3378
  %v3380 = vpop.f32.mrb[0].mxu0
  %3381 = vdwg.mxu0
  %v3383 = vsel %vm2019, %v2660, 0
  %v3386 = vsel %vm2019, %v2661, 0
  %v3389 = vsel %vm2019, %v2662, 0
  %v3392 = vsel %vm2019, %v2663, 0
  %v3395 = vsel %vm2019, %v2664, 0
  %v3398 = vsel %vm2019, %v2665, 0
  %v3401 = vsel %vm2019, %v2666, 0
  %v3404 = vsel %vm2019, %v2667, 0
  %v3407 = vsel %vm2019, %v2668, 0
  %v3410 = vsel %vm2019, %v2669, 0
  %v3413 = vsel %vm2019, %v2670, 0
  %v3416 = vsel %vm2019, %v2671, 0
  %v3419 = vsel %vm2019, %v2672, 0
  %v3422 = vsel %vm2019, %v2673, 0
  %v3425 = vsel %vm2019, %v2674, 0
  %v3428 = vsel %vm2019, %v2675, 0
  %v3431 = vsel %vm2019, %v2676, 0
  %v3434 = vsel %vm2019, %v2677, 0
  %v3437 = vsel %vm2019, %v2678, 0
  %v3440 = vsel %vm2019, %v2679, 0
  %v3443 = vsel %vm2019, %v2680, 0
  %v3446 = vsel %vm2019, %v2681, 0
  %v3449 = vsel %vm2019, %v2682, 0
  %v3452 = vsel %vm2019, %v2683, 0
  %v3455 = vsel %vm2019, %v2684, 0
  %v3458 = vsel %vm2019, %v2685, 0
  %v3461 = vsel %vm2019, %v2686, 0
  %v3464 = vsel %vm2019, %v2687, 0
  %v3467 = vsel %vm2019, %v2688, 0
  %v3470 = vsel %vm2019, %v2689, 0
  %v3473 = vsel %vm2019, %v2690, 0
  %v3476 = vsel %vm2019, %v2691, 0
  %v3479 = vsel %vm2019, %v2692, 0
  %v3482 = vsel %vm2019, %v2693, 0
  %v3485 = vsel %vm2019, %v2694, 0
  %v3488 = vsel %vm2019, %v2695, 0
  %v3491 = vsel %vm2019, %v2696, 0
  %v3494 = vsel %vm2019, %v2697, 0
  %v3497 = vsel %vm2019, %v2698, 0
  %v3500 = vsel %vm2019, %v2699, 0
  %v3503 = vsel %vm2019, %v2700, 0
  %v3506 = vsel %vm2019, %v2701, 0
  %v3509 = vsel %vm2019, %v2702, 0
  %v3512 = vsel %vm2019, %v2703, 0
  %v3515 = vsel %vm2019, %v2704, 0
  %v3518 = vsel %vm2019, %v2705, 0
  %v3521 = vsel %vm2019, %v2706, 0
  %v3524 = vsel %vm2019, %v2707, 0
  %v3527 = vsel %vm2019, %v2708, 0
  %v3530 = vsel %vm2019, %v2709, 0
  %v3533 = vsel %vm2019, %v2710, 0
  %v3536 = vsel %vm2019, %v2711, 0
  %v3539 = vsel %vm2019, %v2712, 0
  %v3542 = vsel %vm2019, %v2713, 0
  %v3545 = vsel %vm2019, %v2714, 0
  %v3548 = vsel %vm2019, %v2715, 0
  %v3551 = vsel %vm2019, %v2716, 0
  %v3554 = vsel %vm2019, %v2717, 0
  %v3557 = vsel %vm2019, %v2718, 0
  %v3560 = vsel %vm2019, %v2719, 0
  %v3563 = vsel %vm2019, %v2720, 0
  %v3566 = vsel %vm2019, %v2721, 0
  %v3569 = vsel %vm2019, %v2722, 0
  %v3572 = vsel %vm2019, %v2723, 0
  %3574 = vmatprep.subr.mxu0 0.0
  %3575 = vmatpush1.msra.mxu0 %v2724
  %3576 = vmatprep.subr.mxu0 0.0
  %3577 = vmatpush1.msra.mxu0 %v2725
  %3578 = vmatprep.subr.mxu0 0.0
  %3579 = vmatpush1.msra.mxu0 %v2726
  %3580 = vmatprep.subr.mxu0 0.0
  %3581 = vmatpush1.msra.mxu0 %v2727
  %3582 = vmatprep.subr.mxu0 0.0
  %3583 = vmatpush1.msra.mxu0 %v2728
  %3584 = vmatprep.subr.mxu0 0.0
  %3585 = vmatpush1.msra.mxu0 %v2729
  %3586 = vmatprep.subr.mxu0 0.0
  %3587 = vmatpush1.msra.mxu0 %v2730
  %3588 = vmatprep.subr.mxu0 0.0
  %3589 = vmatpush1.msra.mxu0 %v2731
  %3590 = vmatprep.subr.mxu0 0.0
  %3591 = vmatpush1.msra.mxu0 0.0
  %3592 = vmatprep.subr.mxu0 0.0
  %3593 = vmatpush1.msra.mxu0 0.0
  %3594 = vmatprep.subr.mxu0 0.0
  %3595 = vmatpush1.msra.mxu0 0.0
  %3596 = vmatprep.subr.mxu0 0.0
  %3597 = vmatpush1.msra.mxu0 0.0
  %3598 = vmatprep.subr.mxu0 0.0
  %3599 = vmatpush1.msra.mxu0 0.0
  %3600 = vmatprep.subr.mxu0 0.0
  %3601 = vmatpush1.msra.mxu0 0.0
  %3602 = vmatprep.subr.mxu0 0.0
  %3603 = vmatpush1.msra.mxu0 0.0
  %3604 = vmatprep.subr.mxu0 0.0
  %3605 = vmatpush1.msra.mxu0 0.0
  %3606 = vmatprep.subr.mxu0 0.0
  %3607 = vmatpush1.msra.mxu0 0.0
  %3608 = vmatprep.subr.mxu0 0.0
  %3609 = vmatpush1.msra.mxu0 0.0
  %3610 = vmatprep.subr.mxu0 0.0
  %3611 = vmatpush1.msra.mxu0 0.0
  %3612 = vmatprep.subr.mxu0 0.0
  %3613 = vmatpush1.msra.mxu0 0.0
  %3614 = vmatprep.subr.mxu0 0.0
  %3615 = vmatpush1.msra.mxu0 0.0
  %3616 = vmatprep.subr.mxu0 0.0
  %3617 = vmatpush1.msra.mxu0 0.0
  %3618 = vmatprep.subr.mxu0 0.0
  %3619 = vmatpush1.msra.mxu0 0.0
  %3620 = vmatprep.subr.mxu0 0.0
  %3621 = vmatpush1.msra.mxu0 0.0
  %3622 = vmatprep.subr.mxu0 0.0
  %3623 = vmatpush1.msra.mxu0 0.0
  %3624 = vmatprep.subr.mxu0 0.0
  %3625 = vmatpush1.msra.mxu0 0.0
  %3626 = vmatprep.subr.mxu0 0.0
  %3627 = vmatpush1.msra.mxu0 0.0
  %3628 = vmatprep.subr.mxu0 0.0
  %3629 = vmatpush1.msra.mxu0 0.0
  %3630 = vmatprep.subr.mxu0 0.0
  %3631 = vmatpush1.msra.mxu0 0.0
  %3632 = vmatprep.subr.mxu0 0.0
  %3633 = vmatpush1.msra.mxu0 0.0
  %3634 = vmatprep.subr.mxu0 0.0
  %3635 = vmatpush1.msra.mxu0 0.0
  %3636 = vmatprep.subr.mxu0 0.0
  %3637 = vmatpush1.msra.mxu0 0.0
  %3638 = vmatprep.mubr.f32.mxu0 0.0
  %3639 = vmatmul.mubr.f32.gmra.mrb[0].mxu0 %v3383
  %v3640 = vpop.f32.mrb[0].mxu0
  %v3641 = vadd.f32 %v3064, %v3640
  %v3642 = vpop.f32.mrb[0].mxu0
  %3643 = vmatprep.mubr.f32.mxu0 0.0
  %3644 = vmatmul.mubr.f32.gmra.mrb[0].mxu0 %v3386
  %v3645 = vpop.f32.mrb[0].mxu0
  %v3646 = vadd.f32 %v3069, %v3645
  %v3647 = vpop.f32.mrb[0].mxu0
  %3648 = vmatprep.mubr.f32.mxu0 0.0
  %3649 = vmatmul.mubr.f32.gmra.mrb[0].mxu0 %v3389
  %v3650 = vpop.f32.mrb[0].mxu0
  %v3651 = vadd.f32 %v3074, %v3650
  %v3652 = vpop.f32.mrb[0].mxu0
  %3653 = vmatprep.mubr.f32.mxu0 0.0
  %3654 = vmatmul.mubr.f32.gmra.mrb[0].mxu0 %v3392
  %v3655 = vpop.f32.mrb[0].mxu0
  %v3656 = vadd.f32 %v3079, %v3655
  %v3657 = vpop.f32.mrb[0].mxu0
  %3658 = vmatprep.mubr.f32.mxu0 0.0
  %3659 = vmatmul.mubr.f32.gmra.mrb[0].mxu0 %v3395
  %v3660 = vpop.f32.mrb[0].mxu0
  %v3661 = vadd.f32 %v3084, %v3660
  %v3662 = vpop.f32.mrb[0].mxu0
  %3663 = vmatprep.mubr.f32.mxu0 0.0
  %3664 = vmatmul.mubr.f32.gmra.mrb[0].mxu0 %v3398
  %v3665 = vpop.f32.mrb[0].mxu0
  %v3666 = vadd.f32 %v3089, %v3665
  %v3667 = vpop.f32.mrb[0].mxu0
  %3668 = vmatprep.mubr.f32.mxu0 0.0
  %3669 = vmatmul.mubr.f32.gmra.mrb[0].mxu0 %v3401
  %v3670 = vpop.f32.mrb[0].mxu0
  %v3671 = vadd.f32 %v3094, %v3670
  %v3672 = vpop.f32.mrb[0].mxu0
  %3673 = vmatprep.mubr.f32.mxu0 0.0
  %3674 = vmatmul.mubr.f32.gmra.mrb[0].mxu0 %v3404
  %v3675 = vpop.f32.mrb[0].mxu0
  %v3676 = vadd.f32 %v3099, %v3675
  %v3677 = vpop.f32.mrb[0].mxu0
  %3678 = vmatprep.mubr.f32.mxu0 0.0
  %3679 = vmatmul.mubr.f32.gmra.mrb[0].mxu0 %v3407
  %v3680 = vpop.f32.mrb[0].mxu0
  %v3681 = vadd.f32 %v3104, %v3680
  %v3682 = vpop.f32.mrb[0].mxu0
  %3683 = vmatprep.mubr.f32.mxu0 0.0
  %3684 = vmatmul.mubr.f32.gmra.mrb[0].mxu0 %v3410
  %v3685 = vpop.f32.mrb[0].mxu0
  %v3686 = vadd.f32 %v3109, %v3685
  %v3687 = vpop.f32.mrb[0].mxu0
  %3688 = vmatprep.mubr.f32.mxu0 0.0
  %3689 = vmatmul.mubr.f32.gmra.mrb[0].mxu0 %v3413
  %v3690 = vpop.f32.mrb[0].mxu0
  %v3691 = vadd.f32 %v3114, %v3690
  %v3692 = vpop.f32.mrb[0].mxu0
  %3693 = vmatprep.mubr.f32.mxu0 0.0
  %3694 = vmatmul.mubr.f32.gmra.mrb[0].mxu0 %v3416
  %v3695 = vpop.f32.mrb[0].mxu0
  %v3696 = vadd.f32 %v3119, %v3695
  %v3697 = vpop.f32.mrb[0].mxu0
  %3698 = vmatprep.mubr.f32.mxu0 0.0
  %3699 = vmatmul.mubr.f32.gmra.mrb[0].mxu0 %v3419
  %v3700 = vpop.f32.mrb[0].mxu0
  %v3701 = vadd.f32 %v3124, %v3700
  %v3702 = vpop.f32.mrb[0].mxu0
  %3703 = vmatprep.mubr.f32.mxu0 0.0
  %3704 = vmatmul.mubr.f32.gmra.mrb[0].mxu0 %v3422
  %v3705 = vpop.f32.mrb[0].mxu0
  %v3706 = vadd.f32 %v3129, %v3705
  %v3707 = vpop.f32.mrb[0].mxu0
  %3708 = vmatprep.mubr.f32.mxu0 0.0
  %3709 = vmatmul.mubr.f32.gmra.mrb[0].mxu0 %v3425
  %v3710 = vpop.f32.mrb[0].mxu0
  %v3711 = vadd.f32 %v3134, %v3710
  %v3712 = vpop.f32.mrb[0].mxu0
  %3713 = vmatprep.mubr.f32.mxu0 0.0
  %3714 = vmatmul.mubr.f32.gmra.mrb[0].mxu0 %v3428
  %v3715 = vpop.f32.mrb[0].mxu0
  %v3716 = vadd.f32 %v3139, %v3715
  %v3717 = vpop.f32.mrb[0].mxu0
  %3718 = vmatprep.mubr.f32.mxu0 0.0
  %3719 = vmatmul.mubr.f32.gmra.mrb[0].mxu0 %v3431
  %v3720 = vpop.f32.mrb[0].mxu0
  %v3721 = vadd.f32 %v3144, %v3720
  %v3722 = vpop.f32.mrb[0].mxu0
  %3723 = vmatprep.mubr.f32.mxu0 0.0
  %3724 = vmatmul.mubr.f32.gmra.mrb[0].mxu0 %v3434
  %v3725 = vpop.f32.mrb[0].mxu0
  %v3726 = vadd.f32 %v3149, %v3725
  %v3727 = vpop.f32.mrb[0].mxu0
  %3728 = vmatprep.mubr.f32.mxu0 0.0
  %3729 = vmatmul.mubr.f32.gmra.mrb[0].mxu0 %v3437
  %v3730 = vpop.f32.mrb[0].mxu0
  %v3731 = vadd.f32 %v3154, %v3730
  %v3732 = vpop.f32.mrb[0].mxu0
  %3733 = vmatprep.mubr.f32.mxu0 0.0
  %3734 = vmatmul.mubr.f32.gmra.mrb[0].mxu0 %v3440
  %v3735 = vpop.f32.mrb[0].mxu0
  %v3736 = vadd.f32 %v3159, %v3735
  %v3737 = vpop.f32.mrb[0].mxu0
  %3738 = vmatprep.mubr.f32.mxu0 0.0
  %3739 = vmatmul.mubr.f32.gmra.mrb[0].mxu0 %v3443
  %v3740 = vpop.f32.mrb[0].mxu0
  %v3741 = vadd.f32 %v3164, %v3740
  %v3742 = vpop.f32.mrb[0].mxu0
  %3743 = vmatprep.mubr.f32.mxu0 0.0
  %3744 = vmatmul.mubr.f32.gmra.mrb[0].mxu0 %v3446
  %v3745 = vpop.f32.mrb[0].mxu0
  %v3746 = vadd.f32 %v3169, %v3745
  %v3747 = vpop.f32.mrb[0].mxu0
  %3748 = vmatprep.mubr.f32.mxu0 0.0
  %3749 = vmatmul.mubr.f32.gmra.mrb[0].mxu0 %v3449
  %v3750 = vpop.f32.mrb[0].mxu0
  %v3751 = vadd.f32 %v3174, %v3750
  %v3752 = vpop.f32.mrb[0].mxu0
  %3753 = vmatprep.mubr.f32.mxu0 0.0
  %3754 = vmatmul.mubr.f32.gmra.mrb[0].mxu0 %v3452
  %v3755 = vpop.f32.mrb[0].mxu0
  %v3756 = vadd.f32 %v3179, %v3755
  %v3757 = vpop.f32.mrb[0].mxu0
  %3758 = vmatprep.mubr.f32.mxu0 0.0
  %3759 = vmatmul.mubr.f32.gmra.mrb[0].mxu0 %v3455
  %v3760 = vpop.f32.mrb[0].mxu0
  %v3761 = vadd.f32 %v3184, %v3760
  %v3762 = vpop.f32.mrb[0].mxu0
  %3763 = vmatprep.mubr.f32.mxu0 0.0
  %3764 = vmatmul.mubr.f32.gmra.mrb[0].mxu0 %v3458
  %v3765 = vpop.f32.mrb[0].mxu0
  %v3766 = vadd.f32 %v3189, %v3765
  %v3767 = vpop.f32.mrb[0].mxu0
  %3768 = vmatprep.mubr.f32.mxu0 0.0
  %3769 = vmatmul.mubr.f32.gmra.mrb[0].mxu0 %v3461
  %v3770 = vpop.f32.mrb[0].mxu0
  %v3771 = vadd.f32 %v3194, %v3770
  %v3772 = vpop.f32.mrb[0].mxu0
  %3773 = vmatprep.mubr.f32.mxu0 0.0
  %3774 = vmatmul.mubr.f32.gmra.mrb[0].mxu0 %v3464
  %v3775 = vpop.f32.mrb[0].mxu0
  %v3776 = vadd.f32 %v3199, %v3775
  %v3777 = vpop.f32.mrb[0].mxu0
  %3778 = vmatprep.mubr.f32.mxu0 0.0
  %3779 = vmatmul.mubr.f32.gmra.mrb[0].mxu0 %v3467
  %v3780 = vpop.f32.mrb[0].mxu0
  %v3781 = vadd.f32 %v3204, %v3780
  %v3782 = vpop.f32.mrb[0].mxu0
  %3783 = vmatprep.mubr.f32.mxu0 0.0
  %3784 = vmatmul.mubr.f32.gmra.mrb[0].mxu0 %v3470
  %v3785 = vpop.f32.mrb[0].mxu0
  %v3786 = vadd.f32 %v3209, %v3785
  %v3787 = vpop.f32.mrb[0].mxu0
  %3788 = vmatprep.mubr.f32.mxu0 0.0
  %3789 = vmatmul.mubr.f32.gmra.mrb[0].mxu0 %v3473
  %v3790 = vpop.f32.mrb[0].mxu0
  %v3791 = vadd.f32 %v3214, %v3790
  %v3792 = vpop.f32.mrb[0].mxu0
  %3793 = vmatprep.mubr.f32.mxu0 0.0
  %3794 = vmatmul.mubr.f32.gmra.mrb[0].mxu0 %v3476
  %v3795 = vpop.f32.mrb[0].mxu0
  %v3796 = vadd.f32 %v3219, %v3795
  %v3797 = vpop.f32.mrb[0].mxu0
  %3798 = vmatprep.mubr.f32.mxu0 0.0
  %3799 = vmatmul.mubr.f32.gmra.mrb[0].mxu0 %v3479
  %v3800 = vpop.f32.mrb[0].mxu0
  %v3801 = vadd.f32 %v3224, %v3800
  %v3802 = vpop.f32.mrb[0].mxu0
  %3803 = vmatprep.mubr.f32.mxu0 0.0
  %3804 = vmatmul.mubr.f32.gmra.mrb[0].mxu0 %v3482
  %v3805 = vpop.f32.mrb[0].mxu0
  %v3806 = vadd.f32 %v3229, %v3805
  %v3807 = vpop.f32.mrb[0].mxu0
  %3808 = vmatprep.mubr.f32.mxu0 0.0
  %3809 = vmatmul.mubr.f32.gmra.mrb[0].mxu0 %v3485
  %v3810 = vpop.f32.mrb[0].mxu0
  %v3811 = vadd.f32 %v3234, %v3810
  %v3812 = vpop.f32.mrb[0].mxu0
  %3813 = vmatprep.mubr.f32.mxu0 0.0
  %3814 = vmatmul.mubr.f32.gmra.mrb[0].mxu0 %v3488
  %v3815 = vpop.f32.mrb[0].mxu0
  %v3816 = vadd.f32 %v3239, %v3815
  %v3817 = vpop.f32.mrb[0].mxu0
  %3818 = vmatprep.mubr.f32.mxu0 0.0
  %3819 = vmatmul.mubr.f32.gmra.mrb[0].mxu0 %v3491
  %v3820 = vpop.f32.mrb[0].mxu0
  %v3821 = vadd.f32 %v3244, %v3820
  %v3822 = vpop.f32.mrb[0].mxu0
  %3823 = vmatprep.mubr.f32.mxu0 0.0
  %3824 = vmatmul.mubr.f32.gmra.mrb[0].mxu0 %v3494
  %v3825 = vpop.f32.mrb[0].mxu0
  %v3826 = vadd.f32 %v3249, %v3825
  %v3827 = vpop.f32.mrb[0].mxu0
  %3828 = vmatprep.mubr.f32.mxu0 0.0
  %3829 = vmatmul.mubr.f32.gmra.mrb[0].mxu0 %v3497
  %v3830 = vpop.f32.mrb[0].mxu0
  %v3831 = vadd.f32 %v3254, %v3830
  %v3832 = vpop.f32.mrb[0].mxu0
  %3833 = vmatprep.mubr.f32.mxu0 0.0
  %3834 = vmatmul.mubr.f32.gmra.mrb[0].mxu0 %v3500
  %v3835 = vpop.f32.mrb[0].mxu0
  %v3836 = vadd.f32 %v3259, %v3835
  %v3837 = vpop.f32.mrb[0].mxu0
  %3838 = vmatprep.mubr.f32.mxu0 0.0
  %3839 = vmatmul.mubr.f32.gmra.mrb[0].mxu0 %v3503
  %v3840 = vpop.f32.mrb[0].mxu0
  %v3841 = vadd.f32 %v3264, %v3840
  %v3842 = vpop.f32.mrb[0].mxu0
  %3843 = vmatprep.mubr.f32.mxu0 0.0
  %3844 = vmatmul.mubr.f32.gmra.mrb[0].mxu0 %v3506
  %v3845 = vpop.f32.mrb[0].mxu0
  %v3846 = vadd.f32 %v3269, %v3845
  %v3847 = vpop.f32.mrb[0].mxu0
  %3848 = vmatprep.mubr.f32.mxu0 0.0
  %3849 = vmatmul.mubr.f32.gmra.mrb[0].mxu0 %v3509
  %v3850 = vpop.f32.mrb[0].mxu0
  %v3851 = vadd.f32 %v3274, %v3850
  %v3852 = vpop.f32.mrb[0].mxu0
  %3853 = vmatprep.mubr.f32.mxu0 0.0
  %3854 = vmatmul.mubr.f32.gmra.mrb[0].mxu0 %v3512
  %v3855 = vpop.f32.mrb[0].mxu0
  %v3856 = vadd.f32 %v3279, %v3855
  %v3857 = vpop.f32.mrb[0].mxu0
  %3858 = vmatprep.mubr.f32.mxu0 0.0
  %3859 = vmatmul.mubr.f32.gmra.mrb[0].mxu0 %v3515
  %v3860 = vpop.f32.mrb[0].mxu0
  %v3861 = vadd.f32 %v3284, %v3860
  %v3862 = vpop.f32.mrb[0].mxu0
  %3863 = vmatprep.mubr.f32.mxu0 0.0
  %3864 = vmatmul.mubr.f32.gmra.mrb[0].mxu0 %v3518
  %v3865 = vpop.f32.mrb[0].mxu0
  %v3866 = vadd.f32 %v3289, %v3865
  %v3867 = vpop.f32.mrb[0].mxu0
  %3868 = vmatprep.mubr.f32.mxu0 0.0
  %3869 = vmatmul.mubr.f32.gmra.mrb[0].mxu0 %v3521
  %v3870 = vpop.f32.mrb[0].mxu0
  %v3871 = vadd.f32 %v3294, %v3870
  %v3872 = vpop.f32.mrb[0].mxu0
  %3873 = vmatprep.mubr.f32.mxu0 0.0
  %3874 = vmatmul.mubr.f32.gmra.mrb[0].mxu0 %v3524
  %v3875 = vpop.f32.mrb[0].mxu0
  %v3876 = vadd.f32 %v3299, %v3875
  %v3877 = vpop.f32.mrb[0].mxu0
  %3878 = vmatprep.mubr.f32.mxu0 0.0
  %3879 = vmatmul.mubr.f32.gmra.mrb[0].mxu0 %v3527
  %v3880 = vpop.f32.mrb[0].mxu0
  %v3881 = vadd.f32 %v3304, %v3880
  %v3882 = vpop.f32.mrb[0].mxu0
  %3883 = vmatprep.mubr.f32.mxu0 0.0
  %3884 = vmatmul.mubr.f32.gmra.mrb[0].mxu0 %v3530
  %v3885 = vpop.f32.mrb[0].mxu0
  %v3886 = vadd.f32 %v3309, %v3885
  %v3887 = vpop.f32.mrb[0].mxu0
  %3888 = vmatprep.mubr.f32.mxu0 0.0
  %3889 = vmatmul.mubr.f32.gmra.mrb[0].mxu0 %v3533
  %v3890 = vpop.f32.mrb[0].mxu0
  %v3891 = vadd.f32 %v3314, %v3890
  %v3892 = vpop.f32.mrb[0].mxu0
  %3893 = vmatprep.mubr.f32.mxu0 0.0
  %3894 = vmatmul.mubr.f32.gmra.mrb[0].mxu0 %v3536
  %v3895 = vpop.f32.mrb[0].mxu0
  %v3896 = vadd.f32 %v3319, %v3895
  %v3897 = vpop.f32.mrb[0].mxu0
  %3898 = vmatprep.mubr.f32.mxu0 0.0
  %3899 = vmatmul.mubr.f32.gmra.mrb[0].mxu0 %v3539
  %v3900 = vpop.f32.mrb[0].mxu0
  %v3901 = vadd.f32 %v3324, %v3900
  %v3902 = vpop.f32.mrb[0].mxu0
  %3903 = vmatprep.mubr.f32.mxu0 0.0
  %3904 = vmatmul.mubr.f32.gmra.mrb[0].mxu0 %v3542
  %v3905 = vpop.f32.mrb[0].mxu0
  %v3906 = vadd.f32 %v3329, %v3905
  %v3907 = vpop.f32.mrb[0].mxu0
  %3908 = vmatprep.mubr.f32.mxu0 0.0
  %3909 = vmatmul.mubr.f32.gmra.mrb[0].mxu0 %v3545
  %v3910 = vpop.f32.mrb[0].mxu0
  %v3911 = vadd.f32 %v3334, %v3910
  %v3912 = vpop.f32.mrb[0].mxu0
  %3913 = vmatprep.mubr.f32.mxu0 0.0
  %3914 = vmatmul.mubr.f32.gmra.mrb[0].mxu0 %v3548
  %v3915 = vpop.f32.mrb[0].mxu0
  %v3916 = vadd.f32 %v3339, %v3915
  %v3917 = vpop.f32.mrb[0].mxu0
  %3918 = vmatprep.mubr.f32.mxu0 0.0
  %3919 = vmatmul.mubr.f32.gmra.mrb[0].mxu0 %v3551
  %v3920 = vpop.f32.mrb[0].mxu0
  %v3921 = vadd.f32 %v3344, %v3920
  %v3922 = vpop.f32.mrb[0].mxu0
  %3923 = vmatprep.mubr.f32.mxu0 0.0
  %3924 = vmatmul.mubr.f32.gmra.mrb[0].mxu0 %v3554
  %v3925 = vpop.f32.mrb[0].mxu0
  %v3926 = vadd.f32 %v3349, %v3925
  %v3927 = vpop.f32.mrb[0].mxu0
  %3928 = vmatprep.mubr.f32.mxu0 0.0
  %3929 = vmatmul.mubr.f32.gmra.mrb[0].mxu0 %v3557
  %v3930 = vpop.f32.mrb[0].mxu0
  %v3931 = vadd.f32 %v3354, %v3930
  %v3932 = vpop.f32.mrb[0].mxu0
  %3933 = vmatprep.mubr.f32.mxu0 0.0
  %3934 = vmatmul.mubr.f32.gmra.mrb[0].mxu0 %v3560
  %v3935 = vpop.f32.mrb[0].mxu0
  %v3936 = vadd.f32 %v3359, %v3935
  %v3937 = vpop.f32.mrb[0].mxu0
  %3938 = vmatprep.mubr.f32.mxu0 0.0
  %3939 = vmatmul.mubr.f32.gmra.mrb[0].mxu0 %v3563
  %v3940 = vpop.f32.mrb[0].mxu0
  %v3941 = vadd.f32 %v3364, %v3940
  %v3942 = vpop.f32.mrb[0].mxu0
  %3943 = vmatprep.mubr.f32.mxu0 0.0
  %3944 = vmatmul.mubr.f32.gmra.mrb[0].mxu0 %v3566
  %v3945 = vpop.f32.mrb[0].mxu0
  %v3946 = vadd.f32 %v3369, %v3945
  %v3947 = vpop.f32.mrb[0].mxu0
  %3948 = vmatprep.mubr.f32.mxu0 0.0
  %3949 = vmatmul.mubr.f32.gmra.mrb[0].mxu0 %v3569
  %v3950 = vpop.f32.mrb[0].mxu0
  %v3951 = vadd.f32 %v3374, %v3950
  %v3952 = vpop.f32.mrb[0].mxu0
  %3953 = vmatprep.mubr.f32.mxu0 0.0
  %3954 = vmatmul.mubr.f32.gmra.mrb[0].mxu0 %v3572
  %v3955 = vpop.f32.mrb[0].mxu0
  %v3956 = vadd.f32 %v3379, %v3955
  %v3957 = vpop.f32.mrb[0].mxu0
  %3958 = vdwg.mxu0
  %v3959 = vld [vmem:[#allocation3 + $0x2] sm:$0xff]
  %v3960 = vld [vmem:[#allocation3 + $0x12] sm:$0xff]
  %v3961 = vld [vmem:[#allocation3 + $0x22] sm:$0xff]
  %v3962 = vld [vmem:[#allocation3 + $0x32] sm:$0xff]
  %v3963 = vld [vmem:[#allocation3 + $0x42] sm:$0xff]
  %v3964 = vld [vmem:[#allocation3 + $0x52] sm:$0xff]
  %v3965 = vld [vmem:[#allocation3 + $0x62] sm:$0xff]
  %v3966 = vld [vmem:[#allocation3 + $0x72] sm:$0xff]
  %v3967 = vld [vmem:[#allocation3 + $0x82] sm:$0xff]
  %v3968 = vld [vmem:[#allocation3 + $0x92] sm:$0xff]
  %v3969 = vld [vmem:[#allocation3 + $0xa2] sm:$0xff]
  %v3970 = vld [vmem:[#allocation3 + $0xb2] sm:$0xff]
  %v3971 = vld [vmem:[#allocation3 + $0xc2] sm:$0xff]
  %v3972 = vld [vmem:[#allocation3 + $0xd2] sm:$0xff]
  %v3973 = vld [vmem:[#allocation3 + $0xe2] sm:$0xff]
  %v3974 = vld [vmem:[#allocation3 + $0xf2] sm:$0xff]
  %v3975 = vld [vmem:[#allocation3 + $0x102] sm:$0xff]
  %v3976 = vld [vmem:[#allocation3 + $0x112] sm:$0xff]
  %v3977 = vld [vmem:[#allocation3 + $0x122] sm:$0xff]
  %v3978 = vld [vmem:[#allocation3 + $0x132] sm:$0xff]
  %v3979 = vld [vmem:[#allocation3 + $0x142] sm:$0xff]
  %v3980 = vld [vmem:[#allocation3 + $0x152] sm:$0xff]
  %v3981 = vld [vmem:[#allocation3 + $0x162] sm:$0xff]
  %v3982 = vld [vmem:[#allocation3 + $0x172] sm:$0xff]
  %v3983 = vld [vmem:[#allocation3 + $0x182] sm:$0xff]
  %v3984 = vld [vmem:[#allocation3 + $0x192] sm:$0xff]
  %v3985 = vld [vmem:[#allocation3 + $0x1a2] sm:$0xff]
  %v3986 = vld [vmem:[#allocation3 + $0x1b2] sm:$0xff]
  %v3987 = vld [vmem:[#allocation3 + $0x1c2] sm:$0xff]
  %v3988 = vld [vmem:[#allocation3 + $0x1d2] sm:$0xff]
  %v3989 = vld [vmem:[#allocation3 + $0x1e2] sm:$0xff]
  %v3990 = vld [vmem:[#allocation3 + $0x1f2] sm:$0xff]
  %v3991 = vld [vmem:[#allocation3 + $0x202] sm:$0xff]
  %v3992 = vld [vmem:[#allocation3 + $0x212] sm:$0xff]
  %v3993 = vld [vmem:[#allocation3 + $0x222] sm:$0xff]
  %v3994 = vld [vmem:[#allocation3 + $0x232] sm:$0xff]
  %v3995 = vld [vmem:[#allocation3 + $0x242] sm:$0xff]
  %v3996 = vld [vmem:[#allocation3 + $0x252] sm:$0xff]
  %v3997 = vld [vmem:[#allocation3 + $0x262] sm:$0xff]
  %v3998 = vld [vmem:[#allocation3 + $0x272] sm:$0xff]
  %v3999 = vld [vmem:[#allocation3 + $0x282] sm:$0xff]
  %v4000 = vld [vmem:[#allocation3 + $0x292] sm:$0xff]
  %v4001 = vld [vmem:[#allocation3 + $0x2a2] sm:$0xff]
  %v4002 = vld [vmem:[#allocation3 + $0x2b2] sm:$0xff]
  %v4003 = vld [vmem:[#allocation3 + $0x2c2] sm:$0xff]
  %v4004 = vld [vmem:[#allocation3 + $0x2d2] sm:$0xff]
  %v4005 = vld [vmem:[#allocation3 + $0x2e2] sm:$0xff]
  %v4006 = vld [vmem:[#allocation3 + $0x2f2] sm:$0xff]
  %v4007 = vld [vmem:[#allocation3 + $0x302] sm:$0xff]
  %v4008 = vld [vmem:[#allocation3 + $0x312] sm:$0xff]
  %v4009 = vld [vmem:[#allocation3 + $0x322] sm:$0xff]
  %v4010 = vld [vmem:[#allocation3 + $0x332] sm:$0xff]
  %v4011 = vld [vmem:[#allocation3 + $0x342] sm:$0xff]
  %v4012 = vld [vmem:[#allocation3 + $0x352] sm:$0xff]
  %v4013 = vld [vmem:[#allocation3 + $0x362] sm:$0xff]
  %v4014 = vld [vmem:[#allocation3 + $0x372] sm:$0xff]
  %v4015 = vld [vmem:[#allocation3 + $0x382] sm:$0xff]
  %v4016 = vld [vmem:[#allocation3 + $0x392] sm:$0xff]
  %v4017 = vld [vmem:[#allocation3 + $0x3a2] sm:$0xff]
  %v4018 = vld [vmem:[#allocation3 + $0x3b2] sm:$0xff]
  %v4019 = vld [vmem:[#allocation3 + $0x3c2] sm:$0xff]
  %v4020 = vld [vmem:[#allocation3 + $0x3d2] sm:$0xff]
  %v4021 = vld [vmem:[#allocation3 + $0x3e2] sm:$0xff]
  %v4022 = vld [vmem:[#allocation3 + $0x3f2] sm:$0xff]
  %s4023 = scalar_lea.vmem %s3, 128
  %v4024 = vld [vmem:[%s4023] sm:$0xff]
  %v4025 = vld [vmem:[%s4023 + $0x8] sm:$0xff]
  %v4026 = vld [vmem:[%s4023 + $0x10] sm:$0xff]
  %v4027 = vld [vmem:[%s4023 + $0x18] sm:$0xff]
  %v4028 = vld [vmem:[%s4023 + $0x20] sm:$0xff]
  %v4029 = vld [vmem:[%s4023 + $0x28] sm:$0xff]
  %v4030 = vld [vmem:[%s4023 + $0x30] sm:$0xff]
  %v4031 = vld [vmem:[%s4023 + $0x38] sm:$0xff]
  %v4033 = vsel %vm2019, %v3959, 0
  %v4036 = vsel %vm2019, %v3960, 0
  %v4039 = vsel %vm2019, %v3961, 0
  %v4042 = vsel %vm2019, %v3962, 0
  %v4045 = vsel %vm2019, %v3963, 0
  %v4048 = vsel %vm2019, %v3964, 0
  %v4051 = vsel %vm2019, %v3965, 0
  %v4054 = vsel %vm2019, %v3966, 0
  %v4057 = vsel %vm2019, %v3967, 0
  %v4060 = vsel %vm2019, %v3968, 0
  %v4063 = vsel %vm2019, %v3969, 0
  %v4066 = vsel %vm2019, %v3970, 0
  %v4069 = vsel %vm2019, %v3971, 0
  %v4072 = vsel %vm2019, %v3972, 0
  %v4075 = vsel %vm2019, %v3973, 0
  %v4078 = vsel %vm2019, %v3974, 0
  %v4081 = vsel %vm2019, %v3975, 0
  %v4084 = vsel %vm2019, %v3976, 0
  %v4087 = vsel %vm2019, %v3977, 0
  %v4090 = vsel %vm2019, %v3978, 0
  %v4093 = vsel %vm2019, %v3979, 0
  %v4096 = vsel %vm2019, %v3980, 0
  %v4099 = vsel %vm2019, %v3981, 0
  %v4102 = vsel %vm2019, %v3982, 0
  %v4105 = vsel %vm2019, %v3983, 0
  %v4108 = vsel %vm2019, %v3984, 0
  %v4111 = vsel %vm2019, %v3985, 0
  %v4114 = vsel %vm2019, %v3986, 0
  %v4117 = vsel %vm2019, %v3987, 0
  %v4120 = vsel %vm2019, %v3988, 0
  %v4123 = vsel %vm2019, %v3989, 0
  %v4126 = vsel %vm2019, %v3990, 0
  %v4129 = vsel %vm2019, %v3991, 0
  %v4132 = vsel %vm2019, %v3992, 0
  %v4135 = vsel %vm2019, %v3993, 0
  %v4138 = vsel %vm2019, %v3994, 0
  %v4141 = vsel %vm2019, %v3995, 0
  %v4144 = vsel %vm2019, %v3996, 0
  %v4147 = vsel %vm2019, %v3997, 0
  %v4150 = vsel %vm2019, %v3998, 0
  %v4153 = vsel %vm2019, %v3999, 0
  %v4156 = vsel %vm2019, %v4000, 0
  %v4159 = vsel %vm2019, %v4001, 0
  %v4162 = vsel %vm2019, %v4002, 0
  %v4165 = vsel %vm2019, %v4003, 0
  %v4168 = vsel %vm2019, %v4004, 0
  %v4171 = vsel %vm2019, %v4005, 0
  %v4174 = vsel %vm2019, %v4006, 0
  %v4177 = vsel %vm2019, %v4007, 0
  %v4180 = vsel %vm2019, %v4008, 0
  %v4183 = vsel %vm2019, %v4009, 0
  %v4186 = vsel %vm2019, %v4010, 0
  %v4189 = vsel %vm2019, %v4011, 0
  %v4192 = vsel %vm2019, %v4012, 0
  %v4195 = vsel %vm2019, %v4013, 0
  %v4198 = vsel %vm2019, %v4014, 0
  %v4201 = vsel %vm2019, %v4015, 0
  %v4204 = vsel %vm2019, %v4016, 0
  %v4207 = vsel %vm2019, %v4017, 0
  %v4210 = vsel %vm2019, %v4018, 0
  %v4213 = vsel %vm2019, %v4019, 0
  %v4216 = vsel %vm2019, %v4020, 0
  %v4219 = vsel %vm2019, %v4021, 0
  %v4222 = vsel %vm2019, %v4022, 0
  %4224 = vmatprep.subr.mxu0 0.0
  %4225 = vmatpush1.msra.mxu0 %v4024
  %4226 = vmatprep.subr.mxu0 0.0
  %4227 = vmatpush1.msra.mxu0 %v4025
  %4228 = vmatprep.subr.mxu0 0.0
  %4229 = vmatpush1.msra.mxu0 %v4026
  %4230 = vmatprep.subr.mxu0 0.0
  %4231 = vmatpush1.msra.mxu0 %v4027
  %4232 = vmatprep.subr.mxu0 0.0
  %4233 = vmatpush1.msra.mxu0 %v4028
  %4234 = vmatprep.subr.mxu0 0.0
  %4235 = vmatpush1.msra.mxu0 %v4029
  %4236 = vmatprep.subr.mxu0 0.0
  %4237 = vmatpush1.msra.mxu0 %v4030
  %4238 = vmatprep.subr.mxu0 0.0
  %4239 = vmatpush1.msra.mxu0 %v4031
  %4240 = vmatprep.subr.mxu0 0.0
  %4241 = vmatpush1.msra.mxu0 0.0
  %4242 = vmatprep.subr.mxu0 0.0
  %4243 = vmatpush1.msra.mxu0 0.0
  %4244 = vmatprep.subr.mxu0 0.0
  %4245 = vmatpush1.msra.mxu0 0.0
  %4246 = vmatprep.subr.mxu0 0.0
  %4247 = vmatpush1.msra.mxu0 0.0
  %4248 = vmatprep.subr.mxu0 0.0
  %4249 = vmatpush1.msra.mxu0 0.0
  %4250 = vmatprep.subr.mxu0 0.0
  %4251 = vmatpush1.msra.mxu0 0.0
  %4252 = vmatprep.subr.mxu0 0.0
  %4253 = vmatpush1.msra.mxu0 0.0
  %4254 = vmatprep.subr.mxu0 0.0
  %4255 = vmatpush1.msra.mxu0 0.0
  %4256 = vmatprep.subr.mxu0 0.0
  %4257 = vmatpush1.msra.mxu0 0.0
  %4258 = vmatprep.subr.mxu0 0.0
  %4259 = vmatpush1.msra.mxu0 0.0
  %4260 = vmatprep.subr.mxu0 0.0
  %4261 = vmatpush1.msra.mxu0 0.0
  %4262 = vmatprep.subr.mxu0 0.0
  %4263 = vmatpush1.msra.mxu0 0.0
  %4264 = vmatprep.subr.mxu0 0.0
  %4265 = vmatpush1.msra.mxu0 0.0
  %4266 = vmatprep.subr.mxu0 0.0
  %4267 = vmatpush1.msra.mxu0 0.0
  %4268 = vmatprep.subr.mxu0 0.0
  %4269 = vmatpush1.msra.mxu0 0.0
  %4270 = vmatprep.subr.mxu0 0.0
  %4271 = vmatpush1.msra.mxu0 0.0
  %4272 = vmatprep.subr.mxu0 0.0
  %4273 = vmatpush1.msra.mxu0 0.0
  %4274 = vmatprep.subr.mxu0 0.0
  %4275 = vmatpush1.msra.mxu0 0.0
  %4276 = vmatprep.subr.mxu0 0.0
  %4277 = vmatpush1.msra.mxu0 0.0
  %4278 = vmatprep.subr.mxu0 0.0
  %4279 = vmatpush1.msra.mxu0 0.0
  %4280 = vmatprep.subr.mxu0 0.0
  %4281 = vmatpush1.msra.mxu0 0.0
  %4282 = vmatprep.subr.mxu0 0.0
  %4283 = vmatpush1.msra.mxu0 0.0
  %4284 = vmatprep.subr.mxu0 0.0
  %4285 = vmatpush1.msra.mxu0 0.0
  %4286 = vmatprep.subr.mxu0 0.0
  %4287 = vmatpush1.msra.mxu0 0.0
  %4288 = vmatprep.mubr.f32.mxu0 0.0
  %4289 = vmatmul.mubr.f32.gmra.mrb[0].mxu0 %v4033
  %v4290 = vpop.f32.mrb[0].mxu0
  %v4291 = vadd.f32 0.0, %v4290
  %v4292 = vpop.f32.mrb[0].mxu0
  %4293 = vmatprep.mubr.f32.mxu0 0.0
  %4294 = vmatmul.mubr.f32.gmra.mrb[0].mxu0 %v4036
  %v4295 = vpop.f32.mrb[0].mxu0
  %v4296 = vadd.f32 0.0, %v4295
  %v4297 = vpop.f32.mrb[0].mxu0
  %4298 = vmatprep.mubr.f32.mxu0 0.0
  %4299 = vmatmul.mubr.f32.gmra.mrb[0].mxu0 %v4039
  %v4300 = vpop.f32.mrb[0].mxu0
  %v4301 = vadd.f32 0.0, %v4300
  %v4302 = vpop.f32.mrb[0].mxu0
  %4303 = vmatprep.mubr.f32.mxu0 0.0
  %4304 = vmatmul.mubr.f32.gmra.mrb[0].mxu0 %v4042
  %v4305 = vpop.f32.mrb[0].mxu0
  %v4306 = vadd.f32 0.0, %v4305
  %v4307 = vpop.f32.mrb[0].mxu0
  %4308 = vmatprep.mubr.f32.mxu0 0.0
  %4309 = vmatmul.mubr.f32.gmra.mrb[0].mxu0 %v4045
  %v4310 = vpop.f32.mrb[0].mxu0
  %v4311 = vadd.f32 0.0, %v4310
  %v4312 = vpop.f32.mrb[0].mxu0
  %4313 = vmatprep.mubr.f32.mxu0 0.0
  %4314 = vmatmul.mubr.f32.gmra.mrb[0].mxu0 %v4048
  %v4315 = vpop.f32.mrb[0].mxu0
  %v4316 = vadd.f32 0.0, %v4315
  %v4317 = vpop.f32.mrb[0].mxu0
  %4318 = vmatprep.mubr.f32.mxu0 0.0
  %4319 = vmatmul.mubr.f32.gmra.mrb[0].mxu0 %v4051
  %v4320 = vpop.f32.mrb[0].mxu0
  %v4321 = vadd.f32 0.0, %v4320
  %v4322 = vpop.f32.mrb[0].mxu0
  %4323 = vmatprep.mubr.f32.mxu0 0.0
  %4324 = vmatmul.mubr.f32.gmra.mrb[0].mxu0 %v4054
  %v4325 = vpop.f32.mrb[0].mxu0
  %v4326 = vadd.f32 0.0, %v4325
  %v4327 = vpop.f32.mrb[0].mxu0
  %4328 = vmatprep.mubr.f32.mxu0 0.0
  %4329 = vmatmul.mubr.f32.gmra.mrb[0].mxu0 %v4057
  %v4330 = vpop.f32.mrb[0].mxu0
  %v4331 = vadd.f32 0.0, %v4330
  %v4332 = vpop.f32.mrb[0].mxu0
  %4333 = vmatprep.mubr.f32.mxu0 0.0
  %4334 = vmatmul.mubr.f32.gmra.mrb[0].mxu0 %v4060
  %v4335 = vpop.f32.mrb[0].mxu0
  %v4336 = vadd.f32 0.0, %v4335
  %v4337 = vpop.f32.mrb[0].mxu0
  %4338 = vmatprep.mubr.f32.mxu0 0.0
  %4339 = vmatmul.mubr.f32.gmra.mrb[0].mxu0 %v4063
  %v4340 = vpop.f32.mrb[0].mxu0
  %v4341 = vadd.f32 0.0, %v4340
  %v4342 = vpop.f32.mrb[0].mxu0
  %4343 = vmatprep.mubr.f32.mxu0 0.0
  %4344 = vmatmul.mubr.f32.gmra.mrb[0].mxu0 %v4066
  %v4345 = vpop.f32.mrb[0].mxu0
  %v4346 = vadd.f32 0.0, %v4345
  %v4347 = vpop.f32.mrb[0].mxu0
  %4348 = vmatprep.mubr.f32.mxu0 0.0
  %4349 = vmatmul.mubr.f32.gmra.mrb[0].mxu0 %v4069
  %v4350 = vpop.f32.mrb[0].mxu0
  %v4351 = vadd.f32 0.0, %v4350
  %v4352 = vpop.f32.mrb[0].mxu0
  %4353 = vmatprep.mubr.f32.mxu0 0.0
  %4354 = vmatmul.mubr.f32.gmra.mrb[0].mxu0 %v4072
  %v4355 = vpop.f32.mrb[0].mxu0
  %v4356 = vadd.f32 0.0, %v4355
  %v4357 = vpop.f32.mrb[0].mxu0
  %4358 = vmatprep.mubr.f32.mxu0 0.0
  %4359 = vmatmul.mubr.f32.gmra.mrb[0].mxu0 %v4075
  %v4360 = vpop.f32.mrb[0].mxu0
  %v4361 = vadd.f32 0.0, %v4360
  %v4362 = vpop.f32.mrb[0].mxu0
  %4363 = vmatprep.mubr.f32.mxu0 0.0
  %4364 = vmatmul.mubr.f32.gmra.mrb[0].mxu0 %v4078
  %v4365 = vpop.f32.mrb[0].mxu0
  %v4366 = vadd.f32 0.0, %v4365
  %v4367 = vpop.f32.mrb[0].mxu0
  %4368 = vmatprep.mubr.f32.mxu0 0.0
  %4369 = vmatmul.mubr.f32.gmra.mrb[0].mxu0 %v4081
  %v4370 = vpop.f32.mrb[0].mxu0
  %v4371 = vadd.f32 0.0, %v4370
  %v4372 = vpop.f32.mrb[0].mxu0
  %4373 = vmatprep.mubr.f32.mxu0 0.0
  %4374 = vmatmul.mubr.f32.gmra.mrb[0].mxu0 %v4084
  %v4375 = vpop.f32.mrb[0].mxu0
  %v4376 = vadd.f32 0.0, %v4375
  %v4377 = vpop.f32.mrb[0].mxu0
  %4378 = vmatprep.mubr.f32.mxu0 0.0
  %4379 = vmatmul.mubr.f32.gmra.mrb[0].mxu0 %v4087
  %v4380 = vpop.f32.mrb[0].mxu0
  %v4381 = vadd.f32 0.0, %v4380
  %v4382 = vpop.f32.mrb[0].mxu0
  %4383 = vmatprep.mubr.f32.mxu0 0.0
  %4384 = vmatmul.mubr.f32.gmra.mrb[0].mxu0 %v4090
  %v4385 = vpop.f32.mrb[0].mxu0
  %v4386 = vadd.f32 0.0, %v4385
  %v4387 = vpop.f32.mrb[0].mxu0
  %4388 = vmatprep.mubr.f32.mxu0 0.0
  %4389 = vmatmul.mubr.f32.gmra.mrb[0].mxu0 %v4093
  %v4390 = vpop.f32.mrb[0].mxu0
  %v4391 = vadd.f32 0.0, %v4390
  %v4392 = vpop.f32.mrb[0].mxu0
  %4393 = vmatprep.mubr.f32.mxu0 0.0
  %4394 = vmatmul.mubr.f32.gmra.mrb[0].mxu0 %v4096
  %v4395 = vpop.f32.mrb[0].mxu0
  %v4396 = vadd.f32 0.0, %v4395
  %v4397 = vpop.f32.mrb[0].mxu0
  %4398 = vmatprep.mubr.f32.mxu0 0.0
  %4399 = vmatmul.mubr.f32.gmra.mrb[0].mxu0 %v4099
  %v4400 = vpop.f32.mrb[0].mxu0
  %v4401 = vadd.f32 0.0, %v4400
  %v4402 = vpop.f32.mrb[0].mxu0
  %4403 = vmatprep.mubr.f32.mxu0 0.0
  %4404 = vmatmul.mubr.f32.gmra.mrb[0].mxu0 %v4102
  %v4405 = vpop.f32.mrb[0].mxu0
  %v4406 = vadd.f32 0.0, %v4405
  %v4407 = vpop.f32.mrb[0].mxu0
  %4408 = vmatprep.mubr.f32.mxu0 0.0
  %4409 = vmatmul.mubr.f32.gmra.mrb[0].mxu0 %v4105
  %v4410 = vpop.f32.mrb[0].mxu0
  %v4411 = vadd.f32 0.0, %v4410
  %v4412 = vpop.f32.mrb[0].mxu0
  %4413 = vmatprep.mubr.f32.mxu0 0.0
  %4414 = vmatmul.mubr.f32.gmra.mrb[0].mxu0 %v4108
  %v4415 = vpop.f32.mrb[0].mxu0
  %v4416 = vadd.f32 0.0, %v4415
  %v4417 = vpop.f32.mrb[0].mxu0
  %4418 = vmatprep.mubr.f32.mxu0 0.0
  %4419 = vmatmul.mubr.f32.gmra.mrb[0].mxu0 %v4111
  %v4420 = vpop.f32.mrb[0].mxu0
  %v4421 = vadd.f32 0.0, %v4420
  %v4422 = vpop.f32.mrb[0].mxu0
  %4423 = vmatprep.mubr.f32.mxu0 0.0
  %4424 = vmatmul.mubr.f32.gmra.mrb[0].mxu0 %v4114
  %v4425 = vpop.f32.mrb[0].mxu0
  %v4426 = vadd.f32 0.0, %v4425
  %v4427 = vpop.f32.mrb[0].mxu0
  %4428 = vmatprep.mubr.f32.mxu0 0.0
  %4429 = vmatmul.mubr.f32.gmra.mrb[0].mxu0 %v4117
  %v4430 = vpop.f32.mrb[0].mxu0
  %v4431 = vadd.f32 0.0, %v4430
  %v4432 = vpop.f32.mrb[0].mxu0
  %4433 = vmatprep.mubr.f32.mxu0 0.0
  %4434 = vmatmul.mubr.f32.gmra.mrb[0].mxu0 %v4120
  %v4435 = vpop.f32.mrb[0].mxu0
  %v4436 = vadd.f32 0.0, %v4435
  %v4437 = vpop.f32.mrb[0].mxu0
  %4438 = vmatprep.mubr.f32.mxu0 0.0
  %4439 = vmatmul.mubr.f32.gmra.mrb[0].mxu0 %v4123
  %v4440 = vpop.f32.mrb[0].mxu0
  %v4441 = vadd.f32 0.0, %v4440
  %v4442 = vpop.f32.mrb[0].mxu0
  %4443 = vmatprep.mubr.f32.mxu0 0.0
  %4444 = vmatmul.mubr.f32.gmra.mrb[0].mxu0 %v4126
  %v4445 = vpop.f32.mrb[0].mxu0
  %v4446 = vadd.f32 0.0, %v4445
  %v4447 = vpop.f32.mrb[0].mxu0
  %4448 = vmatprep.mubr.f32.mxu0 0.0
  %4449 = vmatmul.mubr.f32.gmra.mrb[0].mxu0 %v4129
  %v4450 = vpop.f32.mrb[0].mxu0
  %v4451 = vadd.f32 0.0, %v4450
  %v4452 = vpop.f32.mrb[0].mxu0
  %4453 = vmatprep.mubr.f32.mxu0 0.0
  %4454 = vmatmul.mubr.f32.gmra.mrb[0].mxu0 %v4132
  %v4455 = vpop.f32.mrb[0].mxu0
  %v4456 = vadd.f32 0.0, %v4455
  %v4457 = vpop.f32.mrb[0].mxu0
  %4458 = vmatprep.mubr.f32.mxu0 0.0
  %4459 = vmatmul.mubr.f32.gmra.mrb[0].mxu0 %v4135
  %v4460 = vpop.f32.mrb[0].mxu0
  %v4461 = vadd.f32 0.0, %v4460
  %v4462 = vpop.f32.mrb[0].mxu0
  %4463 = vmatprep.mubr.f32.mxu0 0.0
  %4464 = vmatmul.mubr.f32.gmra.mrb[0].mxu0 %v4138
  %v4465 = vpop.f32.mrb[0].mxu0
  %v4466 = vadd.f32 0.0, %v4465
  %v4467 = vpop.f32.mrb[0].mxu0
  %4468 = vmatprep.mubr.f32.mxu0 0.0
  %4469 = vmatmul.mubr.f32.gmra.mrb[0].mxu0 %v4141
  %v4470 = vpop.f32.mrb[0].mxu0
  %v4471 = vadd.f32 0.0, %v4470
  %v4472 = vpop.f32.mrb[0].mxu0
  %4473 = vmatprep.mubr.f32.mxu0 0.0
  %4474 = vmatmul.mubr.f32.gmra.mrb[0].mxu0 %v4144
  %v4475 = vpop.f32.mrb[0].mxu0
  %v4476 = vadd.f32 0.0, %v4475
  %v4477 = vpop.f32.mrb[0].mxu0
  %4478 = vmatprep.mubr.f32.mxu0 0.0
  %4479 = vmatmul.mubr.f32.gmra.mrb[0].mxu0 %v4147
  %v4480 = vpop.f32.mrb[0].mxu0
  %v4481 = vadd.f32 0.0, %v4480
  %v4482 = vpop.f32.mrb[0].mxu0
  %4483 = vmatprep.mubr.f32.mxu0 0.0
  %4484 = vmatmul.mubr.f32.gmra.mrb[0].mxu0 %v4150
  %v4485 = vpop.f32.mrb[0].mxu0
  %v4486 = vadd.f32 0.0, %v4485
  %v4487 = vpop.f32.mrb[0].mxu0
  %4488 = vmatprep.mubr.f32.mxu0 0.0
  %4489 = vmatmul.mubr.f32.gmra.mrb[0].mxu0 %v4153
  %v4490 = vpop.f32.mrb[0].mxu0
  %v4491 = vadd.f32 0.0, %v4490
  %v4492 = vpop.f32.mrb[0].mxu0
  %4493 = vmatprep.mubr.f32.mxu0 0.0
  %4494 = vmatmul.mubr.f32.gmra.mrb[0].mxu0 %v4156
  %v4495 = vpop.f32.mrb[0].mxu0
  %v4496 = vadd.f32 0.0, %v4495
  %v4497 = vpop.f32.mrb[0].mxu0
  %4498 = vmatprep.mubr.f32.mxu0 0.0
  %4499 = vmatmul.mubr.f32.gmra.mrb[0].mxu0 %v4159
  %v4500 = vpop.f32.mrb[0].mxu0
  %v4501 = vadd.f32 0.0, %v4500
  %v4502 = vpop.f32.mrb[0].mxu0
  %4503 = vmatprep.mubr.f32.mxu0 0.0
  %4504 = vmatmul.mubr.f32.gmra.mrb[0].mxu0 %v4162
  %v4505 = vpop.f32.mrb[0].mxu0
  %v4506 = vadd.f32 0.0, %v4505
  %v4507 = vpop.f32.mrb[0].mxu0
  %4508 = vmatprep.mubr.f32.mxu0 0.0
  %4509 = vmatmul.mubr.f32.gmra.mrb[0].mxu0 %v4165
  %v4510 = vpop.f32.mrb[0].mxu0
  %v4511 = vadd.f32 0.0, %v4510
  %v4512 = vpop.f32.mrb[0].mxu0
  %4513 = vmatprep.mubr.f32.mxu0 0.0
  %4514 = vmatmul.mubr.f32.gmra.mrb[0].mxu0 %v4168
  %v4515 = vpop.f32.mrb[0].mxu0
  %v4516 = vadd.f32 0.0, %v4515
  %v4517 = vpop.f32.mrb[0].mxu0
  %4518 = vmatprep.mubr.f32.mxu0 0.0
  %4519 = vmatmul.mubr.f32.gmra.mrb[0].mxu0 %v4171
  %v4520 = vpop.f32.mrb[0].mxu0
  %v4521 = vadd.f32 0.0, %v4520
  %v4522 = vpop.f32.mrb[0].mxu0
  %4523 = vmatprep.mubr.f32.mxu0 0.0
  %4524 = vmatmul.mubr.f32.gmra.mrb[0].mxu0 %v4174
  %v4525 = vpop.f32.mrb[0].mxu0
  %v4526 = vadd.f32 0.0, %v4525
  %v4527 = vpop.f32.mrb[0].mxu0
  %4528 = vmatprep.mubr.f32.mxu0 0.0
  %4529 = vmatmul.mubr.f32.gmra.mrb[0].mxu0 %v4177
  %v4530 = vpop.f32.mrb[0].mxu0
  %v4531 = vadd.f32 0.0, %v4530
  %v4532 = vpop.f32.mrb[0].mxu0
  %4533 = vmatprep.mubr.f32.mxu0 0.0
  %4534 = vmatmul.mubr.f32.gmra.mrb[0].mxu0 %v4180
  %v4535 = vpop.f32.mrb[0].mxu0
  %v4536 = vadd.f32 0.0, %v4535
  %v4537 = vpop.f32.mrb[0].mxu0
  %4538 = vmatprep.mubr.f32.mxu0 0.0
  %4539 = vmatmul.mubr.f32.gmra.mrb[0].mxu0 %v4183
  %v4540 = vpop.f32.mrb[0].mxu0
  %v4541 = vadd.f32 0.0, %v4540
  %v4542 = vpop.f32.mrb[0].mxu0
  %4543 = vmatprep.mubr.f32.mxu0 0.0
  %4544 = vmatmul.mubr.f32.gmra.mrb[0].mxu0 %v4186
  %v4545 = vpop.f32.mrb[0].mxu0
  %v4546 = vadd.f32 0.0, %v4545
  %v4547 = vpop.f32.mrb[0].mxu0
  %4548 = vmatprep.mubr.f32.mxu0 0.0
  %4549 = vmatmul.mubr.f32.gmra.mrb[0].mxu0 %v4189
  %v4550 = vpop.f32.mrb[0].mxu0
  %v4551 = vadd.f32 0.0, %v4550
  %v4552 = vpop.f32.mrb[0].mxu0
  %4553 = vmatprep.mubr.f32.mxu0 0.0
  %4554 = vmatmul.mubr.f32.gmra.mrb[0].mxu0 %v4192
  %v4555 = vpop.f32.mrb[0].mxu0
  %v4556 = vadd.f32 0.0, %v4555
  %v4557 = vpop.f32.mrb[0].mxu0
  %4558 = vmatprep.mubr.f32.mxu0 0.0
  %4559 = vmatmul.mubr.f32.gmra.mrb[0].mxu0 %v4195
  %v4560 = vpop.f32.mrb[0].mxu0
  %v4561 = vadd.f32 0.0, %v4560
  %v4562 = vpop.f32.mrb[0].mxu0
  %4563 = vmatprep.mubr.f32.mxu0 0.0
  %4564 = vmatmul.mubr.f32.gmra.mrb[0].mxu0 %v4198
  %v4565 = vpop.f32.mrb[0].mxu0
  %v4566 = vadd.f32 0.0, %v4565
  %v4567 = vpop.f32.mrb[0].mxu0
  %4568 = vmatprep.mubr.f32.mxu0 0.0
  %4569 = vmatmul.mubr.f32.gmra.mrb[0].mxu0 %v4201
  %v4570 = vpop.f32.mrb[0].mxu0
  %v4571 = vadd.f32 0.0, %v4570
  %v4572 = vpop.f32.mrb[0].mxu0
  %4573 = vmatprep.mubr.f32.mxu0 0.0
  %4574 = vmatmul.mubr.f32.gmra.mrb[0].mxu0 %v4204
  %v4575 = vpop.f32.mrb[0].mxu0
  %v4576 = vadd.f32 0.0, %v4575
  %v4577 = vpop.f32.mrb[0].mxu0
  %4578 = vmatprep.mubr.f32.mxu0 0.0
  %4579 = vmatmul.mubr.f32.gmra.mrb[0].mxu0 %v4207
  %v4580 = vpop.f32.mrb[0].mxu0
  %v4581 = vadd.f32 0.0, %v4580
  %v4582 = vpop.f32.mrb[0].mxu0
  %4583 = vmatprep.mubr.f32.mxu0 0.0
  %4584 = vmatmul.mubr.f32.gmra.mrb[0].mxu0 %v4210
  %v4585 = vpop.f32.mrb[0].mxu0
  %v4586 = vadd.f32 0.0, %v4585
  %v4587 = vpop.f32.mrb[0].mxu0
  %4588 = vmatprep.mubr.f32.mxu0 0.0
  %4589 = vmatmul.mubr.f32.gmra.mrb[0].mxu0 %v4213
  %v4590 = vpop.f32.mrb[0].mxu0
  %v4591 = vadd.f32 0.0, %v4590
  %v4592 = vpop.f32.mrb[0].mxu0
  %4593 = vmatprep.mubr.f32.mxu0 0.0
  %4594 = vmatmul.mubr.f32.gmra.mrb[0].mxu0 %v4216
  %v4595 = vpop.f32.mrb[0].mxu0
  %v4596 = vadd.f32 0.0, %v4595
  %v4597 = vpop.f32.mrb[0].mxu0
  %4598 = vmatprep.mubr.f32.mxu0 0.0
  %4599 = vmatmul.mubr.f32.gmra.mrb[0].mxu0 %v4219
  %v4600 = vpop.f32.mrb[0].mxu0
  %v4601 = vadd.f32 0.0, %v4600
  %v4602 = vpop.f32.mrb[0].mxu0
  %4603 = vmatprep.mubr.f32.mxu0 0.0
  %4604 = vmatmul.mubr.f32.gmra.mrb[0].mxu0 %v4222
  %v4605 = vpop.f32.mrb[0].mxu0
  %v4606 = vadd.f32 0.0, %v4605
  %v4607 = vpop.f32.mrb[0].mxu0
  %4608 = vdwg.mxu0
  %v4609 = vadd.f32 %v3641, %v4291
  %v4610 = vadd.f32 %v3646, %v4296
  %v4611 = vadd.f32 %v3651, %v4301
  %v4612 = vadd.f32 %v3656, %v4306
  %v4613 = vadd.f32 %v3661, %v4311
  %v4614 = vadd.f32 %v3666, %v4316
  %v4615 = vadd.f32 %v3671, %v4321
  %v4616 = vadd.f32 %v3676, %v4326
  %v4617 = vadd.f32 %v3681, %v4331
  %v4618 = vadd.f32 %v3686, %v4336
  %v4619 = vadd.f32 %v3691, %v4341
  %v4620 = vadd.f32 %v3696, %v4346
  %v4621 = vadd.f32 %v3701, %v4351
  %v4622 = vadd.f32 %v3706, %v4356
  %v4623 = vadd.f32 %v3711, %v4361
  %v4624 = vadd.f32 %v3716, %v4366
  %v4625 = vadd.f32 %v3721, %v4371
  %v4626 = vadd.f32 %v3726, %v4376
  %v4627 = vadd.f32 %v3731, %v4381
  %v4628 = vadd.f32 %v3736, %v4386
  %v4629 = vadd.f32 %v3741, %v4391
  %v4630 = vadd.f32 %v3746, %v4396
  %v4631 = vadd.f32 %v3751, %v4401
  %v4632 = vadd.f32 %v3756, %v4406
  %v4633 = vadd.f32 %v3761, %v4411
  %v4634 = vadd.f32 %v3766, %v4416
  %v4635 = vadd.f32 %v3771, %v4421
  %v4636 = vadd.f32 %v3776, %v4426
  %v4637 = vadd.f32 %v3781, %v4431
  %v4638 = vadd.f32 %v3786, %v4436
  %v4639 = vadd.f32 %v3791, %v4441
  %v4640 = vadd.f32 %v3796, %v4446
  %v4641 = vadd.f32 %v3801, %v4451
  %v4642 = vadd.f32 %v3806, %v4456
  %v4643 = vadd.f32 %v3811, %v4461
  %v4644 = vadd.f32 %v3816, %v4466
  %v4645 = vadd.f32 %v3821, %v4471
  %v4646 = vadd.f32 %v3826, %v4476
  %v4647 = vadd.f32 %v3831, %v4481
  %v4648 = vadd.f32 %v3836, %v4486
  %v4649 = vadd.f32 %v3841, %v4491
  %v4650 = vadd.f32 %v3846, %v4496
  %v4651 = vadd.f32 %v3851, %v4501
  %v4652 = vadd.f32 %v3856, %v4506
  %v4653 = vadd.f32 %v3861, %v4511
  %v4654 = vadd.f32 %v3866, %v4516
  %v4655 = vadd.f32 %v3871, %v4521
  %v4656 = vadd.f32 %v3876, %v4526
  %v4657 = vadd.f32 %v3881, %v4531
  %v4658 = vadd.f32 %v3886, %v4536
  %v4659 = vadd.f32 %v3891, %v4541
  %v4660 = vadd.f32 %v3896, %v4546
  %v4661 = vadd.f32 %v3901, %v4551
  %v4662 = vadd.f32 %v3906, %v4556
  %v4663 = vadd.f32 %v3911, %v4561
  %v4664 = vadd.f32 %v3916, %v4566
  %v4665 = vadd.f32 %v3921, %v4571
  %v4666 = vadd.f32 %v3926, %v4576
  %v4667 = vadd.f32 %v3931, %v4581
  %v4668 = vadd.f32 %v3936, %v4586
  %v4669 = vadd.f32 %v3941, %v4591
  %v4670 = vadd.f32 %v3946, %v4596
  %v4671 = vadd.f32 %v3951, %v4601
  %v4672 = vadd.f32 %v3956, %v4606
  %v4673 = vld [vmem:[%s4] sm:$0x1]
  %v4675 = vlaneseq
  %v4676 = vshrl.u32 %v4675, 7
  %v4677 = vsub.s32 0, %v4676
  %v4678 = vrot.slane %v4673, %v4677
  %v4680 = vadd.f32 %v4609, %v4678
  %v4681 = vadd.f32 %v4610, %v4678
  %v4682 = vadd.f32 %v4611, %v4678
  %v4683 = vadd.f32 %v4612, %v4678
  %v4684 = vadd.f32 %v4613, %v4678
  %v4685 = vadd.f32 %v4614, %v4678
  %v4686 = vadd.f32 %v4615, %v4678
  %v4687 = vadd.f32 %v4616, %v4678
  %v4688 = vadd.f32 %v4617, %v4678
  %v4689 = vadd.f32 %v4618, %v4678
  %v4690 = vadd.f32 %v4619, %v4678
  %v4691 = vadd.f32 %v4620, %v4678
  %v4692 = vadd.f32 %v4621, %v4678
  %v4693 = vadd.f32 %v4622, %v4678
  %v4694 = vadd.f32 %v4623, %v4678
  %v4695 = vadd.f32 %v4624, %v4678
  %v4696 = vadd.f32 %v4625, %v4678
  %v4697 = vadd.f32 %v4626, %v4678
  %v4698 = vadd.f32 %v4627, %v4678
  %v4699 = vadd.f32 %v4628, %v4678
  %v4700 = vadd.f32 %v4629, %v4678
  %v4701 = vadd.f32 %v4630, %v4678
  %v4702 = vadd.f32 %v4631, %v4678
  %v4703 = vadd.f32 %v4632, %v4678
  %v4704 = vadd.f32 %v4633, %v4678
  %v4705 = vadd.f32 %v4634, %v4678
  %v4706 = vadd.f32 %v4635, %v4678
  %v4707 = vadd.f32 %v4636, %v4678
  %v4708 = vadd.f32 %v4637, %v4678
  %v4709 = vadd.f32 %v4638, %v4678
  %v4710 = vadd.f32 %v4639, %v4678
  %v4711 = vadd.f32 %v4640, %v4678
  %v4712 = vadd.f32 %v4641, %v4678
  %v4713 = vadd.f32 %v4642, %v4678
  %v4714 = vadd.f32 %v4643, %v4678
  %v4715 = vadd.f32 %v4644, %v4678
  %v4716 = vadd.f32 %v4645, %v4678
  %v4717 = vadd.f32 %v4646, %v4678
  %v4718 = vadd.f32 %v4647, %v4678
  %v4719 = vadd.f32 %v4648, %v4678
  %v4720 = vadd.f32 %v4649, %v4678
  %v4721 = vadd.f32 %v4650, %v4678
  %v4722 = vadd.f32 %v4651, %v4678
  %v4723 = vadd.f32 %v4652, %v4678
  %v4724 = vadd.f32 %v4653, %v4678
  %v4725 = vadd.f32 %v4654, %v4678
  %v4726 = vadd.f32 %v4655, %v4678
  %v4727 = vadd.f32 %v4656, %v4678
  %v4728 = vadd.f32 %v4657, %v4678
  %v4729 = vadd.f32 %v4658, %v4678
  %v4730 = vadd.f32 %v4659, %v4678
  %v4731 = vadd.f32 %v4660, %v4678
  %v4732 = vadd.f32 %v4661, %v4678
  %v4733 = vadd.f32 %v4662, %v4678
  %v4734 = vadd.f32 %v4663, %v4678
  %v4735 = vadd.f32 %v4664, %v4678
  %v4736 = vadd.f32 %v4665, %v4678
  %v4737 = vadd.f32 %v4666, %v4678
  %v4738 = vadd.f32 %v4667, %v4678
  %v4739 = vadd.f32 %v4668, %v4678
  %v4740 = vadd.f32 %v4669, %v4678
  %v4741 = vadd.f32 %v4670, %v4678
  %v4742 = vadd.f32 %v4671, %v4678
  %v4743 = vadd.f32 %v4672, %v4678
  %4808 = vrot.lane.b32.xlu0 %v4680, 64
  %v4809 = vpop.permute.xlu0 %4808
  %4810 = vrot.lane.b32.xlu0 %v4681, 64
  %v4811 = vpop.permute.xlu0 %4810
  %4812 = vrot.lane.b32.xlu0 %v4682, 64
  %v4813 = vpop.permute.xlu0 %4812
  %4814 = vrot.lane.b32.xlu0 %v4683, 64
  %v4815 = vpop.permute.xlu0 %4814
  %4816 = vrot.lane.b32.xlu0 %v4684, 64
  %v4817 = vpop.permute.xlu0 %4816
  %4818 = vrot.lane.b32.xlu0 %v4685, 64
  %v4819 = vpop.permute.xlu0 %4818
  %4820 = vrot.lane.b32.xlu0 %v4686, 64
  %v4821 = vpop.permute.xlu0 %4820
  %4822 = vrot.lane.b32.xlu0 %v4687, 64
  %v4823 = vpop.permute.xlu0 %4822
  %4824 = vrot.lane.b32.xlu0 %v4688, 64
  %v4825 = vpop.permute.xlu0 %4824
  %4826 = vrot.lane.b32.xlu0 %v4689, 64
  %v4827 = vpop.permute.xlu0 %4826
  %4828 = vrot.lane.b32.xlu0 %v4690, 64
  %v4829 = vpop.permute.xlu0 %4828
  %4830 = vrot.lane.b32.xlu0 %v4691, 64
  %v4831 = vpop.permute.xlu0 %4830
  %4832 = vrot.lane.b32.xlu0 %v4692, 64
  %v4833 = vpop.permute.xlu0 %4832
  %4834 = vrot.lane.b32.xlu0 %v4693, 64
  %v4835 = vpop.permute.xlu0 %4834
  %4836 = vrot.lane.b32.xlu0 %v4694, 64
  %v4837 = vpop.permute.xlu0 %4836
  %4838 = vrot.lane.b32.xlu0 %v4695, 64
  %v4839 = vpop.permute.xlu0 %4838
  %4840 = vrot.lane.b32.xlu0 %v4696, 64
  %v4841 = vpop.permute.xlu0 %4840
  %4842 = vrot.lane.b32.xlu0 %v4697, 64
  %v4843 = vpop.permute.xlu0 %4842
  %4844 = vrot.lane.b32.xlu0 %v4698, 64
  %v4845 = vpop.permute.xlu0 %4844
  %4846 = vrot.lane.b32.xlu0 %v4699, 64
  %v4847 = vpop.permute.xlu0 %4846
  %4848 = vrot.lane.b32.xlu0 %v4700, 64
  %v4849 = vpop.permute.xlu0 %4848
  %4850 = vrot.lane.b32.xlu0 %v4701, 64
  %v4851 = vpop.permute.xlu0 %4850
  %4852 = vrot.lane.b32.xlu0 %v4702, 64
  %v4853 = vpop.permute.xlu0 %4852
  %4854 = vrot.lane.b32.xlu0 %v4703, 64
  %v4855 = vpop.permute.xlu0 %4854
  %4856 = vrot.lane.b32.xlu0 %v4704, 64
  %v4857 = vpop.permute.xlu0 %4856
  %4858 = vrot.lane.b32.xlu0 %v4705, 64
  %v4859 = vpop.permute.xlu0 %4858
  %4860 = vrot.lane.b32.xlu0 %v4706, 64
  %v4861 = vpop.permute.xlu0 %4860
  %4862 = vrot.lane.b32.xlu0 %v4707, 64
  %v4863 = vpop.permute.xlu0 %4862
  %4864 = vrot.lane.b32.xlu0 %v4708, 64
  %v4865 = vpop.permute.xlu0 %4864
  %4866 = vrot.lane.b32.xlu0 %v4709, 64
  %v4867 = vpop.permute.xlu0 %4866
  %4868 = vrot.lane.b32.xlu0 %v4710, 64
  %v4869 = vpop.permute.xlu0 %4868
  %4870 = vrot.lane.b32.xlu0 %v4711, 64
  %v4871 = vpop.permute.xlu0 %4870
  %4872 = vrot.lane.b32.xlu0 %v4712, 64
  %v4873 = vpop.permute.xlu0 %4872
  %4874 = vrot.lane.b32.xlu0 %v4713, 64
  %v4875 = vpop.permute.xlu0 %4874
  %4876 = vrot.lane.b32.xlu0 %v4714, 64
  %v4877 = vpop.permute.xlu0 %4876
  %4878 = vrot.lane.b32.xlu0 %v4715, 64
  %v4879 = vpop.permute.xlu0 %4878
  %4880 = vrot.lane.b32.xlu0 %v4716, 64
  %v4881 = vpop.permute.xlu0 %4880
  %4882 = vrot.lane.b32.xlu0 %v4717, 64
  %v4883 = vpop.permute.xlu0 %4882
  %4884 = vrot.lane.b32.xlu0 %v4718, 64
  %v4885 = vpop.permute.xlu0 %4884
  %4886 = vrot.lane.b32.xlu0 %v4719, 64
  %v4887 = vpop.permute.xlu0 %4886
  %4888 = vrot.lane.b32.xlu0 %v4720, 64
  %v4889 = vpop.permute.xlu0 %4888
  %4890 = vrot.lane.b32.xlu0 %v4721, 64
  %v4891 = vpop.permute.xlu0 %4890
  %4892 = vrot.lane.b32.xlu0 %v4722, 64
  %v4893 = vpop.permute.xlu0 %4892
  %4894 = vrot.lane.b32.xlu0 %v4723, 64
  %v4895 = vpop.permute.xlu0 %4894
  %4896 = vrot.lane.b32.xlu0 %v4724, 64
  %v4897 = vpop.permute.xlu0 %4896
  %4898 = vrot.lane.b32.xlu0 %v4725, 64
  %v4899 = vpop.permute.xlu0 %4898
  %4900 = vrot.lane.b32.xlu0 %v4726, 64
  %v4901 = vpop.permute.xlu0 %4900
  %4902 = vrot.lane.b32.xlu0 %v4727, 64
  %v4903 = vpop.permute.xlu0 %4902
  %4904 = vrot.lane.b32.xlu0 %v4728, 64
  %v4905 = vpop.permute.xlu0 %4904
  %4906 = vrot.lane.b32.xlu0 %v4729, 64
  %v4907 = vpop.permute.xlu0 %4906
  %4908 = vrot.lane.b32.xlu0 %v4730, 64
  %v4909 = vpop.permute.xlu0 %4908
  %4910 = vrot.lane.b32.xlu0 %v4731, 64
  %v4911 = vpop.permute.xlu0 %4910
  %4912 = vrot.lane.b32.xlu0 %v4732, 64
  %v4913 = vpop.permute.xlu0 %4912
  %4914 = vrot.lane.b32.xlu0 %v4733, 64
  %v4915 = vpop.permute.xlu0 %4914
  %4916 = vrot.lane.b32.xlu0 %v4734, 64
  %v4917 = vpop.permute.xlu0 %4916
  %4918 = vrot.lane.b32.xlu0 %v4735, 64
  %v4919 = vpop.permute.xlu0 %4918
  %4920 = vrot.lane.b32.xlu0 %v4736, 64
  %v4921 = vpop.permute.xlu0 %4920
  %4922 = vrot.lane.b32.xlu0 %v4737, 64
  %v4923 = vpop.permute.xlu0 %4922
  %4924 = vrot.lane.b32.xlu0 %v4738, 64
  %v4925 = vpop.permute.xlu0 %4924
  %4926 = vrot.lane.b32.xlu0 %v4739, 64
  %v4927 = vpop.permute.xlu0 %4926
  %4928 = vrot.lane.b32.xlu0 %v4740, 64
  %v4929 = vpop.permute.xlu0 %4928
  %4930 = vrot.lane.b32.xlu0 %v4741, 64
  %v4931 = vpop.permute.xlu0 %4930
  %4932 = vrot.lane.b32.xlu0 %v4742, 64
  %v4933 = vpop.permute.xlu0 %4932
  %4934 = vrot.lane.b32.xlu0 %v4743, 64
  %v4935 = vpop.permute.xlu0 %4934
  %v5000 = vmax.f32 %v4680, %v4809
  %v5001 = vmax.f32 %v4681, %v4811
  %v5002 = vmax.f32 %v4682, %v4813
  %v5003 = vmax.f32 %v4683, %v4815
  %v5004 = vmax.f32 %v4684, %v4817
  %v5005 = vmax.f32 %v4685, %v4819
  %v5006 = vmax.f32 %v4686, %v4821
  %v5007 = vmax.f32 %v4687, %v4823
  %v5008 = vmax.f32 %v4688, %v4825
  %v5009 = vmax.f32 %v4689, %v4827
  %v5010 = vmax.f32 %v4690, %v4829
  %v5011 = vmax.f32 %v4691, %v4831
  %v5012 = vmax.f32 %v4692, %v4833
  %v5013 = vmax.f32 %v4693, %v4835
  %v5014 = vmax.f32 %v4694, %v4837
  %v5015 = vmax.f32 %v4695, %v4839
  %v5016 = vmax.f32 %v4696, %v4841
  %v5017 = vmax.f32 %v4697, %v4843
  %v5018 = vmax.f32 %v4698, %v4845
  %v5019 = vmax.f32 %v4699, %v4847
  %v5020 = vmax.f32 %v4700, %v4849
  %v5021 = vmax.f32 %v4701, %v4851
  %v5022 = vmax.f32 %v4702, %v4853
  %v5023 = vmax.f32 %v4703, %v4855
  %v5024 = vmax.f32 %v4704, %v4857
  %v5025 = vmax.f32 %v4705, %v4859
  %v5026 = vmax.f32 %v4706, %v4861
  %v5027 = vmax.f32 %v4707, %v4863
  %v5028 = vmax.f32 %v4708, %v4865
  %v5029 = vmax.f32 %v4709, %v4867
  %v5030 = vmax.f32 %v4710, %v4869
  %v5031 = vmax.f32 %v4711, %v4871
  %v5032 = vmax.f32 %v4712, %v4873
  %v5033 = vmax.f32 %v4713, %v4875
  %v5034 = vmax.f32 %v4714, %v4877
  %v5035 = vmax.f32 %v4715, %v4879
  %v5036 = vmax.f32 %v4716, %v4881
  %v5037 = vmax.f32 %v4717, %v4883
  %v5038 = vmax.f32 %v4718, %v4885
  %v5039 = vmax.f32 %v4719, %v4887
  %v5040 = vmax.f32 %v4720, %v4889
  %v5041 = vmax.f32 %v4721, %v4891
  %v5042 = vmax.f32 %v4722, %v4893
  %v5043 = vmax.f32 %v4723, %v4895
  %v5044 = vmax.f32 %v4724, %v4897
  %v5045 = vmax.f32 %v4725, %v4899
  %v5046 = vmax.f32 %v4726, %v4901
  %v5047 = vmax.f32 %v4727, %v4903
  %v5048 = vmax.f32 %v4728, %v4905
  %v5049 = vmax.f32 %v4729, %v4907
  %v5050 = vmax.f32 %v4730, %v4909
  %v5051 = vmax.f32 %v4731, %v4911
  %v5052 = vmax.f32 %v4732, %v4913
  %v5053 = vmax.f32 %v4733, %v4915
  %v5054 = vmax.f32 %v4734, %v4917
  %v5055 = vmax.f32 %v4735, %v4919
  %v5056 = vmax.f32 %v4736, %v4921
  %v5057 = vmax.f32 %v4737, %v4923
  %v5058 = vmax.f32 %v4738, %v4925
  %v5059 = vmax.f32 %v4739, %v4927
  %v5060 = vmax.f32 %v4740, %v4929
  %v5061 = vmax.f32 %v4741, %v4931
  %v5062 = vmax.f32 %v4742, %v4933
  %v5063 = vmax.f32 %v4743, %v4935
  %v5064 = vmax.f32 %v5000, 0.0
  %v5065 = vmax.f32 %v5001, 0.0
  %v5066 = vmax.f32 %v5002, 0.0
  %v5067 = vmax.f32 %v5003, 0.0
  %v5068 = vmax.f32 %v5004, 0.0
  %v5069 = vmax.f32 %v5005, 0.0
  %v5070 = vmax.f32 %v5006, 0.0
  %v5071 = vmax.f32 %v5007, 0.0
  %v5072 = vmax.f32 %v5008, 0.0
  %v5073 = vmax.f32 %v5009, 0.0
  %v5074 = vmax.f32 %v5010, 0.0
  %v5075 = vmax.f32 %v5011, 0.0
  %v5076 = vmax.f32 %v5012, 0.0
  %v5077 = vmax.f32 %v5013, 0.0
  %v5078 = vmax.f32 %v5014, 0.0
  %v5079 = vmax.f32 %v5015, 0.0
  %v5080 = vmax.f32 %v5016, 0.0
  %v5081 = vmax.f32 %v5017, 0.0
  %v5082 = vmax.f32 %v5018, 0.0
  %v5083 = vmax.f32 %v5019, 0.0
  %v5084 = vmax.f32 %v5020, 0.0
  %v5085 = vmax.f32 %v5021, 0.0
  %v5086 = vmax.f32 %v5022, 0.0
  %v5087 = vmax.f32 %v5023, 0.0
  %v5088 = vmax.f32 %v5024, 0.0
  %v5089 = vmax.f32 %v5025, 0.0
  %v5090 = vmax.f32 %v5026, 0.0
  %v5091 = vmax.f32 %v5027, 0.0
  %v5092 = vmax.f32 %v5028, 0.0
  %v5093 = vmax.f32 %v5029, 0.0
  %v5094 = vmax.f32 %v5030, 0.0
  %v5095 = vmax.f32 %v5031, 0.0
  %v5096 = vmax.f32 %v5032, 0.0
  %v5097 = vmax.f32 %v5033, 0.0
  %v5098 = vmax.f32 %v5034, 0.0
  %v5099 = vmax.f32 %v5035, 0.0
  %v5100 = vmax.f32 %v5036, 0.0
  %v5101 = vmax.f32 %v5037, 0.0
  %v5102 = vmax.f32 %v5038, 0.0
  %v5103 = vmax.f32 %v5039, 0.0
  %v5104 = vmax.f32 %v5040, 0.0
  %v5105 = vmax.f32 %v5041, 0.0
  %v5106 = vmax.f32 %v5042, 0.0
  %v5107 = vmax.f32 %v5043, 0.0
  %v5108 = vmax.f32 %v5044, 0.0
  %v5109 = vmax.f32 %v5045, 0.0
  %v5110 = vmax.f32 %v5046, 0.0
  %v5111 = vmax.f32 %v5047, 0.0
  %v5112 = vmax.f32 %v5048, 0.0
  %v5113 = vmax.f32 %v5049, 0.0
  %v5114 = vmax.f32 %v5050, 0.0
  %v5115 = vmax.f32 %v5051, 0.0
  %v5116 = vmax.f32 %v5052, 0.0
  %v5117 = vmax.f32 %v5053, 0.0
  %v5118 = vmax.f32 %v5054, 0.0
  %v5119 = vmax.f32 %v5055, 0.0
  %v5120 = vmax.f32 %v5056, 0.0
  %v5121 = vmax.f32 %v5057, 0.0
  %v5122 = vmax.f32 %v5058, 0.0
  %v5123 = vmax.f32 %v5059, 0.0
  %v5124 = vmax.f32 %v5060, 0.0
  %v5125 = vmax.f32 %v5061, 0.0
  %v5126 = vmax.f32 %v5062, 0.0
  %v5127 = vmax.f32 %v5063, 0.0
  %5128 = vst.msk [vmem:[#allocation4] sm:$0xff] %vm2019, %v5064
  %5129 = vst.msk [vmem:[#allocation4 + $0x8] sm:$0xff] %vm2019, %v5065
  %5130 = vst.msk [vmem:[#allocation4 + $0x10] sm:$0xff] %vm2019, %v5066
  %5131 = vst.msk [vmem:[#allocation4 + $0x18] sm:$0xff] %vm2019, %v5067
  %5132 = vst.msk [vmem:[#allocation4 + $0x20] sm:$0xff] %vm2019, %v5068
  %5133 = vst.msk [vmem:[#allocation4 + $0x28] sm:$0xff] %vm2019, %v5069
  %5134 = vst.msk [vmem:[#allocation4 + $0x30] sm:$0xff] %vm2019, %v5070
  %5135 = vst.msk [vmem:[#allocation4 + $0x38] sm:$0xff] %vm2019, %v5071
  %5136 = vst.msk [vmem:[#allocation4 + $0x40] sm:$0xff] %vm2019, %v5072
  %5137 = vst.msk [vmem:[#allocation4 + $0x48] sm:$0xff] %vm2019, %v5073
  %5138 = vst.msk [vmem:[#allocation4 + $0x50] sm:$0xff] %vm2019, %v5074
  %5139 = vst.msk [vmem:[#allocation4 + $0x58] sm:$0xff] %vm2019, %v5075
  %5140 = vst.msk [vmem:[#allocation4 + $0x60] sm:$0xff] %vm2019, %v5076
  %5141 = vst.msk [vmem:[#allocation4 + $0x68] sm:$0xff] %vm2019, %v5077
  %5142 = vst.msk [vmem:[#allocation4 + $0x70] sm:$0xff] %vm2019, %v5078
  %5143 = vst.msk [vmem:[#allocation4 + $0x78] sm:$0xff] %vm2019, %v5079
  %5144 = vst.msk [vmem:[#allocation4 + $0x80] sm:$0xff] %vm2019, %v5080
  %5145 = vst.msk [vmem:[#allocation4 + $0x88] sm:$0xff] %vm2019, %v5081
  %5146 = vst.msk [vmem:[#allocation4 + $0x90] sm:$0xff] %vm2019, %v5082
  %5147 = vst.msk [vmem:[#allocation4 + $0x98] sm:$0xff] %vm2019, %v5083
  %5148 = vst.msk [vmem:[#allocation4 + $0xa0] sm:$0xff] %vm2019, %v5084
  %5149 = vst.msk [vmem:[#allocation4 + $0xa8] sm:$0xff] %vm2019, %v5085
  %5150 = vst.msk [vmem:[#allocation4 + $0xb0] sm:$0xff] %vm2019, %v5086
  %5151 = vst.msk [vmem:[#allocation4 + $0xb8] sm:$0xff] %vm2019, %v5087
  %5152 = vst.msk [vmem:[#allocation4 + $0xc0] sm:$0xff] %vm2019, %v5088
  %5153 = vst.msk [vmem:[#allocation4 + $0xc8] sm:$0xff] %vm2019, %v5089
  %5154 = vst.msk [vmem:[#allocation4 + $0xd0] sm:$0xff] %vm2019, %v5090
  %5155 = vst.msk [vmem:[#allocation4 + $0xd8] sm:$0xff] %vm2019, %v5091
  %5156 = vst.msk [vmem:[#allocation4 + $0xe0] sm:$0xff] %vm2019, %v5092
  %5157 = vst.msk [vmem:[#allocation4 + $0xe8] sm:$0xff] %vm2019, %v5093
  %5158 = vst.msk [vmem:[#allocation4 + $0xf0] sm:$0xff] %vm2019, %v5094
  %5159 = vst.msk [vmem:[#allocation4 + $0xf8] sm:$0xff] %vm2019, %v5095
  %5160 = vst.msk [vmem:[#allocation4 + $0x100] sm:$0xff] %vm2019, %v5096
  %5161 = vst.msk [vmem:[#allocation4 + $0x108] sm:$0xff] %vm2019, %v5097
  %5162 = vst.msk [vmem:[#allocation4 + $0x110] sm:$0xff] %vm2019, %v5098
  %5163 = vst.msk [vmem:[#allocation4 + $0x118] sm:$0xff] %vm2019, %v5099
  %5164 = vst.msk [vmem:[#allocation4 + $0x120] sm:$0xff] %vm2019, %v5100
  %5165 = vst.msk [vmem:[#allocation4 + $0x128] sm:$0xff] %vm2019, %v5101
  %5166 = vst.msk [vmem:[#allocation4 + $0x130] sm:$0xff] %vm2019, %v5102
  %5167 = vst.msk [vmem:[#allocation4 + $0x138] sm:$0xff] %vm2019, %v5103
  %5168 = vst.msk [vmem:[#allocation4 + $0x140] sm:$0xff] %vm2019, %v5104
  %5169 = vst.msk [vmem:[#allocation4 + $0x148] sm:$0xff] %vm2019, %v5105
  %5170 = vst.msk [vmem:[#allocation4 + $0x150] sm:$0xff] %vm2019, %v5106
  %5171 = vst.msk [vmem:[#allocation4 + $0x158] sm:$0xff] %vm2019, %v5107
  %5172 = vst.msk [vmem:[#allocation4 + $0x160] sm:$0xff] %vm2019, %v5108
  %5173 = vst.msk [vmem:[#allocation4 + $0x168] sm:$0xff] %vm2019, %v5109
  %5174 = vst.msk [vmem:[#allocation4 + $0x170] sm:$0xff] %vm2019, %v5110
  %5175 = vst.msk [vmem:[#allocation4 + $0x178] sm:$0xff] %vm2019, %v5111
  %5176 = vst.msk [vmem:[#allocation4 + $0x180] sm:$0xff] %vm2019, %v5112
  %5177 = vst.msk [vmem:[#allocation4 + $0x188] sm:$0xff] %vm2019, %v5113
  %5178 = vst.msk [vmem:[#allocation4 + $0x190] sm:$0xff] %vm2019, %v5114
  %5179 = vst.msk [vmem:[#allocation4 + $0x198] sm:$0xff] %vm2019, %v5115
  %5180 = vst.msk [vmem:[#allocation4 + $0x1a0] sm:$0xff] %vm2019, %v5116
  %5181 = vst.msk [vmem:[#allocation4 + $0x1a8] sm:$0xff] %vm2019, %v5117
  %5182 = vst.msk [vmem:[#allocation4 + $0x1b0] sm:$0xff] %vm2019, %v5118
  %5183 = vst.msk [vmem:[#allocation4 + $0x1b8] sm:$0xff] %vm2019, %v5119
  %5184 = vst.msk [vmem:[#allocation4 + $0x1c0] sm:$0xff] %vm2019, %v5120
  %5185 = vst.msk [vmem:[#allocation4 + $0x1c8] sm:$0xff] %vm2019, %v5121
  %5186 = vst.msk [vmem:[#allocation4 + $0x1d0] sm:$0xff] %vm2019, %v5122
  %5187 = vst.msk [vmem:[#allocation4 + $0x1d8] sm:$0xff] %vm2019, %v5123
  %5188 = vst.msk [vmem:[#allocation4 + $0x1e0] sm:$0xff] %vm2019, %v5124
  %5189 = vst.msk [vmem:[#allocation4 + $0x1e8] sm:$0xff] %vm2019, %v5125
  %5190 = vst.msk [vmem:[#allocation4 + $0x1f0] sm:$0xff] %vm2019, %v5126
  %5191 = vst.msk [vmem:[#allocation4 + $0x1f8] sm:$0xff] %vm2019, %v5127
  %v5192 = vld [vmem:[#allocation4] ss:$2 sm:$0xf]
  %s5193 = scalar_lea.vmem [#allocation4], 8
  %v5194 = vld [vmem:[%s5193] ss:$2 sm:$0xf]
  %s5195 = scalar_lea.vmem [#allocation4], 16
  %v5196 = vld [vmem:[%s5195] ss:$2 sm:$0xf]
  %s5197 = scalar_lea.vmem [#allocation4], 24
  %v5198 = vld [vmem:[%s5197] ss:$2 sm:$0xf]
  %s5199 = scalar_lea.vmem [#allocation4], 32
  %v5200 = vld [vmem:[%s5199] ss:$2 sm:$0xf]
  %s5201 = scalar_lea.vmem [#allocation4], 40
  %v5202 = vld [vmem:[%s5201] ss:$2 sm:$0xf]
  %s5203 = scalar_lea.vmem [#allocation4], 48
  %v5204 = vld [vmem:[%s5203] ss:$2 sm:$0xf]
  %s5205 = scalar_lea.vmem [#allocation4], 56
  %v5206 = vld [vmem:[%s5205] ss:$2 sm:$0xf]
  %s5207 = scalar_lea.vmem [#allocation4], 64
  %v5208 = vld [vmem:[%s5207] ss:$2 sm:$0xf]
  %s5209 = scalar_lea.vmem [#allocation4], 72
  %v5210 = vld [vmem:[%s5209] ss:$2 sm:$0xf]
  %s5211 = scalar_lea.vmem [#allocation4], 80
  %v5212 = vld [vmem:[%s5211] ss:$2 sm:$0xf]
  %s5213 = scalar_lea.vmem [#allocation4], 88
  %v5214 = vld [vmem:[%s5213] ss:$2 sm:$0xf]
  %s5215 = scalar_lea.vmem [#allocation4], 96
  %v5216 = vld [vmem:[%s5215] ss:$2 sm:$0xf]
  %s5217 = scalar_lea.vmem [#allocation4], 104
  %v5218 = vld [vmem:[%s5217] ss:$2 sm:$0xf]
  %s5219 = scalar_lea.vmem [#allocation4], 112
  %v5220 = vld [vmem:[%s5219] ss:$2 sm:$0xf]
  %s5221 = scalar_lea.vmem [#allocation4], 120
  %v5222 = vld [vmem:[%s5221] ss:$2 sm:$0xf]
  %s5223 = scalar_lea.vmem [#allocation4], 128
  %v5224 = vld [vmem:[%s5223] ss:$2 sm:$0xf]
  %s5225 = scalar_lea.vmem [#allocation4], 136
  %v5226 = vld [vmem:[%s5225] ss:$2 sm:$0xf]
  %s5227 = scalar_lea.vmem [#allocation4], 144
  %v5228 = vld [vmem:[%s5227] ss:$2 sm:$0xf]
  %s5229 = scalar_lea.vmem [#allocation4], 152
  %v5230 = vld [vmem:[%s5229] ss:$2 sm:$0xf]
  %s5231 = scalar_lea.vmem [#allocation4], 160
  %v5232 = vld [vmem:[%s5231] ss:$2 sm:$0xf]
  %s5233 = scalar_lea.vmem [#allocation4], 168
  %v5234 = vld [vmem:[%s5233] ss:$2 sm:$0xf]
  %s5235 = scalar_lea.vmem [#allocation4], 176
  %v5236 = vld [vmem:[%s5235] ss:$2 sm:$0xf]
  %s5237 = scalar_lea.vmem [#allocation4], 184
  %v5238 = vld [vmem:[%s5237] ss:$2 sm:$0xf]
  %s5239 = scalar_lea.vmem [#allocation4], 192
  %v5240 = vld [vmem:[%s5239] ss:$2 sm:$0xf]
  %s5241 = scalar_lea.vmem [#allocation4], 200
  %v5242 = vld [vmem:[%s5241] ss:$2 sm:$0xf]
  %s5243 = scalar_lea.vmem [#allocation4], 208
  %v5244 = vld [vmem:[%s5243] ss:$2 sm:$0xf]
  %s5245 = scalar_lea.vmem [#allocation4], 216
  %v5246 = vld [vmem:[%s5245] ss:$2 sm:$0xf]
  %s5247 = scalar_lea.vmem [#allocation4], 224
  %v5248 = vld [vmem:[%s5247] ss:$2 sm:$0xf]
  %s5249 = scalar_lea.vmem [#allocation4], 232
  %v5250 = vld [vmem:[%s5249] ss:$2 sm:$0xf]
  %s5251 = scalar_lea.vmem [#allocation4], 240
  %v5252 = vld [vmem:[%s5251] ss:$2 sm:$0xf]
  %s5253 = scalar_lea.vmem [#allocation4], 248
  %v5254 = vld [vmem:[%s5253] ss:$2 sm:$0xf]
  %s5255 = scalar_lea.vmem [#allocation4], 256
  %v5256 = vld [vmem:[%s5255] ss:$2 sm:$0xf]
  %s5257 = scalar_lea.vmem [#allocation4], 264
  %v5258 = vld [vmem:[%s5257] ss:$2 sm:$0xf]
  %s5259 = scalar_lea.vmem [#allocation4], 272
  %v5260 = vld [vmem:[%s5259] ss:$2 sm:$0xf]
  %s5261 = scalar_lea.vmem [#allocation4], 280
  %v5262 = vld [vmem:[%s5261] ss:$2 sm:$0xf]
  %s5263 = scalar_lea.vmem [#allocation4], 288
  %v5264 = vld [vmem:[%s5263] ss:$2 sm:$0xf]
  %s5265 = scalar_lea.vmem [#allocation4], 296
  %v5266 = vld [vmem:[%s5265] ss:$2 sm:$0xf]
  %s5267 = scalar_lea.vmem [#allocation4], 304
  %v5268 = vld [vmem:[%s5267] ss:$2 sm:$0xf]
  %s5269 = scalar_lea.vmem [#allocation4], 312
  %v5270 = vld [vmem:[%s5269] ss:$2 sm:$0xf]
  %s5271 = scalar_lea.vmem [#allocation4], 320
  %v5272 = vld [vmem:[%s5271] ss:$2 sm:$0xf]
  %s5273 = scalar_lea.vmem [#allocation4], 328
  %v5274 = vld [vmem:[%s5273] ss:$2 sm:$0xf]
  %s5275 = scalar_lea.vmem [#allocation4], 336
  %v5276 = vld [vmem:[%s5275] ss:$2 sm:$0xf]
  %s5277 = scalar_lea.vmem [#allocation4], 344
  %v5278 = vld [vmem:[%s5277] ss:$2 sm:$0xf]
  %s5279 = scalar_lea.vmem [#allocation4], 352
  %v5280 = vld [vmem:[%s5279] ss:$2 sm:$0xf]
  %s5281 = scalar_lea.vmem [#allocation4], 360
  %v5282 = vld [vmem:[%s5281] ss:$2 sm:$0xf]
  %s5283 = scalar_lea.vmem [#allocation4], 368
  %v5284 = vld [vmem:[%s5283] ss:$2 sm:$0xf]
  %s5285 = scalar_lea.vmem [#allocation4], 376
  %v5286 = vld [vmem:[%s5285] ss:$2 sm:$0xf]
  %s5287 = scalar_lea.vmem [#allocation4], 384
  %v5288 = vld [vmem:[%s5287] ss:$2 sm:$0xf]
  %s5289 = scalar_lea.vmem [#allocation4], 392
  %v5290 = vld [vmem:[%s5289] ss:$2 sm:$0xf]
  %s5291 = scalar_lea.vmem [#allocation4], 400
  %v5292 = vld [vmem:[%s5291] ss:$2 sm:$0xf]
  %s5293 = scalar_lea.vmem [#allocation4], 408
  %v5294 = vld [vmem:[%s5293] ss:$2 sm:$0xf]
  %s5295 = scalar_lea.vmem [#allocation4], 416
  %v5296 = vld [vmem:[%s5295] ss:$2 sm:$0xf]
  %s5297 = scalar_lea.vmem [#allocation4], 424
  %v5298 = vld [vmem:[%s5297] ss:$2 sm:$0xf]
  %s5299 = scalar_lea.vmem [#allocation4], 432
  %v5300 = vld [vmem:[%s5299] ss:$2 sm:$0xf]
  %s5301 = scalar_lea.vmem [#allocation4], 440
  %v5302 = vld [vmem:[%s5301] ss:$2 sm:$0xf]
  %s5303 = scalar_lea.vmem [#allocation4], 448
  %v5304 = vld [vmem:[%s5303] ss:$2 sm:$0xf]
  %s5305 = scalar_lea.vmem [#allocation4], 456
  %v5306 = vld [vmem:[%s5305] ss:$2 sm:$0xf]
  %s5307 = scalar_lea.vmem [#allocation4], 464
  %v5308 = vld [vmem:[%s5307] ss:$2 sm:$0xf]
  %s5309 = scalar_lea.vmem [#allocation4], 472
  %v5310 = vld [vmem:[%s5309] ss:$2 sm:$0xf]
  %s5311 = scalar_lea.vmem [#allocation4], 480
  %v5312 = vld [vmem:[%s5311] ss:$2 sm:$0xf]
  %s5313 = scalar_lea.vmem [#allocation4], 488
  %v5314 = vld [vmem:[%s5313] ss:$2 sm:$0xf]
  %s5315 = scalar_lea.vmem [#allocation4], 496
  %v5316 = vld [vmem:[%s5315] ss:$2 sm:$0xf]
  %s5317 = scalar_lea.vmem [#allocation4], 504
  %v5318 = vld [vmem:[%s5317] ss:$2 sm:$0xf]
  %s5319 = scalar_lea.vmem [#allocation4], 1
  %v5320 = vld [vmem:[%s5319] ss:$2 sm:$0xf]
  %s5321 = scalar_lea.vmem [#allocation4], 9
  %v5322 = vld [vmem:[%s5321] ss:$2 sm:$0xf]
  %s5323 = scalar_lea.vmem [#allocation4], 17
  %v5324 = vld [vmem:[%s5323] ss:$2 sm:$0xf]
  %s5325 = scalar_lea.vmem [#allocation4], 25
  %v5326 = vld [vmem:[%s5325] ss:$2 sm:$0xf]
  %s5327 = scalar_lea.vmem [#allocation4], 33
  %v5328 = vld [vmem:[%s5327] ss:$2 sm:$0xf]
  %s5329 = scalar_lea.vmem [#allocation4], 41
  %v5330 = vld [vmem:[%s5329] ss:$2 sm:$0xf]
  %s5331 = scalar_lea.vmem [#allocation4], 49
  %v5332 = vld [vmem:[%s5331] ss:$2 sm:$0xf]
  %s5333 = scalar_lea.vmem [#allocation4], 57
  %v5334 = vld [vmem:[%s5333] ss:$2 sm:$0xf]
  %s5335 = scalar_lea.vmem [#allocation4], 65
  %v5336 = vld [vmem:[%s5335] ss:$2 sm:$0xf]
  %s5337 = scalar_lea.vmem [#allocation4], 73
  %v5338 = vld [vmem:[%s5337] ss:$2 sm:$0xf]
  %s5339 = scalar_lea.vmem [#allocation4], 81
  %v5340 = vld [vmem:[%s5339] ss:$2 sm:$0xf]
  %s5341 = scalar_lea.vmem [#allocation4], 89
  %v5342 = vld [vmem:[%s5341] ss:$2 sm:$0xf]
  %s5343 = scalar_lea.vmem [#allocation4], 97
  %v5344 = vld [vmem:[%s5343] ss:$2 sm:$0xf]
  %s5345 = scalar_lea.vmem [#allocation4], 105
  %v5346 = vld [vmem:[%s5345] ss:$2 sm:$0xf]
  %s5347 = scalar_lea.vmem [#allocation4], 113
  %v5348 = vld [vmem:[%s5347] ss:$2 sm:$0xf]
  %s5349 = scalar_lea.vmem [#allocation4], 121
  %v5350 = vld [vmem:[%s5349] ss:$2 sm:$0xf]
  %s5351 = scalar_lea.vmem [#allocation4], 129
  %v5352 = vld [vmem:[%s5351] ss:$2 sm:$0xf]
  %s5353 = scalar_lea.vmem [#allocation4], 137
  %v5354 = vld [vmem:[%s5353] ss:$2 sm:$0xf]
  %s5355 = scalar_lea.vmem [#allocation4], 145
  %v5356 = vld [vmem:[%s5355] ss:$2 sm:$0xf]
  %s5357 = scalar_lea.vmem [#allocation4], 153
  %v5358 = vld [vmem:[%s5357] ss:$2 sm:$0xf]
  %s5359 = scalar_lea.vmem [#allocation4], 161
  %v5360 = vld [vmem:[%s5359] ss:$2 sm:$0xf]
  %s5361 = scalar_lea.vmem [#allocation4], 169
  %v5362 = vld [vmem:[%s5361] ss:$2 sm:$0xf]
  %s5363 = scalar_lea.vmem [#allocation4], 177
  %v5364 = vld [vmem:[%s5363] ss:$2 sm:$0xf]
  %s5365 = scalar_lea.vmem [#allocation4], 185
  %v5366 = vld [vmem:[%s5365] ss:$2 sm:$0xf]
  %s5367 = scalar_lea.vmem [#allocation4], 193
  %v5368 = vld [vmem:[%s5367] ss:$2 sm:$0xf]
  %s5369 = scalar_lea.vmem [#allocation4], 201
  %v5370 = vld [vmem:[%s5369] ss:$2 sm:$0xf]
  %s5371 = scalar_lea.vmem [#allocation4], 209
  %v5372 = vld [vmem:[%s5371] ss:$2 sm:$0xf]
  %s5373 = scalar_lea.vmem [#allocation4], 217
  %v5374 = vld [vmem:[%s5373] ss:$2 sm:$0xf]
  %s5375 = scalar_lea.vmem [#allocation4], 225
  %v5376 = vld [vmem:[%s5375] ss:$2 sm:$0xf]
  %s5377 = scalar_lea.vmem [#allocation4], 233
  %v5378 = vld [vmem:[%s5377] ss:$2 sm:$0xf]
  %s5379 = scalar_lea.vmem [#allocation4], 241
  %v5380 = vld [vmem:[%s5379] ss:$2 sm:$0xf]
  %s5381 = scalar_lea.vmem [#allocation4], 249
  %v5382 = vld [vmem:[%s5381] ss:$2 sm:$0xf]
  %s5383 = scalar_lea.vmem [#allocation4], 257
  %v5384 = vld [vmem:[%s5383] ss:$2 sm:$0xf]
  %s5385 = scalar_lea.vmem [#allocation4], 265
  %v5386 = vld [vmem:[%s5385] ss:$2 sm:$0xf]
  %s5387 = scalar_lea.vmem [#allocation4], 273
  %v5388 = vld [vmem:[%s5387] ss:$2 sm:$0xf]
  %s5389 = scalar_lea.vmem [#allocation4], 281
  %v5390 = vld [vmem:[%s5389] ss:$2 sm:$0xf]
  %s5391 = scalar_lea.vmem [#allocation4], 289
  %v5392 = vld [vmem:[%s5391] ss:$2 sm:$0xf]
  %s5393 = scalar_lea.vmem [#allocation4], 297
  %v5394 = vld [vmem:[%s5393] ss:$2 sm:$0xf]
  %s5395 = scalar_lea.vmem [#allocation4], 305
  %v5396 = vld [vmem:[%s5395] ss:$2 sm:$0xf]
  %s5397 = scalar_lea.vmem [#allocation4], 313
  %v5398 = vld [vmem:[%s5397] ss:$2 sm:$0xf]
  %s5399 = scalar_lea.vmem [#allocation4], 321
  %v5400 = vld [vmem:[%s5399] ss:$2 sm:$0xf]
  %s5401 = scalar_lea.vmem [#allocation4], 329
  %v5402 = vld [vmem:[%s5401] ss:$2 sm:$0xf]
  %s5403 = scalar_lea.vmem [#allocation4], 337
  %v5404 = vld [vmem:[%s5403] ss:$2 sm:$0xf]
  %s5405 = scalar_lea.vmem [#allocation4], 345
  %v5406 = vld [vmem:[%s5405] ss:$2 sm:$0xf]
  %s5407 = scalar_lea.vmem [#allocation4], 353
  %v5408 = vld [vmem:[%s5407] ss:$2 sm:$0xf]
  %s5409 = scalar_lea.vmem [#allocation4], 361
  %v5410 = vld [vmem:[%s5409] ss:$2 sm:$0xf]
  %s5411 = scalar_lea.vmem [#allocation4], 369
  %v5412 = vld [vmem:[%s5411] ss:$2 sm:$0xf]
  %s5413 = scalar_lea.vmem [#allocation4], 377
  %v5414 = vld [vmem:[%s5413] ss:$2 sm:$0xf]
  %s5415 = scalar_lea.vmem [#allocation4], 385
  %v5416 = vld [vmem:[%s5415] ss:$2 sm:$0xf]
  %s5417 = scalar_lea.vmem [#allocation4], 393
  %v5418 = vld [vmem:[%s5417] ss:$2 sm:$0xf]
  %s5419 = scalar_lea.vmem [#allocation4], 401
  %v5420 = vld [vmem:[%s5419] ss:$2 sm:$0xf]
  %s5421 = scalar_lea.vmem [#allocation4], 409
  %v5422 = vld [vmem:[%s5421] ss:$2 sm:$0xf]
  %s5423 = scalar_lea.vmem [#allocation4], 417
  %v5424 = vld [vmem:[%s5423] ss:$2 sm:$0xf]
  %s5425 = scalar_lea.vmem [#allocation4], 425
  %v5426 = vld [vmem:[%s5425] ss:$2 sm:$0xf]
  %s5427 = scalar_lea.vmem [#allocation4], 433
  %v5428 = vld [vmem:[%s5427] ss:$2 sm:$0xf]
  %s5429 = scalar_lea.vmem [#allocation4], 441
  %v5430 = vld [vmem:[%s5429] ss:$2 sm:$0xf]
  %s5431 = scalar_lea.vmem [#allocation4], 449
  %v5432 = vld [vmem:[%s5431] ss:$2 sm:$0xf]
  %s5433 = scalar_lea.vmem [#allocation4], 457
  %v5434 = vld [vmem:[%s5433] ss:$2 sm:$0xf]
  %s5435 = scalar_lea.vmem [#allocation4], 465
  %v5436 = vld [vmem:[%s5435] ss:$2 sm:$0xf]
  %s5437 = scalar_lea.vmem [#allocation4], 473
  %v5438 = vld [vmem:[%s5437] ss:$2 sm:$0xf]
  %s5439 = scalar_lea.vmem [#allocation4], 481
  %v5440 = vld [vmem:[%s5439] ss:$2 sm:$0xf]
  %s5441 = scalar_lea.vmem [#allocation4], 489
  %v5442 = vld [vmem:[%s5441] ss:$2 sm:$0xf]
  %s5443 = scalar_lea.vmem [#allocation4], 497
  %v5444 = vld [vmem:[%s5443] ss:$2 sm:$0xf]
  %s5445 = scalar_lea.vmem [#allocation4], 505
  %v5446 = vld [vmem:[%s5445] ss:$2 sm:$0xf]
  %v5447 = vmax.f32 %v5192, %v5320
  %v5448 = vmax.f32 %v5194, %v5322
  %v5449 = vmax.f32 %v5196, %v5324
  %v5450 = vmax.f32 %v5198, %v5326
  %v5451 = vmax.f32 %v5200, %v5328
  %v5452 = vmax.f32 %v5202, %v5330
  %v5453 = vmax.f32 %v5204, %v5332
  %v5454 = vmax.f32 %v5206, %v5334
  %v5455 = vmax.f32 %v5208, %v5336
  %v5456 = vmax.f32 %v5210, %v5338
  %v5457 = vmax.f32 %v5212, %v5340
  %v5458 = vmax.f32 %v5214, %v5342
  %v5459 = vmax.f32 %v5216, %v5344
  %v5460 = vmax.f32 %v5218, %v5346
  %v5461 = vmax.f32 %v5220, %v5348
  %v5462 = vmax.f32 %v5222, %v5350
  %v5463 = vmax.f32 %v5224, %v5352
  %v5464 = vmax.f32 %v5226, %v5354
  %v5465 = vmax.f32 %v5228, %v5356
  %v5466 = vmax.f32 %v5230, %v5358
  %v5467 = vmax.f32 %v5232, %v5360
  %v5468 = vmax.f32 %v5234, %v5362
  %v5469 = vmax.f32 %v5236, %v5364
  %v5470 = vmax.f32 %v5238, %v5366
  %v5471 = vmax.f32 %v5240, %v5368
  %v5472 = vmax.f32 %v5242, %v5370
  %v5473 = vmax.f32 %v5244, %v5372
  %v5474 = vmax.f32 %v5246, %v5374
  %v5475 = vmax.f32 %v5248, %v5376
  %v5476 = vmax.f32 %v5250, %v5378
  %v5477 = vmax.f32 %v5252, %v5380
  %v5478 = vmax.f32 %v5254, %v5382
  %v5479 = vmax.f32 %v5256, %v5384
  %v5480 = vmax.f32 %v5258, %v5386
  %v5481 = vmax.f32 %v5260, %v5388
  %v5482 = vmax.f32 %v5262, %v5390
  %v5483 = vmax.f32 %v5264, %v5392
  %v5484 = vmax.f32 %v5266, %v5394
  %v5485 = vmax.f32 %v5268, %v5396
  %v5486 = vmax.f32 %v5270, %v5398
  %v5487 = vmax.f32 %v5272, %v5400
  %v5488 = vmax.f32 %v5274, %v5402
  %v5489 = vmax.f32 %v5276, %v5404
  %v5490 = vmax.f32 %v5278, %v5406
  %v5491 = vmax.f32 %v5280, %v5408
  %v5492 = vmax.f32 %v5282, %v5410
  %v5493 = vmax.f32 %v5284, %v5412
  %v5494 = vmax.f32 %v5286, %v5414
  %v5495 = vmax.f32 %v5288, %v5416
  %v5496 = vmax.f32 %v5290, %v5418
  %v5497 = vmax.f32 %v5292, %v5420
  %v5498 = vmax.f32 %v5294, %v5422
  %v5499 = vmax.f32 %v5296, %v5424
  %v5500 = vmax.f32 %v5298, %v5426
  %v5501 = vmax.f32 %v5300, %v5428
  %v5502 = vmax.f32 %v5302, %v5430
  %v5503 = vmax.f32 %v5304, %v5432
  %v5504 = vmax.f32 %v5306, %v5434
  %v5505 = vmax.f32 %v5308, %v5436
  %v5506 = vmax.f32 %v5310, %v5438
  %v5507 = vmax.f32 %v5312, %v5440
  %v5508 = vmax.f32 %v5314, %v5442
  %v5509 = vmax.f32 %v5316, %v5444
  %v5510 = vmax.f32 %v5318, %v5446
  %v5575 = vrot.slane %v5448, 7
  %vm5576 = vcmask 1041409
  %v5577 = vsel %vm5576, %v5575, %v5447
  %v5578 = vrot.slane %v5449, 6
  %vm5579 = vcmask 1042434
  %v5580 = vsel %vm5579, %v5578, %v5577
  %v5581 = vrot.slane %v5450, 5
  %vm5582 = vcmask 1043459
  %v5583 = vsel %vm5582, %v5581, %v5580
  %v5584 = vrot.slane %v5451, 4
  %vm5585 = vcmask 1044484
  %v5586 = vsel %vm5585, %v5584, %v5583
  %v5587 = vrot.slane %v5452, 3
  %vm5588 = vcmask 1045509
  %v5589 = vsel %vm5588, %v5587, %v5586
  %v5590 = vrot.slane %v5453, 2
  %vm5591 = vcmask 1046534
  %v5592 = vsel %vm5591, %v5590, %v5589
  %v5593 = vrot.slane %v5454, 1
  %vm5594 = vcmask 1047559
  %v5595 = vsel %vm5594, %v5593, %v5592
  %v5596 = vrot.slane %v5456, 7
  %v5597 = vsel %vm5576, %v5596, %v5455
  %v5598 = vrot.slane %v5457, 6
  %v5599 = vsel %vm5579, %v5598, %v5597
  %v5600 = vrot.slane %v5458, 5
  %v5601 = vsel %vm5582, %v5600, %v5599
  %v5602 = vrot.slane %v5459, 4
  %v5603 = vsel %vm5585, %v5602, %v5601
  %v5604 = vrot.slane %v5460, 3
  %v5605 = vsel %vm5588, %v5604, %v5603
  %v5606 = vrot.slane %v5461, 2
  %v5607 = vsel %vm5591, %v5606, %v5605
  %v5608 = vrot.slane %v5462, 1
  %v5609 = vsel %vm5594, %v5608, %v5607
  %v5610 = vrot.slane %v5464, 7
  %v5611 = vsel %vm5576, %v5610, %v5463
  %v5612 = vrot.slane %v5465, 6
  %v5613 = vsel %vm5579, %v5612, %v5611
  %v5614 = vrot.slane %v5466, 5
  %v5615 = vsel %vm5582, %v5614, %v5613
  %v5616 = vrot.slane %v5467, 4
  %v5617 = vsel %vm5585, %v5616, %v5615
  %v5618 = vrot.slane %v5468, 3
  %v5619 = vsel %vm5588, %v5618, %v5617
  %v5620 = vrot.slane %v5469, 2
  %v5621 = vsel %vm5591, %v5620, %v5619
  %v5622 = vrot.slane %v5470, 1
  %v5623 = vsel %vm5594, %v5622, %v5621
  %v5624 = vrot.slane %v5472, 7
  %v5625 = vsel %vm5576, %v5624, %v5471
  %v5626 = vrot.slane %v5473, 6
  %v5627 = vsel %vm5579, %v5626, %v5625
  %v5628 = vrot.slane %v5474, 5
  %v5629 = vsel %vm5582, %v5628, %v5627
  %v5630 = vrot.slane %v5475, 4
  %v5631 = vsel %vm5585, %v5630, %v5629
  %v5632 = vrot.slane %v5476, 3
  %v5633 = vsel %vm5588, %v5632, %v5631
  %v5634 = vrot.slane %v5477, 2
  %v5635 = vsel %vm5591, %v5634, %v5633
  %v5636 = vrot.slane %v5478, 1
  %v5637 = vsel %vm5594, %v5636, %v5635
  %v5638 = vrot.slane %v5480, 7
  %v5639 = vsel %vm5576, %v5638, %v5479
  %v5640 = vrot.slane %v5481, 6
  %v5641 = vsel %vm5579, %v5640, %v5639
  %v5642 = vrot.slane %v5482, 5
  %v5643 = vsel %vm5582, %v5642, %v5641
  %v5644 = vrot.slane %v5483, 4
  %v5645 = vsel %vm5585, %v5644, %v5643
  %v5646 = vrot.slane %v5484, 3
  %v5647 = vsel %vm5588, %v5646, %v5645
  %v5648 = vrot.slane %v5485, 2
  %v5649 = vsel %vm5591, %v5648, %v5647
  %v5650 = vrot.slane %v5486, 1
  %v5651 = vsel %vm5594, %v5650, %v5649
  %v5652 = vrot.slane %v5488, 7
  %v5653 = vsel %vm5576, %v5652, %v5487
  %v5654 = vrot.slane %v5489, 6
  %v5655 = vsel %vm5579, %v5654, %v5653
  %v5656 = vrot.slane %v5490, 5
  %v5657 = vsel %vm5582, %v5656, %v5655
  %v5658 = vrot.slane %v5491, 4
  %v5659 = vsel %vm5585, %v5658, %v5657
  %v5660 = vrot.slane %v5492, 3
  %v5661 = vsel %vm5588, %v5660, %v5659
  %v5662 = vrot.slane %v5493, 2
  %v5663 = vsel %vm5591, %v5662, %v5661
  %v5664 = vrot.slane %v5494, 1
  %v5665 = vsel %vm5594, %v5664, %v5663
  %v5666 = vrot.slane %v5496, 7
  %v5667 = vsel %vm5576, %v5666, %v5495
  %v5668 = vrot.slane %v5497, 6
  %v5669 = vsel %vm5579, %v5668, %v5667
  %v5670 = vrot.slane %v5498, 5
  %v5671 = vsel %vm5582, %v5670, %v5669
  %v5672 = vrot.slane %v5499, 4
  %v5673 = vsel %vm5585, %v5672, %v5671
  %v5674 = vrot.slane %v5500, 3
  %v5675 = vsel %vm5588, %v5674, %v5673
  %v5676 = vrot.slane %v5501, 2
  %v5677 = vsel %vm5591, %v5676, %v5675
  %v5678 = vrot.slane %v5502, 1
  %v5679 = vsel %vm5594, %v5678, %v5677
  %v5680 = vrot.slane %v5504, 7
  %v5681 = vsel %vm5576, %v5680, %v5503
  %v5682 = vrot.slane %v5505, 6
  %v5683 = vsel %vm5579, %v5682, %v5681
  %v5684 = vrot.slane %v5506, 5
  %v5685 = vsel %vm5582, %v5684, %v5683
  %v5686 = vrot.slane %v5507, 4
  %v5687 = vsel %vm5585, %v5686, %v5685
  %v5688 = vrot.slane %v5508, 3
  %v5689 = vsel %vm5588, %v5688, %v5687
  %v5690 = vrot.slane %v5509, 2
  %v5691 = vsel %vm5591, %v5690, %v5689
  %v5692 = vrot.slane %v5510, 1
  %v5693 = vsel %vm5594, %v5692, %v5691
  %v5702 = vrot.slane %v5447, 1
  %v5703 = vsel %vm5576, %v5448, %v5702
  %v5704 = vrot.slane %v5449, 7
  %v5705 = vsel %vm5579, %v5704, %v5703
  %v5706 = vrot.slane %v5450, 6
  %v5707 = vsel %vm5582, %v5706, %v5705
  %v5708 = vrot.slane %v5451, 5
  %v5709 = vsel %vm5585, %v5708, %v5707
  %v5710 = vrot.slane %v5452, 4
  %v5711 = vsel %vm5588, %v5710, %v5709
  %v5712 = vrot.slane %v5453, 3
  %v5713 = vsel %vm5591, %v5712, %v5711
  %v5714 = vrot.slane %v5454, 2
  %v5715 = vsel %vm5594, %v5714, %v5713
  %v5716 = vrot.slane %v5455, 1
  %v5717 = vsel %vm5576, %v5456, %v5716
  %v5718 = vrot.slane %v5457, 7
  %v5719 = vsel %vm5579, %v5718, %v5717
  %v5720 = vrot.slane %v5458, 6
  %v5721 = vsel %vm5582, %v5720, %v5719
  %v5722 = vrot.slane %v5459, 5
  %v5723 = vsel %vm5585, %v5722, %v5721
  %v5724 = vrot.slane %v5460, 4
  %v5725 = vsel %vm5588, %v5724, %v5723
  %v5726 = vrot.slane %v5461, 3
  %v5727 = vsel %vm5591, %v5726, %v5725
  %v5728 = vrot.slane %v5462, 2
  %v5729 = vsel %vm5594, %v5728, %v5727
  %v5730 = vrot.slane %v5463, 1
  %v5731 = vsel %vm5576, %v5464, %v5730
  %v5732 = vrot.slane %v5465, 7
  %v5733 = vsel %vm5579, %v5732, %v5731
  %v5734 = vrot.slane %v5466, 6
  %v5735 = vsel %vm5582, %v5734, %v5733
  %v5736 = vrot.slane %v5467, 5
  %v5737 = vsel %vm5585, %v5736, %v5735
  %v5738 = vrot.slane %v5468, 4
  %v5739 = vsel %vm5588, %v5738, %v5737
  %v5740 = vrot.slane %v5469, 3
  %v5741 = vsel %vm5591, %v5740, %v5739
  %v5742 = vrot.slane %v5470, 2
  %v5743 = vsel %vm5594, %v5742, %v5741
  %v5744 = vrot.slane %v5471, 1
  %v5745 = vsel %vm5576, %v5472, %v5744
  %v5746 = vrot.slane %v5473, 7
  %v5747 = vsel %vm5579, %v5746, %v5745
  %v5748 = vrot.slane %v5474, 6
  %v5749 = vsel %vm5582, %v5748, %v5747
  %v5750 = vrot.slane %v5475, 5
  %v5751 = vsel %vm5585, %v5750, %v5749
  %v5752 = vrot.slane %v5476, 4
  %v5753 = vsel %vm5588, %v5752, %v5751
  %v5754 = vrot.slane %v5477, 3
  %v5755 = vsel %vm5591, %v5754, %v5753
  %v5756 = vrot.slane %v5478, 2
  %v5757 = vsel %vm5594, %v5756, %v5755
  %v5758 = vrot.slane %v5479, 1
  %v5759 = vsel %vm5576, %v5480, %v5758
  %v5760 = vrot.slane %v5481, 7
  %v5761 = vsel %vm5579, %v5760, %v5759
  %v5762 = vrot.slane %v5482, 6
  %v5763 = vsel %vm5582, %v5762, %v5761
  %v5764 = vrot.slane %v5483, 5
  %v5765 = vsel %vm5585, %v5764, %v5763
  %v5766 = vrot.slane %v5484, 4
  %v5767 = vsel %vm5588, %v5766, %v5765
  %v5768 = vrot.slane %v5485, 3
  %v5769 = vsel %vm5591, %v5768, %v5767
  %v5770 = vrot.slane %v5486, 2
  %v5771 = vsel %vm5594, %v5770, %v5769
  %v5772 = vrot.slane %v5487, 1
  %v5773 = vsel %vm5576, %v5488, %v5772
  %v5774 = vrot.slane %v5489, 7
  %v5775 = vsel %vm5579, %v5774, %v5773
  %v5776 = vrot.slane %v5490, 6
  %v5777 = vsel %vm5582, %v5776, %v5775
  %v5778 = vrot.slane %v5491, 5
  %v5779 = vsel %vm5585, %v5778, %v5777
  %v5780 = vrot.slane %v5492, 4
  %v5781 = vsel %vm5588, %v5780, %v5779
  %v5782 = vrot.slane %v5493, 3
  %v5783 = vsel %vm5591, %v5782, %v5781
  %v5784 = vrot.slane %v5494, 2
  %v5785 = vsel %vm5594, %v5784, %v5783
  %v5786 = vrot.slane %v5495, 1
  %v5787 = vsel %vm5576, %v5496, %v5786
  %v5788 = vrot.slane %v5497, 7
  %v5789 = vsel %vm5579, %v5788, %v5787
  %v5790 = vrot.slane %v5498, 6
  %v5791 = vsel %vm5582, %v5790, %v5789
  %v5792 = vrot.slane %v5499, 5
  %v5793 = vsel %vm5585, %v5792, %v5791
  %v5794 = vrot.slane %v5500, 4
  %v5795 = vsel %vm5588, %v5794, %v5793
  %v5796 = vrot.slane %v5501, 3
  %v5797 = vsel %vm5591, %v5796, %v5795
  %v5798 = vrot.slane %v5502, 2
  %v5799 = vsel %vm5594, %v5798, %v5797
  %v5800 = vrot.slane %v5503, 1
  %v5801 = vsel %vm5576, %v5504, %v5800
  %v5802 = vrot.slane %v5505, 7
  %v5803 = vsel %vm5579, %v5802, %v5801
  %v5804 = vrot.slane %v5506, 6
  %v5805 = vsel %vm5582, %v5804, %v5803
  %v5806 = vrot.slane %v5507, 5
  %v5807 = vsel %vm5585, %v5806, %v5805
  %v5808 = vrot.slane %v5508, 4
  %v5809 = vsel %vm5588, %v5808, %v5807
  %v5810 = vrot.slane %v5509, 3
  %v5811 = vsel %vm5591, %v5810, %v5809
  %v5812 = vrot.slane %v5510, 2
  %v5813 = vsel %vm5594, %v5812, %v5811
  %5814 = vrot.lane.b32.xlu0 %v5715, 64
  %v5815 = vpop.permute.xlu0 %5814
  %5816 = vrot.lane.b32.xlu0 %v5729, 64
  %v5817 = vpop.permute.xlu0 %5816
  %5818 = vrot.lane.b32.xlu0 %v5743, 64
  %v5819 = vpop.permute.xlu0 %5818
  %5820 = vrot.lane.b32.xlu0 %v5757, 64
  %v5821 = vpop.permute.xlu0 %5820
  %5822 = vrot.lane.b32.xlu0 %v5771, 64
  %v5823 = vpop.permute.xlu0 %5822
  %5824 = vrot.lane.b32.xlu0 %v5785, 64
  %v5825 = vpop.permute.xlu0 %5824
  %5826 = vrot.lane.b32.xlu0 %v5799, 64
  %v5827 = vpop.permute.xlu0 %5826
  %5828 = vrot.lane.b32.xlu0 %v5813, 64
  %v5829 = vpop.permute.xlu0 %5828
  %v5838 = vrot.slane %v5447, 2
  %v5839 = vrot.slane %v5448, 1
  %v5840 = vsel %vm5576, %v5839, %v5838
  %v5841 = vsel %vm5579, %v5449, %v5840
  %v5842 = vrot.slane %v5450, 7
  %v5843 = vsel %vm5582, %v5842, %v5841
  %v5844 = vrot.slane %v5451, 6
  %v5845 = vsel %vm5585, %v5844, %v5843
  %v5846 = vrot.slane %v5452, 5
  %v5847 = vsel %vm5588, %v5846, %v5845
  %v5848 = vrot.slane %v5453, 4
  %v5849 = vsel %vm5591, %v5848, %v5847
  %v5850 = vrot.slane %v5454, 3
  %v5851 = vsel %vm5594, %v5850, %v5849
  %v5852 = vrot.slane %v5455, 2
  %v5853 = vrot.slane %v5456, 1
  %v5854 = vsel %vm5576, %v5853, %v5852
  %v5855 = vsel %vm5579, %v5457, %v5854
  %v5856 = vrot.slane %v5458, 7
  %v5857 = vsel %vm5582, %v5856, %v5855
  %v5858 = vrot.slane %v5459, 6
  %v5859 = vsel %vm5585, %v5858, %v5857
  %v5860 = vrot.slane %v5460, 5
  %v5861 = vsel %vm5588, %v5860, %v5859
  %v5862 = vrot.slane %v5461, 4
  %v5863 = vsel %vm5591, %v5862, %v5861
  %v5864 = vrot.slane %v5462, 3
  %v5865 = vsel %vm5594, %v5864, %v5863
  %v5866 = vrot.slane %v5463, 2
  %v5867 = vrot.slane %v5464, 1
  %v5868 = vsel %vm5576, %v5867, %v5866
  %v5869 = vsel %vm5579, %v5465, %v5868
  %v5870 = vrot.slane %v5466, 7
  %v5871 = vsel %vm5582, %v5870, %v5869
  %v5872 = vrot.slane %v5467, 6
  %v5873 = vsel %vm5585, %v5872, %v5871
  %v5874 = vrot.slane %v5468, 5
  %v5875 = vsel %vm5588, %v5874, %v5873
  %v5876 = vrot.slane %v5469, 4
  %v5877 = vsel %vm5591, %v5876, %v5875
  %v5878 = vrot.slane %v5470, 3
  %v5879 = vsel %vm5594, %v5878, %v5877
  %v5880 = vrot.slane %v5471, 2
  %v5881 = vrot.slane %v5472, 1
  %v5882 = vsel %vm5576, %v5881, %v5880
  %v5883 = vsel %vm5579, %v5473, %v5882
  %v5884 = vrot.slane %v5474, 7
  %v5885 = vsel %vm5582, %v5884, %v5883
  %v5886 = vrot.slane %v5475, 6
  %v5887 = vsel %vm5585, %v5886, %v5885
  %v5888 = vrot.slane %v5476, 5
  %v5889 = vsel %vm5588, %v5888, %v5887
  %v5890 = vrot.slane %v5477, 4
  %v5891 = vsel %vm5591, %v5890, %v5889
  %v5892 = vrot.slane %v5478, 3
  %v5893 = vsel %vm5594, %v5892, %v5891
  %v5894 = vrot.slane %v5479, 2
  %v5895 = vrot.slane %v5480, 1
  %v5896 = vsel %vm5576, %v5895, %v5894
  %v5897 = vsel %vm5579, %v5481, %v5896
  %v5898 = vrot.slane %v5482, 7
  %v5899 = vsel %vm5582, %v5898, %v5897
  %v5900 = vrot.slane %v5483, 6
  %v5901 = vsel %vm5585, %v5900, %v5899
  %v5902 = vrot.slane %v5484, 5
  %v5903 = vsel %vm5588, %v5902, %v5901
  %v5904 = vrot.slane %v5485, 4
  %v5905 = vsel %vm5591, %v5904, %v5903
  %v5906 = vrot.slane %v5486, 3
  %v5907 = vsel %vm5594, %v5906, %v5905
  %v5908 = vrot.slane %v5487, 2
  %v5909 = vrot.slane %v5488, 1
  %v5910 = vsel %vm5576, %v5909, %v5908
  %v5911 = vsel %vm5579, %v5489, %v5910
  %v5912 = vrot.slane %v5490, 7
  %v5913 = vsel %vm5582, %v5912, %v5911
  %v5914 = vrot.slane %v5491, 6
  %v5915 = vsel %vm5585, %v5914, %v5913
  %v5916 = vrot.slane %v5492, 5
  %v5917 = vsel %vm5588, %v5916, %v5915
  %v5918 = vrot.slane %v5493, 4
  %v5919 = vsel %vm5591, %v5918, %v5917
  %v5920 = vrot.slane %v5494, 3
  %v5921 = vsel %vm5594, %v5920, %v5919
  %v5922 = vrot.slane %v5495, 2
  %v5923 = vrot.slane %v5496, 1
  %v5924 = vsel %vm5576, %v5923, %v5922
  %v5925 = vsel %vm5579, %v5497, %v5924
  %v5926 = vrot.slane %v5498, 7
  %v5927 = vsel %vm5582, %v5926, %v5925
  %v5928 = vrot.slane %v5499, 6
  %v5929 = vsel %vm5585, %v5928, %v5927
  %v5930 = vrot.slane %v5500, 5
  %v5931 = vsel %vm5588, %v5930, %v5929
  %v5932 = vrot.slane %v5501, 4
  %v5933 = vsel %vm5591, %v5932, %v5931
  %v5934 = vrot.slane %v5502, 3
  %v5935 = vsel %vm5594, %v5934, %v5933
  %v5936 = vrot.slane %v5503, 2
  %v5937 = vrot.slane %v5504, 1
  %v5938 = vsel %vm5576, %v5937, %v5936
  %v5939 = vsel %vm5579, %v5505, %v5938
  %v5940 = vrot.slane %v5506, 7
  %v5941 = vsel %vm5582, %v5940, %v5939
  %v5942 = vrot.slane %v5507, 6
  %v5943 = vsel %vm5585, %v5942, %v5941
  %v5944 = vrot.slane %v5508, 5
  %v5945 = vsel %vm5588, %v5944, %v5943
  %v5946 = vrot.slane %v5509, 4
  %v5947 = vsel %vm5591, %v5946, %v5945
  %v5948 = vrot.slane %v5510, 3
  %v5949 = vsel %vm5594, %v5948, %v5947
  %v5958 = vrot.slane %v5447, 3
  %v5959 = vrot.slane %v5448, 2
  %v5960 = vsel %vm5576, %v5959, %v5958
  %v5961 = vrot.slane %v5449, 1
  %v5962 = vsel %vm5579, %v5961, %v5960
  %v5963 = vsel %vm5582, %v5450, %v5962
  %v5964 = vrot.slane %v5451, 7
  %v5965 = vsel %vm5585, %v5964, %v5963
  %v5966 = vrot.slane %v5452, 6
  %v5967 = vsel %vm5588, %v5966, %v5965
  %v5968 = vrot.slane %v5453, 5
  %v5969 = vsel %vm5591, %v5968, %v5967
  %v5970 = vrot.slane %v5454, 4
  %v5971 = vsel %vm5594, %v5970, %v5969
  %v5972 = vrot.slane %v5455, 3
  %v5973 = vrot.slane %v5456, 2
  %v5974 = vsel %vm5576, %v5973, %v5972
  %v5975 = vrot.slane %v5457, 1
  %v5976 = vsel %vm5579, %v5975, %v5974
  %v5977 = vsel %vm5582, %v5458, %v5976
  %v5978 = vrot.slane %v5459, 7
  %v5979 = vsel %vm5585, %v5978, %v5977
  %v5980 = vrot.slane %v5460, 6
  %v5981 = vsel %vm5588, %v5980, %v5979
  %v5982 = vrot.slane %v5461, 5
  %v5983 = vsel %vm5591, %v5982, %v5981
  %v5984 = vrot.slane %v5462, 4
  %v5985 = vsel %vm5594, %v5984, %v5983
  %v5986 = vrot.slane %v5463, 3
  %v5987 = vrot.slane %v5464, 2
  %v5988 = vsel %vm5576, %v5987, %v5986
  %v5989 = vrot.slane %v5465, 1
  %v5990 = vsel %vm5579, %v5989, %v5988
  %v5991 = vsel %vm5582, %v5466, %v5990
  %v5992 = vrot.slane %v5467, 7
  %v5993 = vsel %vm5585, %v5992, %v5991
  %v5994 = vrot.slane %v5468, 6
  %v5995 = vsel %vm5588, %v5994, %v5993
  %v5996 = vrot.slane %v5469, 5
  %v5997 = vsel %vm5591, %v5996, %v5995
  %v5998 = vrot.slane %v5470, 4
  %v5999 = vsel %vm5594, %v5998, %v5997
  %v6000 = vrot.slane %v5471, 3
  %v6001 = vrot.slane %v5472, 2
  %v6002 = vsel %vm5576, %v6001, %v6000
  %v6003 = vrot.slane %v5473, 1
  %v6004 = vsel %vm5579, %v6003, %v6002
  %v6005 = vsel %vm5582, %v5474, %v6004
  %v6006 = vrot.slane %v5475, 7
  %v6007 = vsel %vm5585, %v6006, %v6005
  %v6008 = vrot.slane %v5476, 6
  %v6009 = vsel %vm5588, %v6008, %v6007
  %v6010 = vrot.slane %v5477, 5
  %v6011 = vsel %vm5591, %v6010, %v6009
  %v6012 = vrot.slane %v5478, 4
  %v6013 = vsel %vm5594, %v6012, %v6011
  %v6014 = vrot.slane %v5479, 3
  %v6015 = vrot.slane %v5480, 2
  %v6016 = vsel %vm5576, %v6015, %v6014
  %v6017 = vrot.slane %v5481, 1
  %v6018 = vsel %vm5579, %v6017, %v6016
  %v6019 = vsel %vm5582, %v5482, %v6018
  %v6020 = vrot.slane %v5483, 7
  %v6021 = vsel %vm5585, %v6020, %v6019
  %v6022 = vrot.slane %v5484, 6
  %v6023 = vsel %vm5588, %v6022, %v6021
  %v6024 = vrot.slane %v5485, 5
  %v6025 = vsel %vm5591, %v6024, %v6023
  %v6026 = vrot.slane %v5486, 4
  %v6027 = vsel %vm5594, %v6026, %v6025
  %v6028 = vrot.slane %v5487, 3
  %v6029 = vrot.slane %v5488, 2
  %v6030 = vsel %vm5576, %v6029, %v6028
  %v6031 = vrot.slane %v5489, 1
  %v6032 = vsel %vm5579, %v6031, %v6030
  %v6033 = vsel %vm5582, %v5490, %v6032
  %v6034 = vrot.slane %v5491, 7
  %v6035 = vsel %vm5585, %v6034, %v6033
  %v6036 = vrot.slane %v5492, 6
  %v6037 = vsel %vm5588, %v6036, %v6035
  %v6038 = vrot.slane %v5493, 5
  %v6039 = vsel %vm5591, %v6038, %v6037
  %v6040 = vrot.slane %v5494, 4
  %v6041 = vsel %vm5594, %v6040, %v6039
  %v6042 = vrot.slane %v5495, 3
  %v6043 = vrot.slane %v5496, 2
  %v6044 = vsel %vm5576, %v6043, %v6042
  %v6045 = vrot.slane %v5497, 1
  %v6046 = vsel %vm5579, %v6045, %v6044
  %v6047 = vsel %vm5582, %v5498, %v6046
  %v6048 = vrot.slane %v5499, 7
  %v6049 = vsel %vm5585, %v6048, %v6047
  %v6050 = vrot.slane %v5500, 6
  %v6051 = vsel %vm5588, %v6050, %v6049
  %v6052 = vrot.slane %v5501, 5
  %v6053 = vsel %vm5591, %v6052, %v6051
  %v6054 = vrot.slane %v5502, 4
  %v6055 = vsel %vm5594, %v6054, %v6053
  %v6056 = vrot.slane %v5503, 3
  %v6057 = vrot.slane %v5504, 2
  %v6058 = vsel %vm5576, %v6057, %v6056
  %v6059 = vrot.slane %v5505, 1
  %v6060 = vsel %vm5579, %v6059, %v6058
  %v6061 = vsel %vm5582, %v5506, %v6060
  %v6062 = vrot.slane %v5507, 7
  %v6063 = vsel %vm5585, %v6062, %v6061
  %v6064 = vrot.slane %v5508, 6
  %v6065 = vsel %vm5588, %v6064, %v6063
  %v6066 = vrot.slane %v5509, 5
  %v6067 = vsel %vm5591, %v6066, %v6065
  %v6068 = vrot.slane %v5510, 4
  %v6069 = vsel %vm5594, %v6068, %v6067
  %6070 = vrot.lane.b32.xlu0 %v5971, 64
  %v6071 = vpop.permute.xlu0 %6070
  %6072 = vrot.lane.b32.xlu0 %v5985, 64
  %v6073 = vpop.permute.xlu0 %6072
  %6074 = vrot.lane.b32.xlu0 %v5999, 64
  %v6075 = vpop.permute.xlu0 %6074
  %6076 = vrot.lane.b32.xlu0 %v6013, 64
  %v6077 = vpop.permute.xlu0 %6076
  %6078 = vrot.lane.b32.xlu0 %v6027, 64
  %v6079 = vpop.permute.xlu0 %6078
  %6080 = vrot.lane.b32.xlu0 %v6041, 64
  %v6081 = vpop.permute.xlu0 %6080
  %6082 = vrot.lane.b32.xlu0 %v6055, 64
  %v6083 = vpop.permute.xlu0 %6082
  %6084 = vrot.lane.b32.xlu0 %v6069, 64
  %v6085 = vpop.permute.xlu0 %6084
  %v6094 = vsel %vm2019, %v5595, %v5815
  %v6095 = vsel %vm2019, %v5609, %v5817
  %v6096 = vsel %vm2019, %v5623, %v5819
  %v6097 = vsel %vm2019, %v5637, %v5821
  %v6098 = vsel %vm2019, %v5651, %v5823
  %v6099 = vsel %vm2019, %v5665, %v5825
  %v6100 = vsel %vm2019, %v5679, %v5827
  %v6101 = vsel %vm2019, %v5693, %v5829
  %v6102 = vsel %vm2019, %v5851, %v6071
  %v6103 = vsel %vm2019, %v5865, %v6073
  %v6104 = vsel %vm2019, %v5879, %v6075
  %v6105 = vsel %vm2019, %v5893, %v6077
  %v6106 = vsel %vm2019, %v5907, %v6079
  %v6107 = vsel %vm2019, %v5921, %v6081
  %v6108 = vsel %vm2019, %v5935, %v6083
  %v6109 = vsel %vm2019, %v5949, %v6085
  %6110 = vst [vmem:[%s5] sm:$0xff] %v6094
  %6111 = vst [vmem:[%s5 + $0x8] sm:$0xff] %v6102
  %6112 = vst [vmem:[%s5 + $0x10] sm:$0xff] %v6095
  %6113 = vst [vmem:[%s5 + $0x18] sm:$0xff] %v6103
  %6114 = vst [vmem:[%s5 + $0x20] sm:$0xff] %v6096
  %6115 = vst [vmem:[%s5 + $0x28] sm:$0xff] %v6104
  %6116 = vst [vmem:[%s5 + $0x30] sm:$0xff] %v6097
  %6117 = vst [vmem:[%s5 + $0x38] sm:$0xff] %v6105
  %6118 = vst [vmem:[%s5 + $0x40] sm:$0xff] %v6098
  %6119 = vst [vmem:[%s5 + $0x48] sm:$0xff] %v6106
  %6120 = vst [vmem:[%s5 + $0x50] sm:$0xff] %v6099
  %6121 = vst [vmem:[%s5 + $0x58] sm:$0xff] %v6107
  %6122 = vst [vmem:[%s5 + $0x60] sm:$0xff] %v6100
  %6123 = vst [vmem:[%s5 + $0x68] sm:$0xff] %v6108
  %6124 = vst [vmem:[%s5 + $0x70] sm:$0xff] %v6101
  %6125 = vst [vmem:[%s5 + $0x78] sm:$0xff] %v6109
  // Predicated region
  $region22: #{simple_model_convolutional.1} parent=0 // pred_check
    _
  $region23: #{simple_model_convolutional.1} parent=0 // pred_check_branch
    %6127 = sbr.rel (0) target = $region25
  $region24: #{simple_model_convolutional.1} parent=0 // pred_region
    _
  $region25: #{simple_model_convolutional.1} parent=0 // pred_fallthru
    _
  // Predicated region
  $region26: #{simple_model_convolutional.1} parent=0 // pred_check
    _
  $region27: #{simple_model_convolutional.1} parent=0 // pred_check_branch
    %6129 = sbr.rel (0) target = $region29
  $region28: #{simple_model_convolutional.1} parent=0 // pred_region
    _
  $region29: #{simple_model_convolutional.1} parent=0 // pred_fallthru
    _

</llo_original>
